<compile_context>
chip_gen: v7x
topology: tpu7x:2x2x1
jax: 0.10.0
libtpu: 0.0.40
codegen_flags: <defaults>
</compile_context>

<pallas_src>
import functools

import jax
import jax.numpy as jnp
from jax.experimental import pallas as pl
from jax.experimental.pallas import tpu as pltpu


_BN_EPS = 1e-5                      # nn.BatchNorm1d default
_HIDDEN = (256, 528, 528, 256, 64)  # fc1..fc5 output widths


def _round_up(n, m):
    return ((n + m - 1) // m) * m


# ---------------------------------------------------------------------------
# Fused Pallas kernel: 5 x (Linear+BN+SiLU) + final Linear, all in VMEM.
# ---------------------------------------------------------------------------
def _fused_mlp_kernel(x_ref,
                      w1_ref, w2_ref, w3_ref, w4_ref, w5_ref, w6_ref,
                      b1_ref, b2_ref, b3_ref, b4_ref, b5_ref, b6_ref,
                      o_ref):
    h = x_ref[...]  # (tile_b, 128) bf16
    hidden = ((w1_ref, b1_ref), (w2_ref, b2_ref), (w3_ref, b3_ref),
              (w4_ref, b4_ref), (w5_ref, b5_ref))
    for w_ref, b_ref in hidden:
        # Linear with BN already folded into w/b; f32 accumulation on the MXU.
        y = jnp.dot(h, w_ref[...], preferred_element_type=jnp.float32)
        y = y + b_ref[...]
        # SiLU in f32 (EUP); Dropout(eval) == identity.
        y = y * jax.nn.sigmoid(y)
        h = y.astype(jnp.bfloat16)
    # Final Linear (fc6), no activation.
    o_ref[...] = (
        jnp.dot(h, w6_ref[...], preferred_element_type=jnp.float32)
        + b6_ref[...]
    )


# ---------------------------------------------------------------------------
# Parameter construction (deterministic, synthetic) with BN folding + padding.
# ---------------------------------------------------------------------------
def init_params(key, input_size, output_size):
    """Returns (weights, biases): padded bf16 weights (in_pad, out_pad) and
    padded f32 biases (1, out_pad) with eval-mode BatchNorm folded in."""
    dims = [input_size, *_HIDDEN, output_size]
    padded = [_round_up(d, 128) for d in dims]
    weights, biases = [], []
    for li in range(6):
        d_in, d_out = dims[li], dims[li + 1]
        p_in, p_out = padded[li], padded[li + 1]
        key, kw, kb, kg, kbe, km, kv = jax.random.split(key, 7)
        w = jax.random.normal(kw, (d_in, d_out), jnp.float32) * 0.1
        b = jax.random.normal(kb, (d_out,), jnp.float32) * 0.1
        if li < 5:  # fc1..fc5 have BatchNorm1d (eval mode, running stats)
            gamma = 1.0 + 0.1 * jax.random.normal(kg, (d_out,), jnp.float32)
            beta = 0.1 * jax.random.normal(kbe, (d_out,), jnp.float32)
            running_mean = 0.1 * jax.random.normal(km, (d_out,), jnp.float32)
            running_var = jnp.abs(
                1.0 + 0.1 * jax.random.normal(kv, (d_out,), jnp.float32))
            scale = gamma / jnp.sqrt(running_var + _BN_EPS)
            shift = beta - running_mean * scale
            # Fold BN into the linear layer: y*scale + shift == x@(W*scale) + (b*scale + shift)
            w = w * scale[None, :]
            b = b * scale + shift
        # Zero-pad to lane multiples of 128. Zero rows/cols keep padded
        # activation lanes exactly zero through every layer (SiLU(0) == 0).
        w_p = jnp.zeros((p_in, p_out), jnp.float32).at[:d_in, :d_out].set(w)
        b_p = jnp.zeros((1, p_out), jnp.float32).at[0, :d_out].set(b)
        weights.append(w_p.astype(jnp.bfloat16))
        biases.append(b_p)
    return tuple(weights), tuple(biases)


# ---------------------------------------------------------------------------
# Forward pass (single fused pallas_call, batch grid).
# ---------------------------------------------------------------------------
@functools.partial(jax.jit, static_argnames=("output_size",))
def multiclass_dnn_forward(x, weights, biases, output_size):
    batch, in_dim = x.shape
    p_in = weights[0].shape[0]
    p_out = weights[-1].shape[1]

    # Batch tile: single tile at small batch, 256-row tiles at serving batch.
    tile_b = min(256, _round_up(batch, 8))
    pb = _round_up(batch, tile_b)

    # Lane-pad the input (zeros in the padded feature lanes / batch rows).
    x_p = (jnp.zeros((pb, p_in), jnp.bfloat16)
           .at[:batch, :in_dim].set(x.astype(jnp.bfloat16)))

    grid = (pb // tile_b,)
    in_specs = [pl.BlockSpec((tile_b, p_in), lambda i: (i, 0))]
    # Weights / biases: full-array blocks at a constant block index -> stay
    # resident in VMEM across all batch tiles (~1.6 MiB bf16 total).
    in_specs += [pl.BlockSpec(w.shape, lambda i: (0, 0)) for w in weights]
    in_specs += [pl.BlockSpec(b.shape, lambda i: (0, 0)) for b in biases]
    out_specs = pl.BlockSpec((tile_b, p_out), lambda i: (i, 0))

    out = pl.pallas_call(
        _fused_mlp_kernel,
        out_shape=jax.ShapeDtypeStruct((pb, p_out), jnp.float32),
        grid=grid,
        in_specs=in_specs,
        out_specs=out_specs,
        compiler_params=pltpu.CompilerParams(
            dimension_semantics=("parallel",)),
    )(x_p, *weights, *biases)

    return out[:batch, :output_size]


# Pure-JAX reference (same folded/padded bf16 params, f32 accumulation).
def _reference_forward(x, weights, biases, output_size):
    batch, in_dim = x.shape
    p_in = weights[0].shape[0]
    h = (jnp.zeros((batch, p_in), jnp.float32)
         .at[:, :in_dim].set(x).astype(jnp.bfloat16))
    for i in range(5):
        y = jnp.dot(h, weights[i], preferred_element_type=jnp.float32) + biases[i]
        y = y * jax.nn.sigmoid(y)
        h = y.astype(jnp.bfloat16)
    y = jnp.dot(h, weights[5], preferred_element_type=jnp.float32) + biases[5]
    return y[:, :output_size]


if __name__ == "__main__":
    INPUT_SIZE = 20   # input features for the flashgg multiclass DNN
    OUTPUT_SIZE = 4   # number of classes
    BATCH = 8

    key = jax.random.PRNGKey(0)
    key, kx = jax.random.split(key)
    x = jax.random.normal(kx, (BATCH, INPUT_SIZE), jnp.float32)

    weights, biases = init_params(key, INPUT_SIZE, OUTPUT_SIZE)

    out = multiclass_dnn_forward(x, weights, biases, OUTPUT_SIZE)
    out = jax.block_until_ready(out)

    ref = _reference_forward(x, weights, biases, OUTPUT_SIZE)
    assert out.shape == (BATCH, OUTPUT_SIZE)
    assert jnp.all(jnp.isfinite(out))
    assert jnp.allclose(out, ref, atol=5e-3, rtol=5e-3)

    print("KERNEL_OK")
</pallas_src>

<mosaic_0001>
module attributes {stable_mosaic.version = 11 : i64} {
  func.func @_fused_mlp_kernel(%arg0: i32, %arg1: memref<8x128xbf16, #tpu.memory_space<vmem>>, %arg2: memref<128x256xbf16, #tpu.memory_space<vmem>>, %arg3: memref<256x640xbf16, #tpu.memory_space<vmem>>, %arg4: memref<640x640xbf16, #tpu.memory_space<vmem>>, %arg5: memref<640x256xbf16, #tpu.memory_space<vmem>>, %arg6: memref<256x128xbf16, #tpu.memory_space<vmem>>, %arg7: memref<128x128xbf16, #tpu.memory_space<vmem>>, %arg8: memref<1x256xf32, #tpu.memory_space<vmem>>, %arg9: memref<1x640xf32, #tpu.memory_space<vmem>>, %arg10: memref<1x640xf32, #tpu.memory_space<vmem>>, %arg11: memref<1x256xf32, #tpu.memory_space<vmem>>, %arg12: memref<1x128xf32, #tpu.memory_space<vmem>>, %arg13: memref<1x128xf32, #tpu.memory_space<vmem>>, %arg14: memref<8x128xf32, #tpu.memory_space<vmem>>) attributes {dimension_semantics = [#tpu.dimension_semantics<parallel>], iteration_bounds = array<i64: 1>, scalar_prefetch = 0 : i64, scratch_operands = 0 : i64, tpu.core_type = #tpu.core_type<tc>, window_params = [{transform_indices = @transform_0, window_bounds = array<i64: 8, 128>}, {pipeline_mode = #tpu.pipeline_mode<synchronous>, transform_indices = @transform_1, window_bounds = array<i64: 128, 256>}, {pipeline_mode = #tpu.pipeline_mode<synchronous>, transform_indices = @transform_2, window_bounds = array<i64: 256, 640>}, {pipeline_mode = #tpu.pipeline_mode<synchronous>, transform_indices = @transform_3, window_bounds = array<i64: 640, 640>}, {pipeline_mode = #tpu.pipeline_mode<synchronous>, transform_indices = @transform_4, window_bounds = array<i64: 640, 256>}, {pipeline_mode = #tpu.pipeline_mode<synchronous>, transform_indices = @transform_5, window_bounds = array<i64: 256, 128>}, {pipeline_mode = #tpu.pipeline_mode<synchronous>, transform_indices = @transform_6, window_bounds = array<i64: 128, 128>}, {pipeline_mode = #tpu.pipeline_mode<synchronous>, transform_indices = @transform_7, window_bounds = array<i64: 1, 256>}, {pipeline_mode = #tpu.pipeline_mode<synchronous>, transform_indices = @transform_8, window_bounds = array<i64: 1, 640>}, {pipeline_mode = #tpu.pipeline_mode<synchronous>, transform_indices = @transform_9, window_bounds = array<i64: 1, 640>}, {pipeline_mode = #tpu.pipeline_mode<synchronous>, transform_indices = @transform_10, window_bounds = array<i64: 1, 256>}, {pipeline_mode = #tpu.pipeline_mode<synchronous>, transform_indices = @transform_11, window_bounds = array<i64: 1, 128>}, {pipeline_mode = #tpu.pipeline_mode<synchronous>, transform_indices = @transform_12, window_bounds = array<i64: 1, 128>}, {transform_indices = @transform_13, window_bounds = array<i64: 8, 128>}]} {
    %c0 = arith.constant 0 : index
    %c0_0 = arith.constant 0 : index
    %0 = vector.load %arg1[%c0, %c0_0] : memref<8x128xbf16, #tpu.memory_space<vmem>>, vector<8x128xbf16>
    %c0_1 = arith.constant 0 : index
    %c0_2 = arith.constant 0 : index
    %1 = vector.load %arg2[%c0_1, %c0_2] : memref<128x256xbf16, #tpu.memory_space<vmem>>, vector<128x256xbf16>
    %cst = arith.constant dense<0.000000e+00> : vector<8x256xf32>
    %2 = tpu.matmul %0, %1, %cst {dimension_numbers = #tpu.dot_dimension_numbers<[1], [0], [0], [1], [0, 0, 1, 1], [], []>} : vector<8x128xbf16>, vector<128x256xbf16>, vector<8x256xf32> -> vector<8x256xf32>
    %c0_3 = arith.constant 0 : index
    %c0_4 = arith.constant 0 : index
    %3 = vector.load %arg8[%c0_3, %c0_4] : memref<1x256xf32, #tpu.memory_space<vmem>>, vector<1x256xf32>
    %4 = vector.broadcast %3 : vector<1x256xf32> to vector<8x256xf32>
    %5 = arith.addf %2, %4 : vector<8x256xf32>
    %6 = arith.negf %5 : vector<8x256xf32>
    %7 = math.exp %6 : vector<8x256xf32>
    %cst_5 = arith.constant 1.000000e+00 : f32
    %8 = vector.broadcast %cst_5 : f32 to vector<8x256xf32>
    %9 = arith.addf %8, %7 : vector<8x256xf32>
    %10 = arith.divf %8, %9 : vector<8x256xf32>
    %11 = arith.mulf %5, %10 : vector<8x256xf32>
    %12 = arith.truncf %11 : vector<8x256xf32> to vector<8x256xbf16>
    %c0_6 = arith.constant 0 : index
    %c0_7 = arith.constant 0 : index
    %13 = vector.load %arg3[%c0_6, %c0_7] : memref<256x640xbf16, #tpu.memory_space<vmem>>, vector<256x640xbf16>
    %cst_8 = arith.constant dense<0.000000e+00> : vector<8x640xf32>
    %14 = tpu.matmul %12, %13, %cst_8 {dimension_numbers = #tpu.dot_dimension_numbers<[1], [0], [0], [1], [0, 0, 1, 1], [], []>} : vector<8x256xbf16>, vector<256x640xbf16>, vector<8x640xf32> -> vector<8x640xf32>
    %c0_9 = arith.constant 0 : index
    %c0_10 = arith.constant 0 : index
    %15 = vector.load %arg9[%c0_9, %c0_10] : memref<1x640xf32, #tpu.memory_space<vmem>>, vector<1x640xf32>
    %16 = vector.broadcast %15 : vector<1x640xf32> to vector<8x640xf32>
    %17 = arith.addf %14, %16 : vector<8x640xf32>
    %18 = arith.negf %17 : vector<8x640xf32>
    %19 = math.exp %18 : vector<8x640xf32>
    %cst_11 = arith.constant 1.000000e+00 : f32
    %20 = vector.broadcast %cst_11 : f32 to vector<8x640xf32>
    %21 = arith.addf %20, %19 : vector<8x640xf32>
    %22 = arith.divf %20, %21 : vector<8x640xf32>
    %23 = arith.mulf %17, %22 : vector<8x640xf32>
    %24 = arith.truncf %23 : vector<8x640xf32> to vector<8x640xbf16>
    %c0_12 = arith.constant 0 : index
    %c0_13 = arith.constant 0 : index
    %25 = vector.load %arg4[%c0_12, %c0_13] : memref<640x640xbf16, #tpu.memory_space<vmem>>, vector<640x640xbf16>
    %cst_14 = arith.constant dense<0.000000e+00> : vector<8x640xf32>
    %26 = tpu.matmul %24, %25, %cst_14 {dimension_numbers = #tpu.dot_dimension_numbers<[1], [0], [0], [1], [0, 0, 1, 1], [], []>} : vector<8x640xbf16>, vector<640x640xbf16>, vector<8x640xf32> -> vector<8x640xf32>
    %c0_15 = arith.constant 0 : index
    %c0_16 = arith.constant 0 : index
    %27 = vector.load %arg10[%c0_15, %c0_16] : memref<1x640xf32, #tpu.memory_space<vmem>>, vector<1x640xf32>
    %28 = vector.broadcast %27 : vector<1x640xf32> to vector<8x640xf32>
    %29 = arith.addf %26, %28 : vector<8x640xf32>
    %30 = arith.negf %29 : vector<8x640xf32>
    %31 = math.exp %30 : vector<8x640xf32>
    %cst_17 = arith.constant 1.000000e+00 : f32
    %32 = vector.broadcast %cst_17 : f32 to vector<8x640xf32>
    %33 = arith.addf %32, %31 : vector<8x640xf32>
    %34 = arith.divf %32, %33 : vector<8x640xf32>
    %35 = arith.mulf %29, %34 : vector<8x640xf32>
    %36 = arith.truncf %35 : vector<8x640xf32> to vector<8x640xbf16>
    %c0_18 = arith.constant 0 : index
    %c0_19 = arith.constant 0 : index
    %37 = vector.load %arg5[%c0_18, %c0_19] : memref<640x256xbf16, #tpu.memory_space<vmem>>, vector<640x256xbf16>
    %cst_20 = arith.constant dense<0.000000e+00> : vector<8x256xf32>
    %38 = tpu.matmul %36, %37, %cst_20 {dimension_numbers = #tpu.dot_dimension_numbers<[1], [0], [0], [1], [0, 0, 1, 1], [], []>} : vector<8x640xbf16>, vector<640x256xbf16>, vector<8x256xf32> -> vector<8x256xf32>
    %c0_21 = arith.constant 0 : index
    %c0_22 = arith.constant 0 : index
    %39 = vector.load %arg11[%c0_21, %c0_22] : memref<1x256xf32, #tpu.memory_space<vmem>>, vector<1x256xf32>
    %40 = vector.broadcast %39 : vector<1x256xf32> to vector<8x256xf32>
    %41 = arith.addf %38, %40 : vector<8x256xf32>
    %42 = arith.negf %41 : vector<8x256xf32>
    %43 = math.exp %42 : vector<8x256xf32>
    %cst_23 = arith.constant 1.000000e+00 : f32
    %44 = vector.broadcast %cst_23 : f32 to vector<8x256xf32>
    %45 = arith.addf %44, %43 : vector<8x256xf32>
    %46 = arith.divf %44, %45 : vector<8x256xf32>
    %47 = arith.mulf %41, %46 : vector<8x256xf32>
    %48 = arith.truncf %47 : vector<8x256xf32> to vector<8x256xbf16>
    %c0_24 = arith.constant 0 : index
    %c0_25 = arith.constant 0 : index
    %49 = vector.load %arg6[%c0_24, %c0_25] : memref<256x128xbf16, #tpu.memory_space<vmem>>, vector<256x128xbf16>
    %cst_26 = arith.constant dense<0.000000e+00> : vector<8x128xf32>
    %50 = tpu.matmul %48, %49, %cst_26 {dimension_numbers = #tpu.dot_dimension_numbers<[1], [0], [0], [1], [0, 0, 1, 1], [], []>} : vector<8x256xbf16>, vector<256x128xbf16>, vector<8x128xf32> -> vector<8x128xf32>
    %c0_27 = arith.constant 0 : index
    %c0_28 = arith.constant 0 : index
    %51 = vector.load %arg12[%c0_27, %c0_28] : memref<1x128xf32, #tpu.memory_space<vmem>>, vector<1x128xf32>
    %52 = vector.broadcast %51 : vector<1x128xf32> to vector<8x128xf32>
    %53 = arith.addf %50, %52 : vector<8x128xf32>
    %54 = arith.negf %53 : vector<8x128xf32>
    %55 = math.exp %54 : vector<8x128xf32>
    %cst_29 = arith.constant 1.000000e+00 : f32
    %56 = vector.broadcast %cst_29 : f32 to vector<8x128xf32>
    %57 = arith.addf %56, %55 : vector<8x128xf32>
    %58 = arith.divf %56, %57 : vector<8x128xf32>
    %59 = arith.mulf %53, %58 : vector<8x128xf32>
    %60 = arith.truncf %59 : vector<8x128xf32> to vector<8x128xbf16>
    %c0_30 = arith.constant 0 : index
    %c0_31 = arith.constant 0 : index
    %61 = vector.load %arg7[%c0_30, %c0_31] : memref<128x128xbf16, #tpu.memory_space<vmem>>, vector<128x128xbf16>
    %cst_32 = arith.constant dense<0.000000e+00> : vector<8x128xf32>
    %62 = tpu.matmul %60, %61, %cst_32 {dimension_numbers = #tpu.dot_dimension_numbers<[1], [0], [0], [1], [0, 0, 1, 1], [], []>} : vector<8x128xbf16>, vector<128x128xbf16>, vector<8x128xf32> -> vector<8x128xf32>
    %c0_33 = arith.constant 0 : index
    %c0_34 = arith.constant 0 : index
    %63 = vector.load %arg13[%c0_33, %c0_34] : memref<1x128xf32, #tpu.memory_space<vmem>>, vector<1x128xf32>
    %64 = vector.broadcast %63 : vector<1x128xf32> to vector<8x128xf32>
    %65 = arith.addf %62, %64 : vector<8x128xf32>
    %c0_35 = arith.constant 0 : index
    %c0_36 = arith.constant 0 : index
    %66 = vector.load %arg14[%c0_35, %c0_36] : memref<8x128xf32, #tpu.memory_space<vmem>>, vector<8x128xf32>
    tpu.vector_store %arg14[%c0_35, %c0_36], %65 {strides = array<i32>} : memref<8x128xf32, #tpu.memory_space<vmem>>, vector<8x128xf32>,
    return
  }
  func.func @transform_0(%arg0: i32) -> (i32, i32) {
    %c0_i32 = arith.constant 0 : i32
    %c0_i32_0 = arith.constant 0 : i32
    return %arg0, %c0_i32 : i32, i32
  }
  func.func @transform_1(%arg0: i32) -> (i32, i32) {
    %c0_i32 = arith.constant 0 : i32
    %c0_i32_0 = arith.constant 0 : i32
    %c0_i32_1 = arith.constant 0 : i32
    return %c0_i32, %c0_i32_0 : i32, i32
  }
  func.func @transform_2(%arg0: i32) -> (i32, i32) {
    %c0_i32 = arith.constant 0 : i32
    %c0_i32_0 = arith.constant 0 : i32
    %c0_i32_1 = arith.constant 0 : i32
    return %c0_i32, %c0_i32_0 : i32, i32
  }
  func.func @transform_3(%arg0: i32) -> (i32, i32) {
    %c0_i32 = arith.constant 0 : i32
    %c0_i32_0 = arith.constant 0 : i32
    %c0_i32_1 = arith.constant 0 : i32
    return %c0_i32, %c0_i32_0 : i32, i32
  }
  func.func @transform_4(%arg0: i32) -> (i32, i32) {
    %c0_i32 = arith.constant 0 : i32
    %c0_i32_0 = arith.constant 0 : i32
    %c0_i32_1 = arith.constant 0 : i32
    return %c0_i32, %c0_i32_0 : i32, i32
  }
  func.func @transform_5(%arg0: i32) -> (i32, i32) {
    %c0_i32 = arith.constant 0 : i32
    %c0_i32_0 = arith.constant 0 : i32
    %c0_i32_1 = arith.constant 0 : i32
    return %c0_i32, %c0_i32_0 : i32, i32
  }
  func.func @transform_6(%arg0: i32) -> (i32, i32) {
    %c0_i32 = arith.constant 0 : i32
    %c0_i32_0 = arith.constant 0 : i32
    %c0_i32_1 = arith.constant 0 : i32
    return %c0_i32, %c0_i32_0 : i32, i32
  }
  func.func @transform_7(%arg0: i32) -> (i32, i32) {
    %c0_i32 = arith.constant 0 : i32
    %c0_i32_0 = arith.constant 0 : i32
    %c0_i32_1 = arith.constant 0 : i32
    return %c0_i32, %c0_i32_0 : i32, i32
  }
  func.func @transform_8(%arg0: i32) -> (i32, i32) {
    %c0_i32 = arith.constant 0 : i32
    %c0_i32_0 = arith.constant 0 : i32
    %c0_i32_1 = arith.constant 0 : i32
    return %c0_i32, %c0_i32_0 : i32, i32
  }
  func.func @transform_9(%arg0: i32) -> (i32, i32) {
    %c0_i32 = arith.constant 0 : i32
    %c0_i32_0 = arith.constant 0 : i32
    %c0_i32_1 = arith.constant 0 : i32
    return %c0_i32, %c0_i32_0 : i32, i32
  }
  func.func @transform_10(%arg0: i32) -> (i32, i32) {
    %c0_i32 = arith.constant 0 : i32
    %c0_i32_0 = arith.constant 0 : i32
    %c0_i32_1 = arith.constant 0 : i32
    return %c0_i32, %c0_i32_0 : i32, i32
  }
  func.func @transform_11(%arg0: i32) -> (i32, i32) {
    %c0_i32 = arith.constant 0 : i32
    %c0_i32_0 = arith.constant 0 : i32
    %c0_i32_1 = arith.constant 0 : i32
    return %c0_i32, %c0_i32_0 : i32, i32
  }
  func.func @transform_12(%arg0: i32) -> (i32, i32) {
    %c0_i32 = arith.constant 0 : i32
    %c0_i32_0 = arith.constant 0 : i32
    %c0_i32_1 = arith.constant 0 : i32
    return %c0_i32, %c0_i32_0 : i32, i32
  }
  func.func @transform_13(%arg0: i32) -> (i32, i32) {
    %c0_i32 = arith.constant 0 : i32
    %c0_i32_0 = arith.constant 0 : i32
    return %arg0, %c0_i32 : i32, i32
  }
}

</mosaic_0001>

<llo_original>
// kernel: multiclass_dnn_forward.1
$region0: #{multiclass_dnn_forward.1}
  #allocation0 [shape = 'u32[]', space=smem, size = 0x4, offset = 0x4, fixed_abs, tag = 'smem constant byte address 0x4 - core index']
  #allocation1 [shape = 'u32[144,128]{1,0:T(1,128)}', space=vmem, size = 0x12000, scoped, tag = 'internal scratch']
  %s0 = inlined_call_operand.vmem [shape: bf16[8,128], index: 0, kind: input, shape index: {}]
  %s1 = inlined_call_operand.hbm [shape: bf16[128,256], index: 1, kind: input, shape index: {}]
  %s2 = inlined_call_operand.hbm [shape: bf16[256,640], index: 2, kind: input, shape index: {}]
  %s3 = inlined_call_operand.hbm [shape: bf16[640,640], index: 3, kind: input, shape index: {}]
  %s4 = inlined_call_operand.hbm [shape: bf16[640,256], index: 4, kind: input, shape index: {}]
  %s5 = inlined_call_operand.hbm [shape: bf16[256,128], index: 5, kind: input, shape index: {}]
  %s6 = inlined_call_operand.hbm [shape: bf16[128,128], index: 6, kind: input, shape index: {}]
  %s7 = inlined_call_operand.vmem [shape: f32[1,256], index: 7, kind: input, shape index: {}]
  %s8 = inlined_call_operand.vmem [shape: f32[1,640], index: 8, kind: input, shape index: {}]
  %s9 = inlined_call_operand.vmem [shape: f32[1,640], index: 9, kind: input, shape index: {}]
  %s10 = inlined_call_operand.vmem [shape: f32[1,256], index: 10, kind: input, shape index: {}]
  %s11 = inlined_call_operand.vmem [shape: f32[1,128], index: 11, kind: input, shape index: {}]
  %s12 = inlined_call_operand.vmem [shape: f32[1,128], index: 12, kind: input, shape index: {}]
  %s13 = inlined_call_operand.vmem [shape: f32[8,128], index: 13, kind: output, shape index: {}]
  %s14 = sld [smem:[#allocation0]]
  $region86: #{multiclass_dnn_forward.1} parent=0
    _
  %s16 = ssub.s32 1, %s14
  %s17 = scalar_select 0, %s16, %s14
  $region1: #{multiclass_dnn_forward.1} parent=0
    #allocation2 [shape = 'u8[65536]{0}', space=vmem, size = 0x10000, scoped, tag = 'input window, operand 1, single buffered']
    #allocation3 [shape = 's32[1]{0}', space=sflag, size = 0x4, scoped, tag = 'scoped memory for multiclass_dnn_forward.1']
    #allocation4 [shape = 'u8[327680]{0}', space=vmem, size = 0x50000, scoped, tag = 'input window, operand 2, single buffered']
    #allocation5 [shape = 's32[1]{0}', space=sflag, size = 0x4, scoped, tag = 'scoped memory for multiclass_dnn_forward.1']
    #allocation6 [shape = 'u8[819200]{0}', space=vmem, size = 0xc8000, scoped, tag = 'input window, operand 3, single buffered']
    #allocation7 [shape = 'u8[327680]{0}', space=vmem, size = 0x50000, scoped, tag = 'input window, operand 4, single buffered']
    #allocation8 [shape = 's32[1]{0}', space=sflag, size = 0x4, scoped, tag = 'scoped memory for multiclass_dnn_forward.1']
    #allocation9 [shape = 'u8[65536]{0}', space=vmem, size = 0x10000, scoped, tag = 'input window, operand 5, single buffered']
    #allocation10 [shape = 'u8[32768]{0}', space=vmem, size = 0x8000, scoped, tag = 'input window, operand 6, single buffered']
    #allocation11 [shape = 's32[1]{0}', space=sflag, size = 0x4, scoped, tag = 'scoped memory for multiclass_dnn_forward.1']
    %18 = vsyncpa [#allocation3], 0
    %19 = vsyncpa [#allocation5], 0
    %20 = vsyncpa [#allocation8], 0
    %21 = vsyncpa [#allocation11], 0
    // Predicated region
    $region2: #{multiclass_dnn_forward.1} parent=1 // pred_check
      _
    $region3: #{multiclass_dnn_forward.1} parent=1 // pred_check_branch
      %23 = sbr.rel (0) target = $region5
    $region4: #{multiclass_dnn_forward.1} parent=1 // pred_region
      _
    $region5: #{multiclass_dnn_forward.1} parent=1 // pred_fallthru
      _
    // Predicated region
    $region6: #{multiclass_dnn_forward.1} parent=1 // pred_check
      _
    $region7: #{multiclass_dnn_forward.1} parent=1 // pred_check_branch
      %25 = sbr.rel (0) target = $region9
    $region8: #{multiclass_dnn_forward.1} parent=1 // pred_region
      %s27 = ssub.s32 2048, 2048
      %28 = vsyncadd [#allocation3], %s27
      %s29 = sshll.u32 [#allocation2], 4
      %s30 = int_to_ptr.vmem [resolvable:$true] %s29
      %35 = dma.hbm_to_vmem [thread:$0]  %s1, 2048, %s30, [#allocation3], 128, 128, 8
    $region9: #{multiclass_dnn_forward.1} parent=1 // pred_fallthru
      _
    // Predicated region
    $region10: #{multiclass_dnn_forward.1} parent=1 // pred_check
      _
    $region11: #{multiclass_dnn_forward.1} parent=1 // pred_check_branch
      %37 = sbr.rel (0) target = $region13
    $region12: #{multiclass_dnn_forward.1} parent=1 // pred_region
      %s39 = ssub.s32 10240, 10240
      %40 = vsyncadd [#allocation5], %s39
      %s41 = sshll.u32 [#allocation4], 4
      %s42 = int_to_ptr.vmem [resolvable:$true] %s41
      %47 = dma.hbm_to_vmem [thread:$0]  %s2, 10240, %s42, [#allocation5], 320, 320, 20
    $region13: #{multiclass_dnn_forward.1} parent=1 // pred_fallthru
      _
    // Predicated region
    $region14: #{multiclass_dnn_forward.1} parent=1 // pred_check
      _
    $region15: #{multiclass_dnn_forward.1} parent=1 // pred_check_branch
      %49 = sbr.rel (0) target = $region17
    $region16: #{multiclass_dnn_forward.1} parent=1 // pred_region
      %s51 = ssub.s32 25600, 25600
      %52 = vsyncadd [#allocation5], %s51
      %s53 = sshll.u32 [#allocation6], 4
      %s54 = int_to_ptr.vmem [resolvable:$true] %s53
      %59 = dma.hbm_to_vmem [thread:$0]  %s3, 25600, %s54, [#allocation5], 320, 320, 20
    $region17: #{multiclass_dnn_forward.1} parent=1 // pred_fallthru
      _
    // Predicated region
    $region18: #{multiclass_dnn_forward.1} parent=1 // pred_check
      _
    $region19: #{multiclass_dnn_forward.1} parent=1 // pred_check_branch
      %61 = sbr.rel (0) target = $region21
    $region20: #{multiclass_dnn_forward.1} parent=1 // pred_region
      %s63 = ssub.s32 10240, 10240
      %64 = vsyncadd [#allocation8], %s63
      %s65 = sshll.u32 [#allocation7], 4
      %s66 = int_to_ptr.vmem [resolvable:$true] %s65
      %71 = dma.hbm_to_vmem [thread:$0]  %s4, 10240, %s66, [#allocation8], 128, 128, 8
    $region21: #{multiclass_dnn_forward.1} parent=1 // pred_fallthru
      _
    // Predicated region
    $region22: #{multiclass_dnn_forward.1} parent=1 // pred_check
      _
    $region23: #{multiclass_dnn_forward.1} parent=1 // pred_check_branch
      %73 = sbr.rel (0) target = $region25
    $region24: #{multiclass_dnn_forward.1} parent=1 // pred_region
      %s75 = ssub.s32 2048, 2048
      %76 = vsyncadd [#allocation8], %s75
      %s77 = sshll.u32 [#allocation9], 4
      %s78 = int_to_ptr.vmem [resolvable:$true] %s77
      %83 = dma.hbm_to_vmem [thread:$0]  %s5, 2048, %s78, [#allocation8], 64, 64, 4
    $region25: #{multiclass_dnn_forward.1} parent=1 // pred_fallthru
      _
    // Predicated region
    $region26: #{multiclass_dnn_forward.1} parent=1 // pred_check
      _
    $region27: #{multiclass_dnn_forward.1} parent=1 // pred_check_branch
      %85 = sbr.rel (0) target = $region29
    $region28: #{multiclass_dnn_forward.1} parent=1 // pred_region
      %s87 = ssub.s32 1024, 1024
      %88 = vsyncadd [#allocation11], %s87
      %s89 = sshll.u32 [#allocation10], 4
      %s90 = int_to_ptr.vmem [resolvable:$true] %s89
      %95 = dma.hbm_to_vmem [thread:$0]  %s6, 1024, %s90, [#allocation11], 64, 64, 4
    $region29: #{multiclass_dnn_forward.1} parent=1 // pred_fallthru
      _
    // Predicated region
    $region30: #{multiclass_dnn_forward.1} parent=1 // pred_check
      _
    $region31: #{multiclass_dnn_forward.1} parent=1 // pred_check_branch
      %97 = sbr.rel (0) target = $region33
    $region32: #{multiclass_dnn_forward.1} parent=1 // pred_region
      _
    $region33: #{multiclass_dnn_forward.1} parent=1 // pred_fallthru
      _
    // Predicated region
    $region34: #{multiclass_dnn_forward.1} parent=1 // pred_check
      _
    $region35: #{multiclass_dnn_forward.1} parent=1 // pred_check_branch
      %99 = sbr.rel (0) target = $region37
    $region36: #{multiclass_dnn_forward.1} parent=1 // pred_region
      _
    $region37: #{multiclass_dnn_forward.1} parent=1 // pred_fallthru
      _
    // Predicated region
    $region38: #{multiclass_dnn_forward.1} parent=1 // pred_check
      _
    $region39: #{multiclass_dnn_forward.1} parent=1 // pred_check_branch
      %101 = sbr.rel (0) target = $region41
    $region40: #{multiclass_dnn_forward.1} parent=1 // pred_region
      _
    $region41: #{multiclass_dnn_forward.1} parent=1 // pred_fallthru
      _
    // Predicated region
    $region42: #{multiclass_dnn_forward.1} parent=1 // pred_check
      _
    $region43: #{multiclass_dnn_forward.1} parent=1 // pred_check_branch
      %103 = sbr.rel (0) target = $region45
    $region44: #{multiclass_dnn_forward.1} parent=1 // pred_region
      _
    $region45: #{multiclass_dnn_forward.1} parent=1 // pred_fallthru
      _
    // Predicated region
    $region46: #{multiclass_dnn_forward.1} parent=1 // pred_check
      _
    $region47: #{multiclass_dnn_forward.1} parent=1 // pred_check_branch
      %105 = sbr.rel (0) target = $region49
    $region48: #{multiclass_dnn_forward.1} parent=1 // pred_region
      _
    $region49: #{multiclass_dnn_forward.1} parent=1 // pred_fallthru
      _
    // Predicated region
    $region50: #{multiclass_dnn_forward.1} parent=1 // pred_check
      _
    $region51: #{multiclass_dnn_forward.1} parent=1 // pred_check_branch
      %107 = sbr.rel (0) target = $region53
    $region52: #{multiclass_dnn_forward.1} parent=1 // pred_region
      _
    $region53: #{multiclass_dnn_forward.1} parent=1 // pred_fallthru
      _
    // Predicated region
    $region54: #{multiclass_dnn_forward.1} parent=1 // pred_check
      _
    $region55: #{multiclass_dnn_forward.1} parent=1 // pred_check_branch
      %109 = sbr.rel (0) target = $region57
    $region56: #{multiclass_dnn_forward.1} parent=1 // pred_region
      %110 = dma.done [#allocation3], 2048
    $region57: #{multiclass_dnn_forward.1} parent=1 // pred_fallthru
      _
    // Predicated region
    $region58: #{multiclass_dnn_forward.1} parent=1 // pred_check
      _
    $region59: #{multiclass_dnn_forward.1} parent=1 // pred_check_branch
      %112 = sbr.rel (0) target = $region61
    $region60: #{multiclass_dnn_forward.1} parent=1 // pred_region
      %113 = dma.done [#allocation5], 10240
    $region61: #{multiclass_dnn_forward.1} parent=1 // pred_fallthru
      _
    // Predicated region
    $region62: #{multiclass_dnn_forward.1} parent=1 // pred_check
      _
    $region63: #{multiclass_dnn_forward.1} parent=1 // pred_check_branch
      %115 = sbr.rel (0) target = $region65
    $region64: #{multiclass_dnn_forward.1} parent=1 // pred_region
      %116 = dma.done [#allocation5], 25600
    $region65: #{multiclass_dnn_forward.1} parent=1 // pred_fallthru
      _
    // Predicated region
    $region66: #{multiclass_dnn_forward.1} parent=1 // pred_check
      _
    $region67: #{multiclass_dnn_forward.1} parent=1 // pred_check_branch
      %118 = sbr.rel (0) target = $region69
    $region68: #{multiclass_dnn_forward.1} parent=1 // pred_region
      %119 = dma.done [#allocation8], 10240
    $region69: #{multiclass_dnn_forward.1} parent=1 // pred_fallthru
      _
    // Predicated region
    $region70: #{multiclass_dnn_forward.1} parent=1 // pred_check
      _
    $region71: #{multiclass_dnn_forward.1} parent=1 // pred_check_branch
      %121 = sbr.rel (0) target = $region73
    $region72: #{multiclass_dnn_forward.1} parent=1 // pred_region
      %122 = dma.done [#allocation8], 2048
    $region73: #{multiclass_dnn_forward.1} parent=1 // pred_fallthru
      _
    // Predicated region
    $region74: #{multiclass_dnn_forward.1} parent=1 // pred_check
      _
    $region75: #{multiclass_dnn_forward.1} parent=1 // pred_check_branch
      %124 = sbr.rel (0) target = $region77
    $region76: #{multiclass_dnn_forward.1} parent=1 // pred_region
      %125 = dma.done [#allocation11], 1024
    $region77: #{multiclass_dnn_forward.1} parent=1 // pred_fallthru
      _
    %v127 = vld [vmem:[%s0] sm:$0xf]
    %v128 = vld [vmem:[#allocation2] sm:$0xff]
    %v129 = vld [vmem:[#allocation2 + $0x8] sm:$0xff]
    %v130 = vld [vmem:[#allocation2 + $0x10] sm:$0xff]
    %v131 = vld [vmem:[#allocation2 + $0x18] sm:$0xff]
    %v132 = vld [vmem:[#allocation2 + $0x20] sm:$0xff]
    %v133 = vld [vmem:[#allocation2 + $0x28] sm:$0xff]
    %v134 = vld [vmem:[#allocation2 + $0x30] sm:$0xff]
    %v135 = vld [vmem:[#allocation2 + $0x38] sm:$0xff]
    %v136 = vld [vmem:[#allocation2 + $0x40] sm:$0xff]
    %v137 = vld [vmem:[#allocation2 + $0x48] sm:$0xff]
    %v138 = vld [vmem:[#allocation2 + $0x50] sm:$0xff]
    %v139 = vld [vmem:[#allocation2 + $0x58] sm:$0xff]
    %v140 = vld [vmem:[#allocation2 + $0x60] sm:$0xff]
    %v141 = vld [vmem:[#allocation2 + $0x68] sm:$0xff]
    %v142 = vld [vmem:[#allocation2 + $0x70] sm:$0xff]
    %v143 = vld [vmem:[#allocation2 + $0x78] sm:$0xff]
    %v144 = vld [vmem:[%s7] sm:$0x3]
    %v146 = vlaneseq
    %v147 = vshrl.u32 %v146, 7
    %v148 = vsub.s32 0, %v147
    %v149 = vrot.slane %v144, %v148
    %v150 = vlaneseq
    %v151 = vshrl.u32 %v150, 7
    %v152 = vsub.s32 1, %v151
    %v153 = vrot.slane %v144, %v152
    %v172 = vunpack.c.l.b16 %v128
    %v173 = vunpack.c.h.b16 %v128
    %v174 = vunpack.c.l.b16 %v129
    %v175 = vunpack.c.h.b16 %v129
    %v176 = vunpack.c.l.b16 %v130
    %v177 = vunpack.c.h.b16 %v130
    %v178 = vunpack.c.l.b16 %v131
    %v179 = vunpack.c.h.b16 %v131
    %v180 = vunpack.c.l.b16 %v132
    %v181 = vunpack.c.h.b16 %v132
    %v182 = vunpack.c.l.b16 %v133
    %v183 = vunpack.c.h.b16 %v133
    %v184 = vunpack.c.l.b16 %v134
    %v185 = vunpack.c.h.b16 %v134
    %v186 = vunpack.c.l.b16 %v135
    %v187 = vunpack.c.h.b16 %v135
    %v188 = vunpack.c.l.b16 %v136
    %v189 = vunpack.c.h.b16 %v136
    %v190 = vunpack.c.l.b16 %v137
    %v191 = vunpack.c.h.b16 %v137
    %v192 = vunpack.c.l.b16 %v138
    %v193 = vunpack.c.h.b16 %v138
    %v194 = vunpack.c.l.b16 %v139
    %v195 = vunpack.c.h.b16 %v139
    %v196 = vunpack.c.l.b16 %v140
    %v197 = vunpack.c.h.b16 %v140
    %v198 = vunpack.c.l.b16 %v141
    %v199 = vunpack.c.h.b16 %v141
    %v200 = vunpack.c.l.b16 %v142
    %v201 = vunpack.c.h.b16 %v142
    %v202 = vunpack.c.l.b16 %v143
    %v203 = vunpack.c.h.b16 %v143
    %v204 = vpack.c.b16 %v174, %v172
    %v205 = vpack.c.b16 %v175, %v173
    %v206 = vpack.c.b16 %v178, %v176
    %v207 = vpack.c.b16 %v179, %v177
    %v208 = vpack.c.b16 %v182, %v180
    %v209 = vpack.c.b16 %v183, %v181
    %v210 = vpack.c.b16 %v186, %v184
    %v211 = vpack.c.b16 %v187, %v185
    %v212 = vpack.c.b16 %v190, %v188
    %v213 = vpack.c.b16 %v191, %v189
    %v214 = vpack.c.b16 %v194, %v192
    %v215 = vpack.c.b16 %v195, %v193
    %v216 = vpack.c.b16 %v198, %v196
    %v217 = vpack.c.b16 %v199, %v197
    %v218 = vpack.c.b16 %v202, %v200
    %v219 = vpack.c.b16 %v203, %v201
    %236 = vmatprep.subr.bf16.mxu0 %v205
    %237 = vmatpush1.bf16.msra.mxu0 %v204
    %238 = vmatprep.subr.bf16.mxu0 %v207
    %239 = vmatpush1.bf16.msra.mxu0 %v206
    %240 = vmatprep.subr.bf16.mxu0 %v209
    %241 = vmatpush1.bf16.msra.mxu0 %v208
    %242 = vmatprep.subr.bf16.mxu0 %v211
    %243 = vmatpush1.bf16.msra.mxu0 %v210
    %244 = vmatprep.subr.bf16.mxu0 %v213
    %245 = vmatpush1.bf16.msra.mxu0 %v212
    %246 = vmatprep.subr.bf16.mxu0 %v215
    %247 = vmatpush1.bf16.msra.mxu0 %v214
    %248 = vmatprep.subr.bf16.mxu0 %v217
    %249 = vmatpush1.bf16.msra.mxu0 %v216
    %250 = vmatprep.subr.bf16.mxu0 %v219
    %251 = vmatpush1.bf16.msra.mxu0 %v218
    %252 = vmatprep.subr.bf16.mxu0 0
    %253 = vmatpush1.bf16.msra.mxu0 0
    %254 = vmatprep.subr.bf16.mxu0 0
    %255 = vmatpush1.bf16.msra.mxu0 0
    %256 = vmatprep.subr.bf16.mxu0 0
    %257 = vmatpush1.bf16.msra.mxu0 0
    %258 = vmatprep.subr.bf16.mxu0 0
    %259 = vmatpush1.bf16.msra.mxu0 0
    %260 = vmatprep.subr.bf16.mxu0 0
    %261 = vmatpush1.bf16.msra.mxu0 0
    %262 = vmatprep.subr.bf16.mxu0 0
    %263 = vmatpush1.bf16.msra.mxu0 0
    %264 = vmatprep.subr.bf16.mxu0 0
    %265 = vmatpush1.bf16.msra.mxu0 0
    %266 = vmatprep.subr.bf16.mxu0 0
    %267 = vmatpush1.bf16.msra.mxu0 0
    %268 = vmatprep.mubr.bf16.mxu0 0
    %269 = vmatmul.mubr.bf16.gmra.mrb[0].mxu0 %v127
    %v270 = vpop.f32.mrb[0].mxu0
    %v271 = vadd.f32 %v149, %v270
    %v272 = vpop.f32.mrb[0].mxu0
    %v273 = vadd.f32 %v153, %v272
    %v274 = vpop.f32.mrb[0].mxu0
    %v275 = vpop.f32.mrb[0].mxu0
    %276 = vdwg.mxu0
    %v277 = vxor.u32 %v271, 2147483648
    %v278 = vxor.u32 %v273, 2147483648
    %v279 = vmul.f32 %v277, 1.442695
    %v280 = vpow.pop %v279
    %v281 = vmul.f32 %v278, 1.442695
    %v282 = vpow.pop %v281
    %v283 = vadd.f32 %v280, 1.0
    %v284 = vadd.f32 %v282, 1.0
    %v285 = vrcp.pop %v283
    %v286 = vmul.f32 1.0, %v285
    %v287 = vrcp.pop %v284
    %v288 = vmul.f32 1.0, %v287
    %v289 = vmul.f32 %v271, %v286
    %v290 = vmul.f32 %v273, %v288
    %v291 = vpack.c.bf16 %v289, %v289
    %v292 = vpack.c.bf16 %v290, %v290
    %v293 = vld [vmem:[#allocation4] sm:$0xff]
    %v294 = vld [vmem:[#allocation4 + $0x8] sm:$0xff]
    %v295 = vld [vmem:[#allocation4 + $0x10] sm:$0xf]
    %v296 = vld [vmem:[#allocation4 + $0x14] sm:$0xff]
    %v297 = vld [vmem:[#allocation4 + $0x1c] sm:$0xff]
    %v298 = vld [vmem:[#allocation4 + $0x24] sm:$0xf]
    %v299 = vld [vmem:[#allocation4 + $0x28] sm:$0xff]
    %v300 = vld [vmem:[#allocation4 + $0x30] sm:$0xff]
    %v301 = vld [vmem:[#allocation4 + $0x38] sm:$0xf]
    %v302 = vld [vmem:[#allocation4 + $0x3c] sm:$0xff]
    %v303 = vld [vmem:[#allocation4 + $0x44] sm:$0xff]
    %v304 = vld [vmem:[#allocation4 + $0x4c] sm:$0xf]
    %v305 = vld [vmem:[#allocation4 + $0x50] sm:$0xff]
    %v306 = vld [vmem:[#allocation4 + $0x58] sm:$0xff]
    %v307 = vld [vmem:[#allocation4 + $0x60] sm:$0xf]
    %v308 = vld [vmem:[#allocation4 + $0x64] sm:$0xff]
    %v309 = vld [vmem:[#allocation4 + $0x6c] sm:$0xff]
    %v310 = vld [vmem:[#allocation4 + $0x74] sm:$0xf]
    %v311 = vld [vmem:[#allocation4 + $0x78] sm:$0xff]
    %v312 = vld [vmem:[#allocation4 + $0x80] sm:$0xff]
    %v313 = vld [vmem:[#allocation4 + $0x88] sm:$0xf]
    %v314 = vld [vmem:[#allocation4 + $0x8c] sm:$0xff]
    %v315 = vld [vmem:[#allocation4 + $0x94] sm:$0xff]
    %v316 = vld [vmem:[#allocation4 + $0x9c] sm:$0xf]
    %v317 = vld [vmem:[#allocation4 + $0xa0] sm:$0xff]
    %v318 = vld [vmem:[#allocation4 + $0xa8] sm:$0xff]
    %v319 = vld [vmem:[#allocation4 + $0xb0] sm:$0xf]
    %v320 = vld [vmem:[#allocation4 + $0xb4] sm:$0xff]
    %v321 = vld [vmem:[#allocation4 + $0xbc] sm:$0xff]
    %v322 = vld [vmem:[#allocation4 + $0xc4] sm:$0xf]
    %v323 = vld [vmem:[#allocation4 + $0xc8] sm:$0xff]
    %v324 = vld [vmem:[#allocation4 + $0xd0] sm:$0xff]
    %v325 = vld [vmem:[#allocation4 + $0xd8] sm:$0xf]
    %v326 = vld [vmem:[#allocation4 + $0xdc] sm:$0xff]
    %v327 = vld [vmem:[#allocation4 + $0xe4] sm:$0xff]
    %v328 = vld [vmem:[#allocation4 + $0xec] sm:$0xf]
    %v329 = vld [vmem:[#allocation4 + $0xf0] sm:$0xff]
    %v330 = vld [vmem:[#allocation4 + $0xf8] sm:$0xff]
    %v331 = vld [vmem:[#allocation4 + $0x100] sm:$0xf]
    %v332 = vld [vmem:[#allocation4 + $0x104] sm:$0xff]
    %v333 = vld [vmem:[#allocation4 + $0x10c] sm:$0xff]
    %v334 = vld [vmem:[#allocation4 + $0x114] sm:$0xf]
    %v335 = vld [vmem:[#allocation4 + $0x118] sm:$0xff]
    %v336 = vld [vmem:[#allocation4 + $0x120] sm:$0xff]
    %v337 = vld [vmem:[#allocation4 + $0x128] sm:$0xf]
    %v338 = vld [vmem:[#allocation4 + $0x12c] sm:$0xff]
    %v339 = vld [vmem:[#allocation4 + $0x134] sm:$0xff]
    %v340 = vld [vmem:[#allocation4 + $0x13c] sm:$0xf]
    %v341 = vld [vmem:[#allocation4 + $0x140] sm:$0xff]
    %v342 = vld [vmem:[#allocation4 + $0x148] sm:$0xff]
    %v343 = vld [vmem:[#allocation4 + $0x150] sm:$0xf]
    %v344 = vld [vmem:[#allocation4 + $0x154] sm:$0xff]
    %v345 = vld [vmem:[#allocation4 + $0x15c] sm:$0xff]
    %v346 = vld [vmem:[#allocation4 + $0x164] sm:$0xf]
    %v347 = vld [vmem:[#allocation4 + $0x168] sm:$0xff]
    %v348 = vld [vmem:[#allocation4 + $0x170] sm:$0xff]
    %v349 = vld [vmem:[#allocation4 + $0x178] sm:$0xf]
    %v350 = vld [vmem:[#allocation4 + $0x17c] sm:$0xff]
    %v351 = vld [vmem:[#allocation4 + $0x184] sm:$0xff]
    %v352 = vld [vmem:[#allocation4 + $0x18c] sm:$0xf]
    %v353 = vld [vmem:[#allocation4 + $0x190] sm:$0xff]
    %v354 = vld [vmem:[#allocation4 + $0x198] sm:$0xff]
    %v355 = vld [vmem:[#allocation4 + $0x1a0] sm:$0xf]
    %v356 = vld [vmem:[#allocation4 + $0x1a4] sm:$0xff]
    %v357 = vld [vmem:[#allocation4 + $0x1ac] sm:$0xff]
    %v358 = vld [vmem:[#allocation4 + $0x1b4] sm:$0xf]
    %v359 = vld [vmem:[#allocation4 + $0x1b8] sm:$0xff]
    %v360 = vld [vmem:[#allocation4 + $0x1c0] sm:$0xff]
    %v361 = vld [vmem:[#allocation4 + $0x1c8] sm:$0xf]
    %v362 = vld [vmem:[#allocation4 + $0x1cc] sm:$0xff]
    %v363 = vld [vmem:[#allocation4 + $0x1d4] sm:$0xff]
    %v364 = vld [vmem:[#allocation4 + $0x1dc] sm:$0xf]
    %v365 = vld [vmem:[#allocation4 + $0x1e0] sm:$0xff]
    %v366 = vld [vmem:[#allocation4 + $0x1e8] sm:$0xff]
    %v367 = vld [vmem:[#allocation4 + $0x1f0] sm:$0xf]
    %v368 = vld [vmem:[#allocation4 + $0x1f4] sm:$0xff]
    %v369 = vld [vmem:[#allocation4 + $0x1fc] sm:$0xff]
    %v370 = vld [vmem:[#allocation4 + $0x204] sm:$0xf]
    %v371 = vld [vmem:[#allocation4 + $0x208] sm:$0xff]
    %v372 = vld [vmem:[#allocation4 + $0x210] sm:$0xff]
    %v373 = vld [vmem:[#allocation4 + $0x218] sm:$0xf]
    %v374 = vld [vmem:[#allocation4 + $0x21c] sm:$0xff]
    %v375 = vld [vmem:[#allocation4 + $0x224] sm:$0xff]
    %v376 = vld [vmem:[#allocation4 + $0x22c] sm:$0xf]
    %v377 = vld [vmem:[#allocation4 + $0x230] sm:$0xff]
    %v378 = vld [vmem:[#allocation4 + $0x238] sm:$0xff]
    %v379 = vld [vmem:[#allocation4 + $0x240] sm:$0xf]
    %v380 = vld [vmem:[#allocation4 + $0x244] sm:$0xff]
    %v381 = vld [vmem:[#allocation4 + $0x24c] sm:$0xff]
    %v382 = vld [vmem:[#allocation4 + $0x254] sm:$0xf]
    %v383 = vld [vmem:[#allocation4 + $0x258] sm:$0xff]
    %v384 = vld [vmem:[#allocation4 + $0x260] sm:$0xff]
    %v385 = vld [vmem:[#allocation4 + $0x268] sm:$0xf]
    %v386 = vld [vmem:[#allocation4 + $0x26c] sm:$0xff]
    %v387 = vld [vmem:[#allocation4 + $0x274] sm:$0xff]
    %v388 = vld [vmem:[#allocation4 + $0x27c] sm:$0xf]
    %v389 = vld [vmem:[%s8] sm:$0x1f]
    %v391 = vlaneseq
    %v392 = vshrl.u32 %v391, 7
    %v393 = vsub.s32 0, %v392
    %v394 = vrot.slane %v389, %v393
    %v395 = vlaneseq
    %v396 = vshrl.u32 %v395, 7
    %v397 = vsub.s32 1, %v396
    %v398 = vrot.slane %v389, %v397
    %v399 = vlaneseq
    %v400 = vshrl.u32 %v399, 7
    %v401 = vsub.s32 2, %v400
    %v402 = vrot.slane %v389, %v401
    %v403 = vlaneseq
    %v404 = vshrl.u32 %v403, 7
    %v405 = vsub.s32 3, %v404
    %v406 = vrot.slane %v389, %v405
    %v407 = vlaneseq
    %v408 = vshrl.u32 %v407, 7
    %v409 = vsub.s32 4, %v408
    %v410 = vrot.slane %v389, %v409
    %v512 = vunpack.c.l.b16 %v293
    %v513 = vunpack.c.h.b16 %v293
    %v514 = vunpack.c.l.b16 %v294
    %v515 = vunpack.c.h.b16 %v294
    %v516 = vunpack.c.l.b16 %v295
    %v517 = vunpack.c.l.b16 %v296
    %v518 = vunpack.c.h.b16 %v296
    %v519 = vunpack.c.l.b16 %v297
    %v520 = vunpack.c.h.b16 %v297
    %v521 = vunpack.c.l.b16 %v298
    %v522 = vunpack.c.l.b16 %v299
    %v523 = vunpack.c.h.b16 %v299
    %v524 = vunpack.c.l.b16 %v300
    %v525 = vunpack.c.h.b16 %v300
    %v526 = vunpack.c.l.b16 %v301
    %v527 = vunpack.c.l.b16 %v302
    %v528 = vunpack.c.h.b16 %v302
    %v529 = vunpack.c.l.b16 %v303
    %v530 = vunpack.c.h.b16 %v303
    %v531 = vunpack.c.l.b16 %v304
    %v532 = vunpack.c.l.b16 %v305
    %v533 = vunpack.c.h.b16 %v305
    %v534 = vunpack.c.l.b16 %v306
    %v535 = vunpack.c.h.b16 %v306
    %v536 = vunpack.c.l.b16 %v307
    %v537 = vunpack.c.l.b16 %v308
    %v538 = vunpack.c.h.b16 %v308
    %v539 = vunpack.c.l.b16 %v309
    %v540 = vunpack.c.h.b16 %v309
    %v541 = vunpack.c.l.b16 %v310
    %v542 = vunpack.c.l.b16 %v311
    %v543 = vunpack.c.h.b16 %v311
    %v544 = vunpack.c.l.b16 %v312
    %v545 = vunpack.c.h.b16 %v312
    %v546 = vunpack.c.l.b16 %v313
    %v547 = vunpack.c.l.b16 %v314
    %v548 = vunpack.c.h.b16 %v314
    %v549 = vunpack.c.l.b16 %v315
    %v550 = vunpack.c.h.b16 %v315
    %v551 = vunpack.c.l.b16 %v316
    %v552 = vunpack.c.l.b16 %v317
    %v553 = vunpack.c.h.b16 %v317
    %v554 = vunpack.c.l.b16 %v318
    %v555 = vunpack.c.h.b16 %v318
    %v556 = vunpack.c.l.b16 %v319
    %v557 = vunpack.c.l.b16 %v320
    %v558 = vunpack.c.h.b16 %v320
    %v559 = vunpack.c.l.b16 %v321
    %v560 = vunpack.c.h.b16 %v321
    %v561 = vunpack.c.l.b16 %v322
    %v562 = vunpack.c.l.b16 %v323
    %v563 = vunpack.c.h.b16 %v323
    %v564 = vunpack.c.l.b16 %v324
    %v565 = vunpack.c.h.b16 %v324
    %v566 = vunpack.c.l.b16 %v325
    %v567 = vunpack.c.l.b16 %v326
    %v568 = vunpack.c.h.b16 %v326
    %v569 = vunpack.c.l.b16 %v327
    %v570 = vunpack.c.h.b16 %v327
    %v571 = vunpack.c.l.b16 %v328
    %v572 = vunpack.c.l.b16 %v329
    %v573 = vunpack.c.h.b16 %v329
    %v574 = vunpack.c.l.b16 %v330
    %v575 = vunpack.c.h.b16 %v330
    %v576 = vunpack.c.l.b16 %v331
    %v577 = vunpack.c.l.b16 %v332
    %v578 = vunpack.c.h.b16 %v332
    %v579 = vunpack.c.l.b16 %v333
    %v580 = vunpack.c.h.b16 %v333
    %v581 = vunpack.c.l.b16 %v334
    %v582 = vunpack.c.l.b16 %v335
    %v583 = vunpack.c.h.b16 %v335
    %v584 = vunpack.c.l.b16 %v336
    %v585 = vunpack.c.h.b16 %v336
    %v586 = vunpack.c.l.b16 %v337
    %v587 = vunpack.c.l.b16 %v338
    %v588 = vunpack.c.h.b16 %v338
    %v589 = vunpack.c.l.b16 %v339
    %v590 = vunpack.c.h.b16 %v339
    %v591 = vunpack.c.l.b16 %v340
    %v592 = vunpack.c.l.b16 %v341
    %v593 = vunpack.c.h.b16 %v341
    %v594 = vunpack.c.l.b16 %v342
    %v595 = vunpack.c.h.b16 %v342
    %v596 = vunpack.c.l.b16 %v343
    %v597 = vunpack.c.l.b16 %v344
    %v598 = vunpack.c.h.b16 %v344
    %v599 = vunpack.c.l.b16 %v345
    %v600 = vunpack.c.h.b16 %v345
    %v601 = vunpack.c.l.b16 %v346
    %v602 = vunpack.c.l.b16 %v347
    %v603 = vunpack.c.h.b16 %v347
    %v604 = vunpack.c.l.b16 %v348
    %v605 = vunpack.c.h.b16 %v348
    %v606 = vunpack.c.l.b16 %v349
    %v607 = vunpack.c.l.b16 %v350
    %v608 = vunpack.c.h.b16 %v350
    %v609 = vunpack.c.l.b16 %v351
    %v610 = vunpack.c.h.b16 %v351
    %v611 = vunpack.c.l.b16 %v352
    %v612 = vunpack.c.l.b16 %v353
    %v613 = vunpack.c.h.b16 %v353
    %v614 = vunpack.c.l.b16 %v354
    %v615 = vunpack.c.h.b16 %v354
    %v616 = vunpack.c.l.b16 %v355
    %v617 = vunpack.c.l.b16 %v356
    %v618 = vunpack.c.h.b16 %v356
    %v619 = vunpack.c.l.b16 %v357
    %v620 = vunpack.c.h.b16 %v357
    %v621 = vunpack.c.l.b16 %v358
    %v622 = vunpack.c.l.b16 %v359
    %v623 = vunpack.c.h.b16 %v359
    %v624 = vunpack.c.l.b16 %v360
    %v625 = vunpack.c.h.b16 %v360
    %v626 = vunpack.c.l.b16 %v361
    %v627 = vunpack.c.l.b16 %v362
    %v628 = vunpack.c.h.b16 %v362
    %v629 = vunpack.c.l.b16 %v363
    %v630 = vunpack.c.h.b16 %v363
    %v631 = vunpack.c.l.b16 %v364
    %v632 = vunpack.c.l.b16 %v365
    %v633 = vunpack.c.h.b16 %v365
    %v634 = vunpack.c.l.b16 %v366
    %v635 = vunpack.c.h.b16 %v366
    %v636 = vunpack.c.l.b16 %v367
    %v637 = vunpack.c.l.b16 %v368
    %v638 = vunpack.c.h.b16 %v368
    %v639 = vunpack.c.l.b16 %v369
    %v640 = vunpack.c.h.b16 %v369
    %v641 = vunpack.c.l.b16 %v370
    %v642 = vunpack.c.l.b16 %v371
    %v643 = vunpack.c.h.b16 %v371
    %v644 = vunpack.c.l.b16 %v372
    %v645 = vunpack.c.h.b16 %v372
    %v646 = vunpack.c.l.b16 %v373
    %v647 = vunpack.c.l.b16 %v374
    %v648 = vunpack.c.h.b16 %v374
    %v649 = vunpack.c.l.b16 %v375
    %v650 = vunpack.c.h.b16 %v375
    %v651 = vunpack.c.l.b16 %v376
    %v652 = vunpack.c.l.b16 %v377
    %v653 = vunpack.c.h.b16 %v377
    %v654 = vunpack.c.l.b16 %v378
    %v655 = vunpack.c.h.b16 %v378
    %v656 = vunpack.c.l.b16 %v379
    %v657 = vunpack.c.l.b16 %v380
    %v658 = vunpack.c.h.b16 %v380
    %v659 = vunpack.c.l.b16 %v381
    %v660 = vunpack.c.h.b16 %v381
    %v661 = vunpack.c.l.b16 %v382
    %v662 = vunpack.c.l.b16 %v383
    %v663 = vunpack.c.h.b16 %v383
    %v664 = vunpack.c.l.b16 %v384
    %v665 = vunpack.c.h.b16 %v384
    %v666 = vunpack.c.l.b16 %v385
    %v667 = vunpack.c.l.b16 %v386
    %v668 = vunpack.c.h.b16 %v386
    %v669 = vunpack.c.l.b16 %v387
    %v670 = vunpack.c.h.b16 %v387
    %v671 = vunpack.c.l.b16 %v388
    %v672 = vpack.c.b16 %v517, %v512
    %v673 = vpack.c.b16 %v518, %v513
    %v674 = vpack.c.b16 %v519, %v514
    %v675 = vpack.c.b16 %v520, %v515
    %v676 = vpack.c.b16 %v521, %v516
    %v677 = vpack.c.b16 %v527, %v522
    %v678 = vpack.c.b16 %v528, %v523
    %v679 = vpack.c.b16 %v529, %v524
    %v680 = vpack.c.b16 %v530, %v525
    %v681 = vpack.c.b16 %v531, %v526
    %v682 = vpack.c.b16 %v537, %v532
    %v683 = vpack.c.b16 %v538, %v533
    %v684 = vpack.c.b16 %v539, %v534
    %v685 = vpack.c.b16 %v540, %v535
    %v686 = vpack.c.b16 %v541, %v536
    %v687 = vpack.c.b16 %v547, %v542
    %v688 = vpack.c.b16 %v548, %v543
    %v689 = vpack.c.b16 %v549, %v544
    %v690 = vpack.c.b16 %v550, %v545
    %v691 = vpack.c.b16 %v551, %v546
    %v692 = vpack.c.b16 %v557, %v552
    %v693 = vpack.c.b16 %v558, %v553
    %v694 = vpack.c.b16 %v559, %v554
    %v695 = vpack.c.b16 %v560, %v555
    %v696 = vpack.c.b16 %v561, %v556
    %v697 = vpack.c.b16 %v567, %v562
    %v698 = vpack.c.b16 %v568, %v563
    %v699 = vpack.c.b16 %v569, %v564
    %v700 = vpack.c.b16 %v570, %v565
    %v701 = vpack.c.b16 %v571, %v566
    %v702 = vpack.c.b16 %v577, %v572
    %v703 = vpack.c.b16 %v578, %v573
    %v704 = vpack.c.b16 %v579, %v574
    %v705 = vpack.c.b16 %v580, %v575
    %v706 = vpack.c.b16 %v581, %v576
    %v707 = vpack.c.b16 %v587, %v582
    %v708 = vpack.c.b16 %v588, %v583
    %v709 = vpack.c.b16 %v589, %v584
    %v710 = vpack.c.b16 %v590, %v585
    %v711 = vpack.c.b16 %v591, %v586
    %v712 = vpack.c.b16 %v597, %v592
    %v713 = vpack.c.b16 %v598, %v593
    %v714 = vpack.c.b16 %v599, %v594
    %v715 = vpack.c.b16 %v600, %v595
    %v716 = vpack.c.b16 %v601, %v596
    %v717 = vpack.c.b16 %v607, %v602
    %v718 = vpack.c.b16 %v608, %v603
    %v719 = vpack.c.b16 %v609, %v604
    %v720 = vpack.c.b16 %v610, %v605
    %v721 = vpack.c.b16 %v611, %v606
    %v722 = vpack.c.b16 %v617, %v612
    %v723 = vpack.c.b16 %v618, %v613
    %v724 = vpack.c.b16 %v619, %v614
    %v725 = vpack.c.b16 %v620, %v615
    %v726 = vpack.c.b16 %v621, %v616
    %v727 = vpack.c.b16 %v627, %v622
    %v728 = vpack.c.b16 %v628, %v623
    %v729 = vpack.c.b16 %v629, %v624
    %v730 = vpack.c.b16 %v630, %v625
    %v731 = vpack.c.b16 %v631, %v626
    %v732 = vpack.c.b16 %v637, %v632
    %v733 = vpack.c.b16 %v638, %v633
    %v734 = vpack.c.b16 %v639, %v634
    %v735 = vpack.c.b16 %v640, %v635
    %v736 = vpack.c.b16 %v641, %v636
    %v737 = vpack.c.b16 %v647, %v642
    %v738 = vpack.c.b16 %v648, %v643
    %v739 = vpack.c.b16 %v649, %v644
    %v740 = vpack.c.b16 %v650, %v645
    %v741 = vpack.c.b16 %v651, %v646
    %v742 = vpack.c.b16 %v657, %v652
    %v743 = vpack.c.b16 %v658, %v653
    %v744 = vpack.c.b16 %v659, %v654
    %v745 = vpack.c.b16 %v660, %v655
    %v746 = vpack.c.b16 %v661, %v656
    %v747 = vpack.c.b16 %v667, %v662
    %v748 = vpack.c.b16 %v668, %v663
    %v749 = vpack.c.b16 %v669, %v664
    %v750 = vpack.c.b16 %v670, %v665
    %v751 = vpack.c.b16 %v671, %v666
    %832 = vmatprep.subr.bf16.mxu0 %v673
    %833 = vmatpush1.bf16.msra.mxu0 %v672
    %834 = vmatprep.subr.bf16.mxu0 %v678
    %835 = vmatpush1.bf16.msra.mxu0 %v677
    %836 = vmatprep.subr.bf16.mxu0 %v683
    %837 = vmatpush1.bf16.msra.mxu0 %v682
    %838 = vmatprep.subr.bf16.mxu0 %v688
    %839 = vmatpush1.bf16.msra.mxu0 %v687
    %840 = vmatprep.subr.bf16.mxu0 %v693
    %841 = vmatpush1.bf16.msra.mxu0 %v692
    %842 = vmatprep.subr.bf16.mxu0 %v698
    %843 = vmatpush1.bf16.msra.mxu0 %v697
    %844 = vmatprep.subr.bf16.mxu0 %v703
    %845 = vmatpush1.bf16.msra.mxu0 %v702
    %846 = vmatprep.subr.bf16.mxu0 %v708
    %847 = vmatpush1.bf16.msra.mxu0 %v707
    %848 = vmatprep.subr.bf16.mxu0 %v713
    %849 = vmatpush1.bf16.msra.mxu0 %v712
    %850 = vmatprep.subr.bf16.mxu0 %v718
    %851 = vmatpush1.bf16.msra.mxu0 %v717
    %852 = vmatprep.subr.bf16.mxu0 %v723
    %853 = vmatpush1.bf16.msra.mxu0 %v722
    %854 = vmatprep.subr.bf16.mxu0 %v728
    %855 = vmatpush1.bf16.msra.mxu0 %v727
    %856 = vmatprep.subr.bf16.mxu0 %v733
    %857 = vmatpush1.bf16.msra.mxu0 %v732
    %858 = vmatprep.subr.bf16.mxu0 %v738
    %859 = vmatpush1.bf16.msra.mxu0 %v737
    %860 = vmatprep.subr.bf16.mxu0 %v743
    %861 = vmatpush1.bf16.msra.mxu0 %v742
    %862 = vmatprep.subr.bf16.mxu0 %v748
    %863 = vmatpush1.bf16.msra.mxu0 %v747
    %864 = vmatprep.mubr.bf16.mxu0 %v292
    %865 = vmatmul.mubr.bf16.gmra.mrb[0].mxu0 %v291
    %v866 = vpop.f32.mrb[0].mxu0
    %v867 = vadd.f32 %v394, %v866
    %v868 = vpop.f32.mrb[0].mxu0
    %v869 = vadd.f32 %v398, %v868
    %v870 = vpop.f32.mrb[0].mxu0
    %v871 = vpop.f32.mrb[0].mxu0
    %872 = vdwg.mxu0
    %873 = vmatprep.subr.bf16.mxu0 %v675
    %874 = vmatpush1.bf16.msra.mxu0 %v674
    %875 = vmatprep.subr.bf16.mxu0 %v680
    %876 = vmatpush1.bf16.msra.mxu0 %v679
    %877 = vmatprep.subr.bf16.mxu0 %v685
    %878 = vmatpush1.bf16.msra.mxu0 %v684
    %879 = vmatprep.subr.bf16.mxu0 %v690
    %880 = vmatpush1.bf16.msra.mxu0 %v689
    %881 = vmatprep.subr.bf16.mxu0 %v695
    %882 = vmatpush1.bf16.msra.mxu0 %v694
    %883 = vmatprep.subr.bf16.mxu0 %v700
    %884 = vmatpush1.bf16.msra.mxu0 %v699
    %885 = vmatprep.subr.bf16.mxu0 %v705
    %886 = vmatpush1.bf16.msra.mxu0 %v704
    %887 = vmatprep.subr.bf16.mxu0 %v710
    %888 = vmatpush1.bf16.msra.mxu0 %v709
    %889 = vmatprep.subr.bf16.mxu0 %v715
    %890 = vmatpush1.bf16.msra.mxu0 %v714
    %891 = vmatprep.subr.bf16.mxu0 %v720
    %892 = vmatpush1.bf16.msra.mxu0 %v719
    %893 = vmatprep.subr.bf16.mxu0 %v725
    %894 = vmatpush1.bf16.msra.mxu0 %v724
    %895 = vmatprep.subr.bf16.mxu0 %v730
    %896 = vmatpush1.bf16.msra.mxu0 %v729
    %897 = vmatprep.subr.bf16.mxu0 %v735
    %898 = vmatpush1.bf16.msra.mxu0 %v734
    %899 = vmatprep.subr.bf16.mxu0 %v740
    %900 = vmatpush1.bf16.msra.mxu0 %v739
    %901 = vmatprep.subr.bf16.mxu0 %v745
    %902 = vmatpush1.bf16.msra.mxu0 %v744
    %903 = vmatprep.subr.bf16.mxu0 %v750
    %904 = vmatpush1.bf16.msra.mxu0 %v749
    %905 = vmatprep.mubr.bf16.mxu0 %v292
    %906 = vmatmul.mubr.bf16.gmra.mrb[0].mxu0 %v291
    %v907 = vpop.f32.mrb[0].mxu0
    %v908 = vadd.f32 %v402, %v907
    %v909 = vpop.f32.mrb[0].mxu0
    %v910 = vadd.f32 %v406, %v909
    %v911 = vpop.f32.mrb[0].mxu0
    %v912 = vpop.f32.mrb[0].mxu0
    %913 = vdwg.mxu0
    %914 = vmatprep.subr.bf16.mxu0 0
    %915 = vmatpush1.bf16.msra.mxu0 %v676
    %916 = vmatprep.subr.bf16.mxu0 0
    %917 = vmatpush1.bf16.msra.mxu0 %v681
    %918 = vmatprep.subr.bf16.mxu0 0
    %919 = vmatpush1.bf16.msra.mxu0 %v686
    %920 = vmatprep.subr.bf16.mxu0 0
    %921 = vmatpush1.bf16.msra.mxu0 %v691
    %922 = vmatprep.subr.bf16.mxu0 0
    %923 = vmatpush1.bf16.msra.mxu0 %v696
    %924 = vmatprep.subr.bf16.mxu0 0
    %925 = vmatpush1.bf16.msra.mxu0 %v701
    %926 = vmatprep.subr.bf16.mxu0 0
    %927 = vmatpush1.bf16.msra.mxu0 %v706
    %928 = vmatprep.subr.bf16.mxu0 0
    %929 = vmatpush1.bf16.msra.mxu0 %v711
    %930 = vmatprep.subr.bf16.mxu0 0
    %931 = vmatpush1.bf16.msra.mxu0 %v716
    %932 = vmatprep.subr.bf16.mxu0 0
    %933 = vmatpush1.bf16.msra.mxu0 %v721
    %934 = vmatprep.subr.bf16.mxu0 0
    %935 = vmatpush1.bf16.msra.mxu0 %v726
    %936 = vmatprep.subr.bf16.mxu0 0
    %937 = vmatpush1.bf16.msra.mxu0 %v731
    %938 = vmatprep.subr.bf16.mxu0 0
    %939 = vmatpush1.bf16.msra.mxu0 %v736
    %940 = vmatprep.subr.bf16.mxu0 0
    %941 = vmatpush1.bf16.msra.mxu0 %v741
    %942 = vmatprep.subr.bf16.mxu0 0
    %943 = vmatpush1.bf16.msra.mxu0 %v746
    %944 = vmatprep.subr.bf16.mxu0 0
    %945 = vmatpush1.bf16.msra.mxu0 %v751
    %946 = vmatprep.mubr.bf16.mxu0 %v292
    %947 = vmatmul.mubr.bf16.gmra.mrb[0].mxu0 %v291
    %v948 = vpop.f32.mrb[0].mxu0
    %v949 = vadd.f32 %v410, %v948
    %v950 = vpop.f32.mrb[0].mxu0
    %v951 = vpop.f32.mrb[0].mxu0
    %v952 = vpop.f32.mrb[0].mxu0
    %953 = vdwg.mxu0
    %v954 = vxor.u32 %v867, 2147483648
    %v955 = vxor.u32 %v869, 2147483648
    %v956 = vxor.u32 %v908, 2147483648
    %v957 = vxor.u32 %v910, 2147483648
    %v958 = vxor.u32 %v949, 2147483648
    %v959 = vmul.f32 %v954, 1.442695
    %v960 = vpow.pop %v959
    %v961 = vmul.f32 %v955, 1.442695
    %v962 = vpow.pop %v961
    %v963 = vmul.f32 %v956, 1.442695
    %v964 = vpow.pop %v963
    %v965 = vmul.f32 %v957, 1.442695
    %v966 = vpow.pop %v965
    %v967 = vmul.f32 %v958, 1.442695
    %v968 = vpow.pop %v967
    %v969 = vadd.f32 %v960, 1.0
    %v970 = vadd.f32 %v962, 1.0
    %v971 = vadd.f32 %v964, 1.0
    %v972 = vadd.f32 %v966, 1.0
    %v973 = vadd.f32 %v968, 1.0
    %v974 = vrcp.pop %v969
    %v975 = vmul.f32 1.0, %v974
    %v976 = vrcp.pop %v970
    %v977 = vmul.f32 1.0, %v976
    %v978 = vrcp.pop %v971
    %v979 = vmul.f32 1.0, %v978
    %v980 = vrcp.pop %v972
    %v981 = vmul.f32 1.0, %v980
    %v982 = vrcp.pop %v973
    %v983 = vmul.f32 1.0, %v982
    %v984 = vmul.f32 %v867, %v975
    %v985 = vmul.f32 %v869, %v977
    %v986 = vmul.f32 %v908, %v979
    %v987 = vmul.f32 %v910, %v981
    %v988 = vmul.f32 %v949, %v983
    %v989 = vpack.c.bf16 %v984, %v984
    %v990 = vpack.c.bf16 %v985, %v985
    %v991 = vpack.c.bf16 %v986, %v986
    %v992 = vpack.c.bf16 %v987, %v987
    %v993 = vpack.c.bf16 %v988, %v988
    %v994 = vld [vmem:[#allocation6] sm:$0xff]
    %v995 = vld [vmem:[#allocation6 + $0x8] sm:$0xff]
    %v996 = vld [vmem:[#allocation6 + $0x10] sm:$0xf]
    %v997 = vld [vmem:[#allocation6 + $0x14] sm:$0xff]
    %v998 = vld [vmem:[#allocation6 + $0x1c] sm:$0xff]
    %v999 = vld [vmem:[#allocation6 + $0x24] sm:$0xf]
    %v1000 = vld [vmem:[#allocation6 + $0x28] sm:$0xff]
    %v1001 = vld [vmem:[#allocation6 + $0x30] sm:$0xff]
    %v1002 = vld [vmem:[#allocation6 + $0x38] sm:$0xf]
    %v1003 = vld [vmem:[#allocation6 + $0x3c] sm:$0xff]
    %v1004 = vld [vmem:[#allocation6 + $0x44] sm:$0xff]
    %v1005 = vld [vmem:[#allocation6 + $0x4c] sm:$0xf]
    %v1006 = vld [vmem:[#allocation6 + $0x50] sm:$0xff]
    %v1007 = vld [vmem:[#allocation6 + $0x58] sm:$0xff]
    %v1008 = vld [vmem:[#allocation6 + $0x60] sm:$0xf]
    %v1009 = vld [vmem:[#allocation6 + $0x64] sm:$0xff]
    %v1010 = vld [vmem:[#allocation6 + $0x6c] sm:$0xff]
    %v1011 = vld [vmem:[#allocation6 + $0x74] sm:$0xf]
    %v1012 = vld [vmem:[#allocation6 + $0x78] sm:$0xff]
    %v1013 = vld [vmem:[#allocation6 + $0x80] sm:$0xff]
    %v1014 = vld [vmem:[#allocation6 + $0x88] sm:$0xf]
    %v1015 = vld [vmem:[#allocation6 + $0x8c] sm:$0xff]
    %v1016 = vld [vmem:[#allocation6 + $0x94] sm:$0xff]
    %v1017 = vld [vmem:[#allocation6 + $0x9c] sm:$0xf]
    %v1018 = vld [vmem:[#allocation6 + $0xa0] sm:$0xff]
    %v1019 = vld [vmem:[#allocation6 + $0xa8] sm:$0xff]
    %v1020 = vld [vmem:[#allocation6 + $0xb0] sm:$0xf]
    %v1021 = vld [vmem:[#allocation6 + $0xb4] sm:$0xff]
    %v1022 = vld [vmem:[#allocation6 + $0xbc] sm:$0xff]
    %v1023 = vld [vmem:[#allocation6 + $0xc4] sm:$0xf]
    %v1024 = vld [vmem:[#allocation6 + $0xc8] sm:$0xff]
    %v1025 = vld [vmem:[#allocation6 + $0xd0] sm:$0xff]
    %v1026 = vld [vmem:[#allocation6 + $0xd8] sm:$0xf]
    %v1027 = vld [vmem:[#allocation6 + $0xdc] sm:$0xff]
    %v1028 = vld [vmem:[#allocation6 + $0xe4] sm:$0xff]
    %v1029 = vld [vmem:[#allocation6 + $0xec] sm:$0xf]
    %v1030 = vld [vmem:[#allocation6 + $0xf0] sm:$0xff]
    %v1031 = vld [vmem:[#allocation6 + $0xf8] sm:$0xff]
    %v1032 = vld [vmem:[#allocation6 + $0x100] sm:$0xf]
    %v1033 = vld [vmem:[#allocation6 + $0x104] sm:$0xff]
    %v1034 = vld [vmem:[#allocation6 + $0x10c] sm:$0xff]
    %v1035 = vld [vmem:[#allocation6 + $0x114] sm:$0xf]
    %v1036 = vld [vmem:[#allocation6 + $0x118] sm:$0xff]
    %v1037 = vld [vmem:[#allocation6 + $0x120] sm:$0xff]
    %v1038 = vld [vmem:[#allocation6 + $0x128] sm:$0xf]
    %v1039 = vld [vmem:[#allocation6 + $0x12c] sm:$0xff]
    %v1040 = vld [vmem:[#allocation6 + $0x134] sm:$0xff]
    %v1041 = vld [vmem:[#allocation6 + $0x13c] sm:$0xf]
    %v1042 = vld [vmem:[#allocation6 + $0x140] sm:$0xff]
    %v1043 = vld [vmem:[#allocation6 + $0x148] sm:$0xff]
    %v1044 = vld [vmem:[#allocation6 + $0x150] sm:$0xf]
    %v1045 = vld [vmem:[#allocation6 + $0x154] sm:$0xff]
    %v1046 = vld [vmem:[#allocation6 + $0x15c] sm:$0xff]
    %v1047 = vld [vmem:[#allocation6 + $0x164] sm:$0xf]
    %v1048 = vld [vmem:[#allocation6 + $0x168] sm:$0xff]
    %v1049 = vld [vmem:[#allocation6 + $0x170] sm:$0xff]
    %v1050 = vld [vmem:[#allocation6 + $0x178] sm:$0xf]
    %v1051 = vld [vmem:[#allocation6 + $0x17c] sm:$0xff]
    %v1052 = vld [vmem:[#allocation6 + $0x184] sm:$0xff]
    %v1053 = vld [vmem:[#allocation6 + $0x18c] sm:$0xf]
    %v1054 = vld [vmem:[#allocation6 + $0x190] sm:$0xff]
    %v1055 = vld [vmem:[#allocation6 + $0x198] sm:$0xff]
    %v1056 = vld [vmem:[#allocation6 + $0x1a0] sm:$0xf]
    %v1057 = vld [vmem:[#allocation6 + $0x1a4] sm:$0xff]
    %v1058 = vld [vmem:[#allocation6 + $0x1ac] sm:$0xff]
    %v1059 = vld [vmem:[#allocation6 + $0x1b4] sm:$0xf]
    %v1060 = vld [vmem:[#allocation6 + $0x1b8] sm:$0xff]
    %v1061 = vld [vmem:[#allocation6 + $0x1c0] sm:$0xff]
    %v1062 = vld [vmem:[#allocation6 + $0x1c8] sm:$0xf]
    %v1063 = vld [vmem:[#allocation6 + $0x1cc] sm:$0xff]
    %v1064 = vld [vmem:[#allocation6 + $0x1d4] sm:$0xff]
    %v1065 = vld [vmem:[#allocation6 + $0x1dc] sm:$0xf]
    %v1066 = vld [vmem:[#allocation6 + $0x1e0] sm:$0xff]
    %v1067 = vld [vmem:[#allocation6 + $0x1e8] sm:$0xff]
    %v1068 = vld [vmem:[#allocation6 + $0x1f0] sm:$0xf]
    %v1069 = vld [vmem:[#allocation6 + $0x1f4] sm:$0xff]
    %v1070 = vld [vmem:[#allocation6 + $0x1fc] sm:$0xff]
    %v1071 = vld [vmem:[#allocation6 + $0x204] sm:$0xf]
    %v1072 = vld [vmem:[#allocation6 + $0x208] sm:$0xff]
    %v1073 = vld [vmem:[#allocation6 + $0x210] sm:$0xff]
    %v1074 = vld [vmem:[#allocation6 + $0x218] sm:$0xf]
    %v1075 = vld [vmem:[#allocation6 + $0x21c] sm:$0xff]
    %v1076 = vld [vmem:[#allocation6 + $0x224] sm:$0xff]
    %v1077 = vld [vmem:[#allocation6 + $0x22c] sm:$0xf]
    %v1078 = vld [vmem:[#allocation6 + $0x230] sm:$0xff]
    %v1079 = vld [vmem:[#allocation6 + $0x238] sm:$0xff]
    %v1080 = vld [vmem:[#allocation6 + $0x240] sm:$0xf]
    %v1081 = vld [vmem:[#allocation6 + $0x244] sm:$0xff]
    %v1082 = vld [vmem:[#allocation6 + $0x24c] sm:$0xff]
    %v1083 = vld [vmem:[#allocation6 + $0x254] sm:$0xf]
    %v1084 = vld [vmem:[#allocation6 + $0x258] sm:$0xff]
    %v1085 = vld [vmem:[#allocation6 + $0x260] sm:$0xff]
    %v1086 = vld [vmem:[#allocation6 + $0x268] sm:$0xf]
    %v1087 = vld [vmem:[#allocation6 + $0x26c] sm:$0xff]
    %v1088 = vld [vmem:[#allocation6 + $0x274] sm:$0xff]
    %v1089 = vld [vmem:[#allocation6 + $0x27c] sm:$0xf]
    %v1090 = vld [vmem:[#allocation6 + $0x280] sm:$0xff]
    %v1091 = vld [vmem:[#allocation6 + $0x288] sm:$0xff]
    %v1092 = vld [vmem:[#allocation6 + $0x290] sm:$0xf]
    %v1093 = vld [vmem:[#allocation6 + $0x294] sm:$0xff]
    %v1094 = vld [vmem:[#allocation6 + $0x29c] sm:$0xff]
    %v1095 = vld [vmem:[#allocation6 + $0x2a4] sm:$0xf]
    %v1096 = vld [vmem:[#allocation6 + $0x2a8] sm:$0xff]
    %v1097 = vld [vmem:[#allocation6 + $0x2b0] sm:$0xff]
    %v1098 = vld [vmem:[#allocation6 + $0x2b8] sm:$0xf]
    %v1099 = vld [vmem:[#allocation6 + $0x2bc] sm:$0xff]
    %v1100 = vld [vmem:[#allocation6 + $0x2c4] sm:$0xff]
    %v1101 = vld [vmem:[#allocation6 + $0x2cc] sm:$0xf]
    %v1102 = vld [vmem:[#allocation6 + $0x2d0] sm:$0xff]
    %v1103 = vld [vmem:[#allocation6 + $0x2d8] sm:$0xff]
    %v1104 = vld [vmem:[#allocation6 + $0x2e0] sm:$0xf]
    %v1105 = vld [vmem:[#allocation6 + $0x2e4] sm:$0xff]
    %v1106 = vld [vmem:[#allocation6 + $0x2ec] sm:$0xff]
    %v1107 = vld [vmem:[#allocation6 + $0x2f4] sm:$0xf]
    %v1108 = vld [vmem:[#allocation6 + $0x2f8] sm:$0xff]
    %v1109 = vld [vmem:[#allocation6 + $0x300] sm:$0xff]
    %v1110 = vld [vmem:[#allocation6 + $0x308] sm:$0xf]
    %v1111 = vld [vmem:[#allocation6 + $0x30c] sm:$0xff]
    %v1112 = vld [vmem:[#allocation6 + $0x314] sm:$0xff]
    %v1113 = vld [vmem:[#allocation6 + $0x31c] sm:$0xf]
    %v1114 = vld [vmem:[#allocation6 + $0x320] sm:$0xff]
    %v1115 = vld [vmem:[#allocation6 + $0x328] sm:$0xff]
    %v1116 = vld [vmem:[#allocation6 + $0x330] sm:$0xf]
    %v1117 = vld [vmem:[#allocation6 + $0x334] sm:$0xff]
    %v1118 = vld [vmem:[#allocation6 + $0x33c] sm:$0xff]
    %v1119 = vld [vmem:[#allocation6 + $0x344] sm:$0xf]
    %v1120 = vld [vmem:[#allocation6 + $0x348] sm:$0xff]
    %v1121 = vld [vmem:[#allocation6 + $0x350] sm:$0xff]
    %v1122 = vld [vmem:[#allocation6 + $0x358] sm:$0xf]
    %v1123 = vld [vmem:[#allocation6 + $0x35c] sm:$0xff]
    %v1124 = vld [vmem:[#allocation6 + $0x364] sm:$0xff]
    %v1125 = vld [vmem:[#allocation6 + $0x36c] sm:$0xf]
    %v1126 = vld [vmem:[#allocation6 + $0x370] sm:$0xff]
    %v1127 = vld [vmem:[#allocation6 + $0x378] sm:$0xff]
    %v1128 = vld [vmem:[#allocation6 + $0x380] sm:$0xf]
    %v1129 = vld [vmem:[#allocation6 + $0x384] sm:$0xff]
    %v1130 = vld [vmem:[#allocation6 + $0x38c] sm:$0xff]
    %v1131 = vld [vmem:[#allocation6 + $0x394] sm:$0xf]
    %v1132 = vld [vmem:[#allocation6 + $0x398] sm:$0xff]
    %v1133 = vld [vmem:[#allocation6 + $0x3a0] sm:$0xff]
    %v1134 = vld [vmem:[#allocation6 + $0x3a8] sm:$0xf]
    %v1135 = vld [vmem:[#allocation6 + $0x3ac] sm:$0xff]
    %v1136 = vld [vmem:[#allocation6 + $0x3b4] sm:$0xff]
    %v1137 = vld [vmem:[#allocation6 + $0x3bc] sm:$0xf]
    %v1138 = vld [vmem:[#allocation6 + $0x3c0] sm:$0xff]
    %v1139 = vld [vmem:[#allocation6 + $0x3c8] sm:$0xff]
    %v1140 = vld [vmem:[#allocation6 + $0x3d0] sm:$0xf]
    %v1141 = vld [vmem:[#allocation6 + $0x3d4] sm:$0xff]
    %v1142 = vld [vmem:[#allocation6 + $0x3dc] sm:$0xff]
    %v1143 = vld [vmem:[#allocation6 + $0x3e4] sm:$0xf]
    %v1144 = vld [vmem:[#allocation6 + $0x3e8] sm:$0xff]
    %v1145 = vld [vmem:[#allocation6 + $0x3f0] sm:$0xff]
    %v1146 = vld [vmem:[#allocation6 + $0x3f8] sm:$0xf]
    %v1147 = vld [vmem:[#allocation6 + $0x3fc] sm:$0xff]
    %v1148 = vld [vmem:[#allocation6 + $0x404] sm:$0xff]
    %v1149 = vld [vmem:[#allocation6 + $0x40c] sm:$0xf]
    %v1150 = vld [vmem:[#allocation6 + $0x410] sm:$0xff]
    %v1151 = vld [vmem:[#allocation6 + $0x418] sm:$0xff]
    %v1152 = vld [vmem:[#allocation6 + $0x420] sm:$0xf]
    %v1153 = vld [vmem:[#allocation6 + $0x424] sm:$0xff]
    %v1154 = vld [vmem:[#allocation6 + $0x42c] sm:$0xff]
    %v1155 = vld [vmem:[#allocation6 + $0x434] sm:$0xf]
    %v1156 = vld [vmem:[#allocation6 + $0x438] sm:$0xff]
    %v1157 = vld [vmem:[#allocation6 + $0x440] sm:$0xff]
    %v1158 = vld [vmem:[#allocation6 + $0x448] sm:$0xf]
    %v1159 = vld [vmem:[#allocation6 + $0x44c] sm:$0xff]
    %v1160 = vld [vmem:[#allocation6 + $0x454] sm:$0xff]
    %v1161 = vld [vmem:[#allocation6 + $0x45c] sm:$0xf]
    %v1162 = vld [vmem:[#allocation6 + $0x460] sm:$0xff]
    %v1163 = vld [vmem:[#allocation6 + $0x468] sm:$0xff]
    %v1164 = vld [vmem:[#allocation6 + $0x470] sm:$0xf]
    %v1165 = vld [vmem:[#allocation6 + $0x474] sm:$0xff]
    %v1166 = vld [vmem:[#allocation6 + $0x47c] sm:$0xff]
    %v1167 = vld [vmem:[#allocation6 + $0x484] sm:$0xf]
    %v1168 = vld [vmem:[#allocation6 + $0x488] sm:$0xff]
    %v1169 = vld [vmem:[#allocation6 + $0x490] sm:$0xff]
    %v1170 = vld [vmem:[#allocation6 + $0x498] sm:$0xf]
    %v1171 = vld [vmem:[#allocation6 + $0x49c] sm:$0xff]
    %v1172 = vld [vmem:[#allocation6 + $0x4a4] sm:$0xff]
    %v1173 = vld [vmem:[#allocation6 + $0x4ac] sm:$0xf]
    %v1174 = vld [vmem:[#allocation6 + $0x4b0] sm:$0xff]
    %v1175 = vld [vmem:[#allocation6 + $0x4b8] sm:$0xff]
    %v1176 = vld [vmem:[#allocation6 + $0x4c0] sm:$0xf]
    %v1177 = vld [vmem:[#allocation6 + $0x4c4] sm:$0xff]
    %v1178 = vld [vmem:[#allocation6 + $0x4cc] sm:$0xff]
    %v1179 = vld [vmem:[#allocation6 + $0x4d4] sm:$0xf]
    %v1180 = vld [vmem:[#allocation6 + $0x4d8] sm:$0xff]
    %v1181 = vld [vmem:[#allocation6 + $0x4e0] sm:$0xff]
    %v1182 = vld [vmem:[#allocation6 + $0x4e8] sm:$0xf]
    %v1183 = vld [vmem:[#allocation6 + $0x4ec] sm:$0xff]
    %v1184 = vld [vmem:[#allocation6 + $0x4f4] sm:$0xff]
    %v1185 = vld [vmem:[#allocation6 + $0x4fc] sm:$0xf]
    %v1186 = vld [vmem:[#allocation6 + $0x500] sm:$0xff]
    %v1187 = vld [vmem:[#allocation6 + $0x508] sm:$0xff]
    %v1188 = vld [vmem:[#allocation6 + $0x510] sm:$0xf]
    %v1189 = vld [vmem:[#allocation6 + $0x514] sm:$0xff]
    %v1190 = vld [vmem:[#allocation6 + $0x51c] sm:$0xff]
    %v1191 = vld [vmem:[#allocation6 + $0x524] sm:$0xf]
    %v1192 = vld [vmem:[#allocation6 + $0x528] sm:$0xff]
    %v1193 = vld [vmem:[#allocation6 + $0x530] sm:$0xff]
    %v1194 = vld [vmem:[#allocation6 + $0x538] sm:$0xf]
    %v1195 = vld [vmem:[#allocation6 + $0x53c] sm:$0xff]
    %v1196 = vld [vmem:[#allocation6 + $0x544] sm:$0xff]
    %v1197 = vld [vmem:[#allocation6 + $0x54c] sm:$0xf]
    %v1198 = vld [vmem:[#allocation6 + $0x550] sm:$0xff]
    %v1199 = vld [vmem:[#allocation6 + $0x558] sm:$0xff]
    %v1200 = vld [vmem:[#allocation6 + $0x560] sm:$0xf]
    %v1201 = vld [vmem:[#allocation6 + $0x564] sm:$0xff]
    %v1202 = vld [vmem:[#allocation6 + $0x56c] sm:$0xff]
    %v1203 = vld [vmem:[#allocation6 + $0x574] sm:$0xf]
    %v1204 = vld [vmem:[#allocation6 + $0x578] sm:$0xff]
    %v1205 = vld [vmem:[#allocation6 + $0x580] sm:$0xff]
    %v1206 = vld [vmem:[#allocation6 + $0x588] sm:$0xf]
    %v1207 = vld [vmem:[#allocation6 + $0x58c] sm:$0xff]
    %v1208 = vld [vmem:[#allocation6 + $0x594] sm:$0xff]
    %v1209 = vld [vmem:[#allocation6 + $0x59c] sm:$0xf]
    %v1210 = vld [vmem:[#allocation6 + $0x5a0] sm:$0xff]
    %v1211 = vld [vmem:[#allocation6 + $0x5a8] sm:$0xff]
    %v1212 = vld [vmem:[#allocation6 + $0x5b0] sm:$0xf]
    %v1213 = vld [vmem:[#allocation6 + $0x5b4] sm:$0xff]
    %v1214 = vld [vmem:[#allocation6 + $0x5bc] sm:$0xff]
    %v1215 = vld [vmem:[#allocation6 + $0x5c4] sm:$0xf]
    %v1216 = vld [vmem:[#allocation6 + $0x5c8] sm:$0xff]
    %v1217 = vld [vmem:[#allocation6 + $0x5d0] sm:$0xff]
    %v1218 = vld [vmem:[#allocation6 + $0x5d8] sm:$0xf]
    %v1219 = vld [vmem:[#allocation6 + $0x5dc] sm:$0xff]
    %v1220 = vld [vmem:[#allocation6 + $0x5e4] sm:$0xff]
    %v1221 = vld [vmem:[#allocation6 + $0x5ec] sm:$0xf]
    %v1222 = vld [vmem:[#allocation6 + $0x5f0] sm:$0xff]
    %v1223 = vld [vmem:[#allocation6 + $0x5f8] sm:$0xff]
    %v1224 = vld [vmem:[#allocation6 + $0x600] sm:$0xf]
    %v1225 = vld [vmem:[#allocation6 + $0x604] sm:$0xff]
    %v1226 = vld [vmem:[#allocation6 + $0x60c] sm:$0xff]
    %v1227 = vld [vmem:[#allocation6 + $0x614] sm:$0xf]
    %v1228 = vld [vmem:[#allocation6 + $0x618] sm:$0xff]
    %v1229 = vld [vmem:[#allocation6 + $0x620] sm:$0xff]
    %v1230 = vld [vmem:[#allocation6 + $0x628] sm:$0xf]
    %v1231 = vld [vmem:[#allocation6 + $0x62c] sm:$0xff]
    %v1232 = vld [vmem:[#allocation6 + $0x634] sm:$0xff]
    %v1233 = vld [vmem:[#allocation6 + $0x63c] sm:$0xf]
    %v1234 = vld [vmem:[%s9] sm:$0x1f]
    %v1236 = vlaneseq
    %v1237 = vshrl.u32 %v1236, 7
    %v1238 = vsub.s32 0, %v1237
    %v1239 = vrot.slane %v1234, %v1238
    %v1240 = vlaneseq
    %v1241 = vshrl.u32 %v1240, 7
    %v1242 = vsub.s32 1, %v1241
    %v1243 = vrot.slane %v1234, %v1242
    %v1244 = vlaneseq
    %v1245 = vshrl.u32 %v1244, 7
    %v1246 = vsub.s32 2, %v1245
    %v1247 = vrot.slane %v1234, %v1246
    %v1248 = vlaneseq
    %v1249 = vshrl.u32 %v1248, 7
    %v1250 = vsub.s32 3, %v1249
    %v1251 = vrot.slane %v1234, %v1250
    %v1252 = vlaneseq
    %v1253 = vshrl.u32 %v1252, 7
    %v1254 = vsub.s32 4, %v1253
    %v1255 = vrot.slane %v1234, %v1254
    %v1501 = vunpack.c.l.b16 %v994
    %v1502 = vunpack.c.h.b16 %v994
    %v1503 = vunpack.c.l.b16 %v995
    %v1504 = vunpack.c.h.b16 %v995
    %v1505 = vunpack.c.l.b16 %v996
    %v1506 = vunpack.c.l.b16 %v997
    %v1507 = vunpack.c.h.b16 %v997
    %v1508 = vunpack.c.l.b16 %v998
    %v1509 = vunpack.c.h.b16 %v998
    %v1510 = vunpack.c.l.b16 %v999
    %v1511 = vunpack.c.l.b16 %v1000
    %v1512 = vunpack.c.h.b16 %v1000
    %v1513 = vunpack.c.l.b16 %v1001
    %v1514 = vunpack.c.h.b16 %v1001
    %v1515 = vunpack.c.l.b16 %v1002
    %v1516 = vunpack.c.l.b16 %v1003
    %v1517 = vunpack.c.h.b16 %v1003
    %v1518 = vunpack.c.l.b16 %v1004
    %v1519 = vunpack.c.h.b16 %v1004
    %v1520 = vunpack.c.l.b16 %v1005
    %v1521 = vunpack.c.l.b16 %v1006
    %v1522 = vunpack.c.h.b16 %v1006
    %v1523 = vunpack.c.l.b16 %v1007
    %v1524 = vunpack.c.h.b16 %v1007
    %v1525 = vunpack.c.l.b16 %v1008
    %v1526 = vunpack.c.l.b16 %v1009
    %v1527 = vunpack.c.h.b16 %v1009
    %v1528 = vunpack.c.l.b16 %v1010
    %v1529 = vunpack.c.h.b16 %v1010
    %v1530 = vunpack.c.l.b16 %v1011
    %v1531 = vunpack.c.l.b16 %v1012
    %v1532 = vunpack.c.h.b16 %v1012
    %v1533 = vunpack.c.l.b16 %v1013
    %v1534 = vunpack.c.h.b16 %v1013
    %v1535 = vunpack.c.l.b16 %v1014
    %v1536 = vunpack.c.l.b16 %v1015
    %v1537 = vunpack.c.h.b16 %v1015
    %v1538 = vunpack.c.l.b16 %v1016
    %v1539 = vunpack.c.h.b16 %v1016
    %v1540 = vunpack.c.l.b16 %v1017
    %v1541 = vunpack.c.l.b16 %v1018
    %v1542 = vunpack.c.h.b16 %v1018
    %v1543 = vunpack.c.l.b16 %v1019
    %v1544 = vunpack.c.h.b16 %v1019
    %v1545 = vunpack.c.l.b16 %v1020
    %v1546 = vunpack.c.l.b16 %v1021
    %v1547 = vunpack.c.h.b16 %v1021
    %v1548 = vunpack.c.l.b16 %v1022
    %v1549 = vunpack.c.h.b16 %v1022
    %v1550 = vunpack.c.l.b16 %v1023
    %v1551 = vunpack.c.l.b16 %v1024
    %v1552 = vunpack.c.h.b16 %v1024
    %v1553 = vunpack.c.l.b16 %v1025
    %v1554 = vunpack.c.h.b16 %v1025
    %v1555 = vunpack.c.l.b16 %v1026
    %v1556 = vunpack.c.l.b16 %v1027
    %v1557 = vunpack.c.h.b16 %v1027
    %v1558 = vunpack.c.l.b16 %v1028
    %v1559 = vunpack.c.h.b16 %v1028
    %v1560 = vunpack.c.l.b16 %v1029
    %v1561 = vunpack.c.l.b16 %v1030
    %v1562 = vunpack.c.h.b16 %v1030
    %v1563 = vunpack.c.l.b16 %v1031
    %v1564 = vunpack.c.h.b16 %v1031
    %v1565 = vunpack.c.l.b16 %v1032
    %v1566 = vunpack.c.l.b16 %v1033
    %v1567 = vunpack.c.h.b16 %v1033
    %v1568 = vunpack.c.l.b16 %v1034
    %v1569 = vunpack.c.h.b16 %v1034
    %v1570 = vunpack.c.l.b16 %v1035
    %v1571 = vunpack.c.l.b16 %v1036
    %v1572 = vunpack.c.h.b16 %v1036
    %v1573 = vunpack.c.l.b16 %v1037
    %v1574 = vunpack.c.h.b16 %v1037
    %v1575 = vunpack.c.l.b16 %v1038
    %v1576 = vunpack.c.l.b16 %v1039
    %v1577 = vunpack.c.h.b16 %v1039
    %v1578 = vunpack.c.l.b16 %v1040
    %v1579 = vunpack.c.h.b16 %v1040
    %v1580 = vunpack.c.l.b16 %v1041
    %v1581 = vunpack.c.l.b16 %v1042
    %v1582 = vunpack.c.h.b16 %v1042
    %v1583 = vunpack.c.l.b16 %v1043
    %v1584 = vunpack.c.h.b16 %v1043
    %v1585 = vunpack.c.l.b16 %v1044
    %v1586 = vunpack.c.l.b16 %v1045
    %v1587 = vunpack.c.h.b16 %v1045
    %v1588 = vunpack.c.l.b16 %v1046
    %v1589 = vunpack.c.h.b16 %v1046
    %v1590 = vunpack.c.l.b16 %v1047
    %v1591 = vunpack.c.l.b16 %v1048
    %v1592 = vunpack.c.h.b16 %v1048
    %v1593 = vunpack.c.l.b16 %v1049
    %v1594 = vunpack.c.h.b16 %v1049
    %v1595 = vunpack.c.l.b16 %v1050
    %v1596 = vunpack.c.l.b16 %v1051
    %v1597 = vunpack.c.h.b16 %v1051
    %v1598 = vunpack.c.l.b16 %v1052
    %v1599 = vunpack.c.h.b16 %v1052
    %v1600 = vunpack.c.l.b16 %v1053
    %v1601 = vunpack.c.l.b16 %v1054
    %v1602 = vunpack.c.h.b16 %v1054
    %v1603 = vunpack.c.l.b16 %v1055
    %v1604 = vunpack.c.h.b16 %v1055
    %v1605 = vunpack.c.l.b16 %v1056
    %v1606 = vunpack.c.l.b16 %v1057
    %v1607 = vunpack.c.h.b16 %v1057
    %v1608 = vunpack.c.l.b16 %v1058
    %v1609 = vunpack.c.h.b16 %v1058
    %v1610 = vunpack.c.l.b16 %v1059
    %v1611 = vunpack.c.l.b16 %v1060
    %v1612 = vunpack.c.h.b16 %v1060
    %v1613 = vunpack.c.l.b16 %v1061
    %v1614 = vunpack.c.h.b16 %v1061
    %v1615 = vunpack.c.l.b16 %v1062
    %v1616 = vunpack.c.l.b16 %v1063
    %v1617 = vunpack.c.h.b16 %v1063
    %v1618 = vunpack.c.l.b16 %v1064
    %v1619 = vunpack.c.h.b16 %v1064
    %v1620 = vunpack.c.l.b16 %v1065
    %v1621 = vunpack.c.l.b16 %v1066
    %v1622 = vunpack.c.h.b16 %v1066
    %v1623 = vunpack.c.l.b16 %v1067
    %v1624 = vunpack.c.h.b16 %v1067
    %v1625 = vunpack.c.l.b16 %v1068
    %v1626 = vunpack.c.l.b16 %v1069
    %v1627 = vunpack.c.h.b16 %v1069
    %v1628 = vunpack.c.l.b16 %v1070
    %v1629 = vunpack.c.h.b16 %v1070
    %v1630 = vunpack.c.l.b16 %v1071
    %v1631 = vunpack.c.l.b16 %v1072
    %v1632 = vunpack.c.h.b16 %v1072
    %v1633 = vunpack.c.l.b16 %v1073
    %v1634 = vunpack.c.h.b16 %v1073
    %v1635 = vunpack.c.l.b16 %v1074
    %v1636 = vunpack.c.l.b16 %v1075
    %v1637 = vunpack.c.h.b16 %v1075
    %v1638 = vunpack.c.l.b16 %v1076
    %v1639 = vunpack.c.h.b16 %v1076
    %v1640 = vunpack.c.l.b16 %v1077
    %v1641 = vunpack.c.l.b16 %v1078
    %v1642 = vunpack.c.h.b16 %v1078
    %v1643 = vunpack.c.l.b16 %v1079
    %v1644 = vunpack.c.h.b16 %v1079
    %v1645 = vunpack.c.l.b16 %v1080
    %v1646 = vunpack.c.l.b16 %v1081
    %v1647 = vunpack.c.h.b16 %v1081
    %v1648 = vunpack.c.l.b16 %v1082
    %v1649 = vunpack.c.h.b16 %v1082
    %v1650 = vunpack.c.l.b16 %v1083
    %v1651 = vunpack.c.l.b16 %v1084
    %v1652 = vunpack.c.h.b16 %v1084
    %v1653 = vunpack.c.l.b16 %v1085
    %v1654 = vunpack.c.h.b16 %v1085
    %v1655 = vunpack.c.l.b16 %v1086
    %v1656 = vunpack.c.l.b16 %v1087
    %v1657 = vunpack.c.h.b16 %v1087
    %v1658 = vunpack.c.l.b16 %v1088
    %v1659 = vunpack.c.h.b16 %v1088
    %v1660 = vunpack.c.l.b16 %v1089
    %v1661 = vunpack.c.l.b16 %v1090
    %v1662 = vunpack.c.h.b16 %v1090
    %v1663 = vunpack.c.l.b16 %v1091
    %v1664 = vunpack.c.h.b16 %v1091
    %v1665 = vunpack.c.l.b16 %v1092
    %v1666 = vunpack.c.l.b16 %v1093
    %v1667 = vunpack.c.h.b16 %v1093
    %v1668 = vunpack.c.l.b16 %v1094
    %v1669 = vunpack.c.h.b16 %v1094
    %v1670 = vunpack.c.l.b16 %v1095
    %v1671 = vunpack.c.l.b16 %v1096
    %v1672 = vunpack.c.h.b16 %v1096
    %v1673 = vunpack.c.l.b16 %v1097
    %v1674 = vunpack.c.h.b16 %v1097
    %v1675 = vunpack.c.l.b16 %v1098
    %v1676 = vunpack.c.l.b16 %v1099
    %v1677 = vunpack.c.h.b16 %v1099
    %v1678 = vunpack.c.l.b16 %v1100
    %v1679 = vunpack.c.h.b16 %v1100
    %v1680 = vunpack.c.l.b16 %v1101
    %v1681 = vunpack.c.l.b16 %v1102
    %v1682 = vunpack.c.h.b16 %v1102
    %v1683 = vunpack.c.l.b16 %v1103
    %v1684 = vunpack.c.h.b16 %v1103
    %v1685 = vunpack.c.l.b16 %v1104
    %v1686 = vunpack.c.l.b16 %v1105
    %v1687 = vunpack.c.h.b16 %v1105
    %v1688 = vunpack.c.l.b16 %v1106
    %v1689 = vunpack.c.h.b16 %v1106
    %v1690 = vunpack.c.l.b16 %v1107
    %v1691 = vunpack.c.l.b16 %v1108
    %v1692 = vunpack.c.h.b16 %v1108
    %v1693 = vunpack.c.l.b16 %v1109
    %v1694 = vunpack.c.h.b16 %v1109
    %v1695 = vunpack.c.l.b16 %v1110
    %v1696 = vunpack.c.l.b16 %v1111
    %v1697 = vunpack.c.h.b16 %v1111
    %v1698 = vunpack.c.l.b16 %v1112
    %v1699 = vunpack.c.h.b16 %v1112
    %v1700 = vunpack.c.l.b16 %v1113
    %v1701 = vunpack.c.l.b16 %v1114
    %v1702 = vunpack.c.h.b16 %v1114
    %v1703 = vunpack.c.l.b16 %v1115
    %v1704 = vunpack.c.h.b16 %v1115
    %v1705 = vunpack.c.l.b16 %v1116
    %v1706 = vunpack.c.l.b16 %v1117
    %v1707 = vunpack.c.h.b16 %v1117
    %v1708 = vunpack.c.l.b16 %v1118
    %v1709 = vunpack.c.h.b16 %v1118
    %v1710 = vunpack.c.l.b16 %v1119
    %v1711 = vunpack.c.l.b16 %v1120
    %v1712 = vunpack.c.h.b16 %v1120
    %v1713 = vunpack.c.l.b16 %v1121
    %v1714 = vunpack.c.h.b16 %v1121
    %v1715 = vunpack.c.l.b16 %v1122
    %v1716 = vunpack.c.l.b16 %v1123
    %v1717 = vunpack.c.h.b16 %v1123
    %v1718 = vunpack.c.l.b16 %v1124
    %v1719 = vunpack.c.h.b16 %v1124
    %v1720 = vunpack.c.l.b16 %v1125
    %v1721 = vunpack.c.l.b16 %v1126
    %v1722 = vunpack.c.h.b16 %v1126
    %v1723 = vunpack.c.l.b16 %v1127
    %v1724 = vunpack.c.h.b16 %v1127
    %v1725 = vunpack.c.l.b16 %v1128
    %v1726 = vunpack.c.l.b16 %v1129
    %v1727 = vunpack.c.h.b16 %v1129
    %v1728 = vunpack.c.l.b16 %v1130
    %v1729 = vunpack.c.h.b16 %v1130
    %v1730 = vunpack.c.l.b16 %v1131
    %v1731 = vunpack.c.l.b16 %v1132
    %v1732 = vunpack.c.h.b16 %v1132
    %v1733 = vunpack.c.l.b16 %v1133
    %v1734 = vunpack.c.h.b16 %v1133
    %v1735 = vunpack.c.l.b16 %v1134
    %v1736 = vunpack.c.l.b16 %v1135
    %v1737 = vunpack.c.h.b16 %v1135
    %v1738 = vunpack.c.l.b16 %v1136
    %v1739 = vunpack.c.h.b16 %v1136
    %v1740 = vunpack.c.l.b16 %v1137
    %v1741 = vunpack.c.l.b16 %v1138
    %v1742 = vunpack.c.h.b16 %v1138
    %v1743 = vunpack.c.l.b16 %v1139
    %v1744 = vunpack.c.h.b16 %v1139
    %v1745 = vunpack.c.l.b16 %v1140
    %v1746 = vunpack.c.l.b16 %v1141
    %v1747 = vunpack.c.h.b16 %v1141
    %v1748 = vunpack.c.l.b16 %v1142
    %v1749 = vunpack.c.h.b16 %v1142
    %v1750 = vunpack.c.l.b16 %v1143
    %v1751 = vunpack.c.l.b16 %v1144
    %v1752 = vunpack.c.h.b16 %v1144
    %v1753 = vunpack.c.l.b16 %v1145
    %v1754 = vunpack.c.h.b16 %v1145
    %v1755 = vunpack.c.l.b16 %v1146
    %v1756 = vunpack.c.l.b16 %v1147
    %v1757 = vunpack.c.h.b16 %v1147
    %v1758 = vunpack.c.l.b16 %v1148
    %v1759 = vunpack.c.h.b16 %v1148
    %v1760 = vunpack.c.l.b16 %v1149
    %v1761 = vunpack.c.l.b16 %v1150
    %v1762 = vunpack.c.h.b16 %v1150
    %v1763 = vunpack.c.l.b16 %v1151
    %v1764 = vunpack.c.h.b16 %v1151
    %v1765 = vunpack.c.l.b16 %v1152
    %v1766 = vunpack.c.l.b16 %v1153
    %v1767 = vunpack.c.h.b16 %v1153
    %v1768 = vunpack.c.l.b16 %v1154
    %v1769 = vunpack.c.h.b16 %v1154
    %v1770 = vunpack.c.l.b16 %v1155
    %v1771 = vunpack.c.l.b16 %v1156
    %v1772 = vunpack.c.h.b16 %v1156
    %v1773 = vunpack.c.l.b16 %v1157
    %v1774 = vunpack.c.h.b16 %v1157
    %v1775 = vunpack.c.l.b16 %v1158
    %v1776 = vunpack.c.l.b16 %v1159
    %v1777 = vunpack.c.h.b16 %v1159
    %v1778 = vunpack.c.l.b16 %v1160
    %v1779 = vunpack.c.h.b16 %v1160
    %v1780 = vunpack.c.l.b16 %v1161
    %v1781 = vunpack.c.l.b16 %v1162
    %v1782 = vunpack.c.h.b16 %v1162
    %v1783 = vunpack.c.l.b16 %v1163
    %v1784 = vunpack.c.h.b16 %v1163
    %v1785 = vunpack.c.l.b16 %v1164
    %v1786 = vunpack.c.l.b16 %v1165
    %v1787 = vunpack.c.h.b16 %v1165
    %v1788 = vunpack.c.l.b16 %v1166
    %v1789 = vunpack.c.h.b16 %v1166
    %v1790 = vunpack.c.l.b16 %v1167
    %v1791 = vunpack.c.l.b16 %v1168
    %v1792 = vunpack.c.h.b16 %v1168
    %v1793 = vunpack.c.l.b16 %v1169
    %v1794 = vunpack.c.h.b16 %v1169
    %v1795 = vunpack.c.l.b16 %v1170
    %v1796 = vunpack.c.l.b16 %v1171
    %v1797 = vunpack.c.h.b16 %v1171
    %v1798 = vunpack.c.l.b16 %v1172
    %v1799 = vunpack.c.h.b16 %v1172
    %v1800 = vunpack.c.l.b16 %v1173
    %v1801 = vunpack.c.l.b16 %v1174
    %v1802 = vunpack.c.h.b16 %v1174
    %v1803 = vunpack.c.l.b16 %v1175
    %v1804 = vunpack.c.h.b16 %v1175
    %v1805 = vunpack.c.l.b16 %v1176
    %v1806 = vunpack.c.l.b16 %v1177
    %v1807 = vunpack.c.h.b16 %v1177
    %v1808 = vunpack.c.l.b16 %v1178
    %v1809 = vunpack.c.h.b16 %v1178
    %v1810 = vunpack.c.l.b16 %v1179
    %v1811 = vunpack.c.l.b16 %v1180
    %v1812 = vunpack.c.h.b16 %v1180
    %v1813 = vunpack.c.l.b16 %v1181
    %v1814 = vunpack.c.h.b16 %v1181
    %v1815 = vunpack.c.l.b16 %v1182
    %v1816 = vunpack.c.l.b16 %v1183
    %v1817 = vunpack.c.h.b16 %v1183
    %v1818 = vunpack.c.l.b16 %v1184
    %v1819 = vunpack.c.h.b16 %v1184
    %v1820 = vunpack.c.l.b16 %v1185
    %v1821 = vunpack.c.l.b16 %v1186
    %v1822 = vunpack.c.h.b16 %v1186
    %v1823 = vunpack.c.l.b16 %v1187
    %v1824 = vunpack.c.h.b16 %v1187
    %v1825 = vunpack.c.l.b16 %v1188
    %v1826 = vunpack.c.l.b16 %v1189
    %v1827 = vunpack.c.h.b16 %v1189
    %v1828 = vunpack.c.l.b16 %v1190
    %v1829 = vunpack.c.h.b16 %v1190
    %v1830 = vunpack.c.l.b16 %v1191
    %v1831 = vunpack.c.l.b16 %v1192
    %v1832 = vunpack.c.h.b16 %v1192
    %v1833 = vunpack.c.l.b16 %v1193
    %v1834 = vunpack.c.h.b16 %v1193
    %v1835 = vunpack.c.l.b16 %v1194
    %v1836 = vunpack.c.l.b16 %v1195
    %v1837 = vunpack.c.h.b16 %v1195
    %v1838 = vunpack.c.l.b16 %v1196
    %v1839 = vunpack.c.h.b16 %v1196
    %v1840 = vunpack.c.l.b16 %v1197
    %v1841 = vunpack.c.l.b16 %v1198
    %v1842 = vunpack.c.h.b16 %v1198
    %v1843 = vunpack.c.l.b16 %v1199
    %v1844 = vunpack.c.h.b16 %v1199
    %v1845 = vunpack.c.l.b16 %v1200
    %v1846 = vunpack.c.l.b16 %v1201
    %v1847 = vunpack.c.h.b16 %v1201
    %v1848 = vunpack.c.l.b16 %v1202
    %v1849 = vunpack.c.h.b16 %v1202
    %v1850 = vunpack.c.l.b16 %v1203
    %v1851 = vunpack.c.l.b16 %v1204
    %v1852 = vunpack.c.h.b16 %v1204
    %v1853 = vunpack.c.l.b16 %v1205
    %v1854 = vunpack.c.h.b16 %v1205
    %v1855 = vunpack.c.l.b16 %v1206
    %v1856 = vunpack.c.l.b16 %v1207
    %v1857 = vunpack.c.h.b16 %v1207
    %v1858 = vunpack.c.l.b16 %v1208
    %v1859 = vunpack.c.h.b16 %v1208
    %v1860 = vunpack.c.l.b16 %v1209
    %v1861 = vunpack.c.l.b16 %v1210
    %v1862 = vunpack.c.h.b16 %v1210
    %v1863 = vunpack.c.l.b16 %v1211
    %v1864 = vunpack.c.h.b16 %v1211
    %v1865 = vunpack.c.l.b16 %v1212
    %v1866 = vunpack.c.l.b16 %v1213
    %v1867 = vunpack.c.h.b16 %v1213
    %v1868 = vunpack.c.l.b16 %v1214
    %v1869 = vunpack.c.h.b16 %v1214
    %v1870 = vunpack.c.l.b16 %v1215
    %v1871 = vunpack.c.l.b16 %v1216
    %v1872 = vunpack.c.h.b16 %v1216
    %v1873 = vunpack.c.l.b16 %v1217
    %v1874 = vunpack.c.h.b16 %v1217
    %v1875 = vunpack.c.l.b16 %v1218
    %v1876 = vunpack.c.l.b16 %v1219
    %v1877 = vunpack.c.h.b16 %v1219
    %v1878 = vunpack.c.l.b16 %v1220
    %v1879 = vunpack.c.h.b16 %v1220
    %v1880 = vunpack.c.l.b16 %v1221
    %v1881 = vunpack.c.l.b16 %v1222
    %v1882 = vunpack.c.h.b16 %v1222
    %v1883 = vunpack.c.l.b16 %v1223
    %v1884 = vunpack.c.h.b16 %v1223
    %v1885 = vunpack.c.l.b16 %v1224
    %v1886 = vunpack.c.l.b16 %v1225
    %v1887 = vunpack.c.h.b16 %v1225
    %v1888 = vunpack.c.l.b16 %v1226
    %v1889 = vunpack.c.h.b16 %v1226
    %v1890 = vunpack.c.l.b16 %v1227
    %v1891 = vunpack.c.l.b16 %v1228
    %v1892 = vunpack.c.h.b16 %v1228
    %v1893 = vunpack.c.l.b16 %v1229
    %v1894 = vunpack.c.h.b16 %v1229
    %v1895 = vunpack.c.l.b16 %v1230
    %v1896 = vunpack.c.l.b16 %v1231
    %v1897 = vunpack.c.h.b16 %v1231
    %v1898 = vunpack.c.l.b16 %v1232
    %v1899 = vunpack.c.h.b16 %v1232
    %v1900 = vunpack.c.l.b16 %v1233
    %v1901 = vpack.c.b16 %v1506, %v1501
    %v1902 = vpack.c.b16 %v1507, %v1502
    %v1903 = vpack.c.b16 %v1508, %v1503
    %v1904 = vpack.c.b16 %v1509, %v1504
    %v1905 = vpack.c.b16 %v1510, %v1505
    %v1906 = vpack.c.b16 %v1516, %v1511
    %v1907 = vpack.c.b16 %v1517, %v1512
    %v1908 = vpack.c.b16 %v1518, %v1513
    %v1909 = vpack.c.b16 %v1519, %v1514
    %v1910 = vpack.c.b16 %v1520, %v1515
    %v1911 = vpack.c.b16 %v1526, %v1521
    %v1912 = vpack.c.b16 %v1527, %v1522
    %v1913 = vpack.c.b16 %v1528, %v1523
    %v1914 = vpack.c.b16 %v1529, %v1524
    %v1915 = vpack.c.b16 %v1530, %v1525
    %v1916 = vpack.c.b16 %v1536, %v1531
    %v1917 = vpack.c.b16 %v1537, %v1532
    %v1918 = vpack.c.b16 %v1538, %v1533
    %v1919 = vpack.c.b16 %v1539, %v1534
    %v1920 = vpack.c.b16 %v1540, %v1535
    %v1921 = vpack.c.b16 %v1546, %v1541
    %v1922 = vpack.c.b16 %v1547, %v1542
    %v1923 = vpack.c.b16 %v1548, %v1543
    %v1924 = vpack.c.b16 %v1549, %v1544
    %v1925 = vpack.c.b16 %v1550, %v1545
    %v1926 = vpack.c.b16 %v1556, %v1551
    %v1927 = vpack.c.b16 %v1557, %v1552
    %v1928 = vpack.c.b16 %v1558, %v1553
    %v1929 = vpack.c.b16 %v1559, %v1554
    %v1930 = vpack.c.b16 %v1560, %v1555
    %v1931 = vpack.c.b16 %v1566, %v1561
    %v1932 = vpack.c.b16 %v1567, %v1562
    %v1933 = vpack.c.b16 %v1568, %v1563
    %v1934 = vpack.c.b16 %v1569, %v1564
    %v1935 = vpack.c.b16 %v1570, %v1565
    %v1936 = vpack.c.b16 %v1576, %v1571
    %v1937 = vpack.c.b16 %v1577, %v1572
    %v1938 = vpack.c.b16 %v1578, %v1573
    %v1939 = vpack.c.b16 %v1579, %v1574
    %v1940 = vpack.c.b16 %v1580, %v1575
    %v1941 = vpack.c.b16 %v1586, %v1581
    %v1942 = vpack.c.b16 %v1587, %v1582
    %v1943 = vpack.c.b16 %v1588, %v1583
    %v1944 = vpack.c.b16 %v1589, %v1584
    %v1945 = vpack.c.b16 %v1590, %v1585
    %v1946 = vpack.c.b16 %v1596, %v1591
    %v1947 = vpack.c.b16 %v1597, %v1592
    %v1948 = vpack.c.b16 %v1598, %v1593
    %v1949 = vpack.c.b16 %v1599, %v1594
    %v1950 = vpack.c.b16 %v1600, %v1595
    %v1951 = vpack.c.b16 %v1606, %v1601
    %v1952 = vpack.c.b16 %v1607, %v1602
    %v1953 = vpack.c.b16 %v1608, %v1603
    %v1954 = vpack.c.b16 %v1609, %v1604
    %v1955 = vpack.c.b16 %v1610, %v1605
    %v1956 = vpack.c.b16 %v1616, %v1611
    %v1957 = vpack.c.b16 %v1617, %v1612
    %v1958 = vpack.c.b16 %v1618, %v1613
    %v1959 = vpack.c.b16 %v1619, %v1614
    %v1960 = vpack.c.b16 %v1620, %v1615
    %v1961 = vpack.c.b16 %v1626, %v1621
    %v1962 = vpack.c.b16 %v1627, %v1622
    %v1963 = vpack.c.b16 %v1628, %v1623
    %v1964 = vpack.c.b16 %v1629, %v1624
    %v1965 = vpack.c.b16 %v1630, %v1625
    %v1966 = vpack.c.b16 %v1636, %v1631
    %v1967 = vpack.c.b16 %v1637, %v1632
    %v1968 = vpack.c.b16 %v1638, %v1633
    %v1969 = vpack.c.b16 %v1639, %v1634
    %v1970 = vpack.c.b16 %v1640, %v1635
    %v1971 = vpack.c.b16 %v1646, %v1641
    %v1972 = vpack.c.b16 %v1647, %v1642
    %v1973 = vpack.c.b16 %v1648, %v1643
    %v1974 = vpack.c.b16 %v1649, %v1644
    %v1975 = vpack.c.b16 %v1650, %v1645
    %v1976 = vpack.c.b16 %v1656, %v1651
    %v1977 = vpack.c.b16 %v1657, %v1652
    %v1978 = vpack.c.b16 %v1658, %v1653
    %v1979 = vpack.c.b16 %v1659, %v1654
    %v1980 = vpack.c.b16 %v1660, %v1655
    %v1981 = vpack.c.b16 %v1666, %v1661
    %v1982 = vpack.c.b16 %v1667, %v1662
    %v1983 = vpack.c.b16 %v1668, %v1663
    %v1984 = vpack.c.b16 %v1669, %v1664
    %v1985 = vpack.c.b16 %v1670, %v1665
    %v1986 = vpack.c.b16 %v1676, %v1671
    %v1987 = vpack.c.b16 %v1677, %v1672
    %v1988 = vpack.c.b16 %v1678, %v1673
    %v1989 = vpack.c.b16 %v1679, %v1674
    %v1990 = vpack.c.b16 %v1680, %v1675
    %v1991 = vpack.c.b16 %v1686, %v1681
    %v1992 = vpack.c.b16 %v1687, %v1682
    %v1993 = vpack.c.b16 %v1688, %v1683
    %v1994 = vpack.c.b16 %v1689, %v1684
    %v1995 = vpack.c.b16 %v1690, %v1685
    %v1996 = vpack.c.b16 %v1696, %v1691
    %v1997 = vpack.c.b16 %v1697, %v1692
    %v1998 = vpack.c.b16 %v1698, %v1693
    %v1999 = vpack.c.b16 %v1699, %v1694
    %v2000 = vpack.c.b16 %v1700, %v1695
    %v2001 = vpack.c.b16 %v1706, %v1701
    %v2002 = vpack.c.b16 %v1707, %v1702
    %v2003 = vpack.c.b16 %v1708, %v1703
    %v2004 = vpack.c.b16 %v1709, %v1704
    %v2005 = vpack.c.b16 %v1710, %v1705
    %v2006 = vpack.c.b16 %v1716, %v1711
    %v2007 = vpack.c.b16 %v1717, %v1712
    %v2008 = vpack.c.b16 %v1718, %v1713
    %v2009 = vpack.c.b16 %v1719, %v1714
    %v2010 = vpack.c.b16 %v1720, %v1715
    %v2011 = vpack.c.b16 %v1726, %v1721
    %v2012 = vpack.c.b16 %v1727, %v1722
    %v2013 = vpack.c.b16 %v1728, %v1723
    %v2014 = vpack.c.b16 %v1729, %v1724
    %v2015 = vpack.c.b16 %v1730, %v1725
    %v2016 = vpack.c.b16 %v1736, %v1731
    %v2017 = vpack.c.b16 %v1737, %v1732
    %v2018 = vpack.c.b16 %v1738, %v1733
    %v2019 = vpack.c.b16 %v1739, %v1734
    %v2020 = vpack.c.b16 %v1740, %v1735
    %v2021 = vpack.c.b16 %v1746, %v1741
    %v2022 = vpack.c.b16 %v1747, %v1742
    %v2023 = vpack.c.b16 %v1748, %v1743
    %v2024 = vpack.c.b16 %v1749, %v1744
    %v2025 = vpack.c.b16 %v1750, %v1745
    %v2026 = vpack.c.b16 %v1756, %v1751
    %v2027 = vpack.c.b16 %v1757, %v1752
    %v2028 = vpack.c.b16 %v1758, %v1753
    %v2029 = vpack.c.b16 %v1759, %v1754
    %v2030 = vpack.c.b16 %v1760, %v1755
    %v2031 = vpack.c.b16 %v1766, %v1761
    %v2032 = vpack.c.b16 %v1767, %v1762
    %v2033 = vpack.c.b16 %v1768, %v1763
    %v2034 = vpack.c.b16 %v1769, %v1764
    %v2035 = vpack.c.b16 %v1770, %v1765
    %v2036 = vpack.c.b16 %v1776, %v1771
    %v2037 = vpack.c.b16 %v1777, %v1772
    %v2038 = vpack.c.b16 %v1778, %v1773
    %v2039 = vpack.c.b16 %v1779, %v1774
    %v2040 = vpack.c.b16 %v1780, %v1775
    %v2041 = vpack.c.b16 %v1786, %v1781
    %v2042 = vpack.c.b16 %v1787, %v1782
    %v2043 = vpack.c.b16 %v1788, %v1783
    %v2044 = vpack.c.b16 %v1789, %v1784
    %v2045 = vpack.c.b16 %v1790, %v1785
    %v2046 = vpack.c.b16 %v1796, %v1791
    %v2047 = vpack.c.b16 %v1797, %v1792
    %v2048 = vpack.c.b16 %v1798, %v1793
    %v2049 = vpack.c.b16 %v1799, %v1794
    %v2050 = vpack.c.b16 %v1800, %v1795
    %v2051 = vpack.c.b16 %v1806, %v1801
    %v2052 = vpack.c.b16 %v1807, %v1802
    %v2053 = vpack.c.b16 %v1808, %v1803
    %v2054 = vpack.c.b16 %v1809, %v1804
    %v2055 = vpack.c.b16 %v1810, %v1805
    %v2056 = vpack.c.b16 %v1816, %v1811
    %v2057 = vpack.c.b16 %v1817, %v1812
    %v2058 = vpack.c.b16 %v1818, %v1813
    %v2059 = vpack.c.b16 %v1819, %v1814
    %v2060 = vpack.c.b16 %v1820, %v1815
    %v2061 = vpack.c.b16 %v1826, %v1821
    %v2062 = vpack.c.b16 %v1827, %v1822
    %v2063 = vpack.c.b16 %v1828, %v1823
    %v2064 = vpack.c.b16 %v1829, %v1824
    %v2065 = vpack.c.b16 %v1830, %v1825
    %v2066 = vpack.c.b16 %v1836, %v1831
    %v2067 = vpack.c.b16 %v1837, %v1832
    %v2068 = vpack.c.b16 %v1838, %v1833
    %v2069 = vpack.c.b16 %v1839, %v1834
    %v2070 = vpack.c.b16 %v1840, %v1835
    %v2071 = vpack.c.b16 %v1846, %v1841
    %v2072 = vpack.c.b16 %v1847, %v1842
    %v2073 = vpack.c.b16 %v1848, %v1843
    %v2074 = vpack.c.b16 %v1849, %v1844
    %v2075 = vpack.c.b16 %v1850, %v1845
    %v2076 = vpack.c.b16 %v1856, %v1851
    %v2077 = vpack.c.b16 %v1857, %v1852
    %v2078 = vpack.c.b16 %v1858, %v1853
    %v2079 = vpack.c.b16 %v1859, %v1854
    %v2080 = vpack.c.b16 %v1860, %v1855
    %v2081 = vpack.c.b16 %v1866, %v1861
    %v2082 = vpack.c.b16 %v1867, %v1862
    %v2083 = vpack.c.b16 %v1868, %v1863
    %v2084 = vpack.c.b16 %v1869, %v1864
    %v2085 = vpack.c.b16 %v1870, %v1865
    %v2086 = vpack.c.b16 %v1876, %v1871
    %v2087 = vpack.c.b16 %v1877, %v1872
    %v2088 = vpack.c.b16 %v1878, %v1873
    %v2089 = vpack.c.b16 %v1879, %v1874
    %v2090 = vpack.c.b16 %v1880, %v1875
    %v2091 = vpack.c.b16 %v1886, %v1881
    %v2092 = vpack.c.b16 %v1887, %v1882
    %v2093 = vpack.c.b16 %v1888, %v1883
    %v2094 = vpack.c.b16 %v1889, %v1884
    %v2095 = vpack.c.b16 %v1890, %v1885
    %v2096 = vpack.c.b16 %v1896, %v1891
    %v2097 = vpack.c.b16 %v1897, %v1892
    %v2098 = vpack.c.b16 %v1898, %v1893
    %v2099 = vpack.c.b16 %v1899, %v1894
    %v2100 = vpack.c.b16 %v1900, %v1895
    %2301 = vmatprep.subr.bf16.mxu0 %v1902
    %2302 = vmatpush1.bf16.msra.mxu0 %v1901
    %2303 = vmatprep.subr.bf16.mxu0 %v1907
    %2304 = vmatpush1.bf16.msra.mxu0 %v1906
    %2305 = vmatprep.subr.bf16.mxu0 %v1912
    %2306 = vmatpush1.bf16.msra.mxu0 %v1911
    %2307 = vmatprep.subr.bf16.mxu0 %v1917
    %2308 = vmatpush1.bf16.msra.mxu0 %v1916
    %2309 = vmatprep.subr.bf16.mxu0 %v1922
    %2310 = vmatpush1.bf16.msra.mxu0 %v1921
    %2311 = vmatprep.subr.bf16.mxu0 %v1927
    %2312 = vmatpush1.bf16.msra.mxu0 %v1926
    %2313 = vmatprep.subr.bf16.mxu0 %v1932
    %2314 = vmatpush1.bf16.msra.mxu0 %v1931
    %2315 = vmatprep.subr.bf16.mxu0 %v1937
    %2316 = vmatpush1.bf16.msra.mxu0 %v1936
    %2317 = vmatprep.subr.bf16.mxu0 %v1942
    %2318 = vmatpush1.bf16.msra.mxu0 %v1941
    %2319 = vmatprep.subr.bf16.mxu0 %v1947
    %2320 = vmatpush1.bf16.msra.mxu0 %v1946
    %2321 = vmatprep.subr.bf16.mxu0 %v1952
    %2322 = vmatpush1.bf16.msra.mxu0 %v1951
    %2323 = vmatprep.subr.bf16.mxu0 %v1957
    %2324 = vmatpush1.bf16.msra.mxu0 %v1956
    %2325 = vmatprep.subr.bf16.mxu0 %v1962
    %2326 = vmatpush1.bf16.msra.mxu0 %v1961
    %2327 = vmatprep.subr.bf16.mxu0 %v1967
    %2328 = vmatpush1.bf16.msra.mxu0 %v1966
    %2329 = vmatprep.subr.bf16.mxu0 %v1972
    %2330 = vmatpush1.bf16.msra.mxu0 %v1971
    %2331 = vmatprep.subr.bf16.mxu0 %v1977
    %2332 = vmatpush1.bf16.msra.mxu0 %v1976
    %2333 = vmatprep.mubr.bf16.mxu0 %v990
    %2334 = vmatmul.mubr.bf16.gmra.mrb[0].mxu0 %v989
    %v2335 = vpop.f32.mrb[0].mxu0
    %v2336 = vadd.f32 %v1239, %v2335
    %v2337 = vpop.f32.mrb[0].mxu0
    %v2338 = vadd.f32 %v1243, %v2337
    %v2339 = vpop.f32.mrb[0].mxu0
    %v2340 = vpop.f32.mrb[0].mxu0
    %2341 = vdwg.mxu0
    %2342 = vmatprep.subr.bf16.mxu0 %v1982
    %2343 = vmatpush1.bf16.msra.mxu0 %v1981
    %2344 = vmatprep.subr.bf16.mxu0 %v1987
    %2345 = vmatpush1.bf16.msra.mxu0 %v1986
    %2346 = vmatprep.subr.bf16.mxu0 %v1992
    %2347 = vmatpush1.bf16.msra.mxu0 %v1991
    %2348 = vmatprep.subr.bf16.mxu0 %v1997
    %2349 = vmatpush1.bf16.msra.mxu0 %v1996
    %2350 = vmatprep.subr.bf16.mxu0 %v2002
    %2351 = vmatpush1.bf16.msra.mxu0 %v2001
    %2352 = vmatprep.subr.bf16.mxu0 %v2007
    %2353 = vmatpush1.bf16.msra.mxu0 %v2006
    %2354 = vmatprep.subr.bf16.mxu0 %v2012
    %2355 = vmatpush1.bf16.msra.mxu0 %v2011
    %2356 = vmatprep.subr.bf16.mxu0 %v2017
    %2357 = vmatpush1.bf16.msra.mxu0 %v2016
    %2358 = vmatprep.subr.bf16.mxu0 %v2022
    %2359 = vmatpush1.bf16.msra.mxu0 %v2021
    %2360 = vmatprep.subr.bf16.mxu0 %v2027
    %2361 = vmatpush1.bf16.msra.mxu0 %v2026
    %2362 = vmatprep.subr.bf16.mxu0 %v2032
    %2363 = vmatpush1.bf16.msra.mxu0 %v2031
    %2364 = vmatprep.subr.bf16.mxu0 %v2037
    %2365 = vmatpush1.bf16.msra.mxu0 %v2036
    %2366 = vmatprep.subr.bf16.mxu0 %v2042
    %2367 = vmatpush1.bf16.msra.mxu0 %v2041
    %2368 = vmatprep.subr.bf16.mxu0 %v2047
    %2369 = vmatpush1.bf16.msra.mxu0 %v2046
    %2370 = vmatprep.subr.bf16.mxu0 %v2052
    %2371 = vmatpush1.bf16.msra.mxu0 %v2051
    %2372 = vmatprep.subr.bf16.mxu0 %v2057
    %2373 = vmatpush1.bf16.msra.mxu0 %v2056
    %2374 = vmatprep.mubr.bf16.mxu0 %v992
    %2375 = vmatmul.mubr.bf16.gmra.mrb[0].mxu0 %v991
    %v2376 = vpop.f32.mrb[0].mxu0
    %v2377 = vadd.f32 %v2336, %v2376
    %v2378 = vpop.f32.mrb[0].mxu0
    %v2379 = vadd.f32 %v2338, %v2378
    %v2380 = vpop.f32.mrb[0].mxu0
    %v2381 = vpop.f32.mrb[0].mxu0
    %2382 = vdwg.mxu0
    %2383 = vmatprep.subr.bf16.mxu0 %v2062
    %2384 = vmatpush1.bf16.msra.mxu0 %v2061
    %2385 = vmatprep.subr.bf16.mxu0 %v2067
    %2386 = vmatpush1.bf16.msra.mxu0 %v2066
    %2387 = vmatprep.subr.bf16.mxu0 %v2072
    %2388 = vmatpush1.bf16.msra.mxu0 %v2071
    %2389 = vmatprep.subr.bf16.mxu0 %v2077
    %2390 = vmatpush1.bf16.msra.mxu0 %v2076
    %2391 = vmatprep.subr.bf16.mxu0 %v2082
    %2392 = vmatpush1.bf16.msra.mxu0 %v2081
    %2393 = vmatprep.subr.bf16.mxu0 %v2087
    %2394 = vmatpush1.bf16.msra.mxu0 %v2086
    %2395 = vmatprep.subr.bf16.mxu0 %v2092
    %2396 = vmatpush1.bf16.msra.mxu0 %v2091
    %2397 = vmatprep.subr.bf16.mxu0 %v2097
    %2398 = vmatpush1.bf16.msra.mxu0 %v2096
    %2399 = vmatprep.subr.bf16.mxu0 0
    %2400 = vmatpush1.bf16.msra.mxu0 0
    %2401 = vmatprep.subr.bf16.mxu0 0
    %2402 = vmatpush1.bf16.msra.mxu0 0
    %2403 = vmatprep.subr.bf16.mxu0 0
    %2404 = vmatpush1.bf16.msra.mxu0 0
    %2405 = vmatprep.subr.bf16.mxu0 0
    %2406 = vmatpush1.bf16.msra.mxu0 0
    %2407 = vmatprep.subr.bf16.mxu0 0
    %2408 = vmatpush1.bf16.msra.mxu0 0
    %2409 = vmatprep.subr.bf16.mxu0 0
    %2410 = vmatpush1.bf16.msra.mxu0 0
    %2411 = vmatprep.subr.bf16.mxu0 0
    %2412 = vmatpush1.bf16.msra.mxu0 0
    %2413 = vmatprep.subr.bf16.mxu0 0
    %2414 = vmatpush1.bf16.msra.mxu0 0
    %2415 = vmatprep.mubr.bf16.mxu0 0
    %2416 = vmatmul.mubr.bf16.gmra.mrb[0].mxu0 %v993
    %v2417 = vpop.f32.mrb[0].mxu0
    %v2418 = vadd.f32 %v2377, %v2417
    %v2419 = vpop.f32.mrb[0].mxu0
    %v2420 = vadd.f32 %v2379, %v2419
    %v2421 = vpop.f32.mrb[0].mxu0
    %v2422 = vpop.f32.mrb[0].mxu0
    %2423 = vdwg.mxu0
    %2424 = vmatprep.subr.bf16.mxu0 %v1904
    %2425 = vmatpush1.bf16.msra.mxu0 %v1903
    %2426 = vmatprep.subr.bf16.mxu0 %v1909
    %2427 = vmatpush1.bf16.msra.mxu0 %v1908
    %2428 = vmatprep.subr.bf16.mxu0 %v1914
    %2429 = vmatpush1.bf16.msra.mxu0 %v1913
    %2430 = vmatprep.subr.bf16.mxu0 %v1919
    %2431 = vmatpush1.bf16.msra.mxu0 %v1918
    %2432 = vmatprep.subr.bf16.mxu0 %v1924
    %2433 = vmatpush1.bf16.msra.mxu0 %v1923
    %2434 = vmatprep.subr.bf16.mxu0 %v1929
    %2435 = vmatpush1.bf16.msra.mxu0 %v1928
    %2436 = vmatprep.subr.bf16.mxu0 %v1934
    %2437 = vmatpush1.bf16.msra.mxu0 %v1933
    %2438 = vmatprep.subr.bf16.mxu0 %v1939
    %2439 = vmatpush1.bf16.msra.mxu0 %v1938
    %2440 = vmatprep.subr.bf16.mxu0 %v1944
    %2441 = vmatpush1.bf16.msra.mxu0 %v1943
    %2442 = vmatprep.subr.bf16.mxu0 %v1949
    %2443 = vmatpush1.bf16.msra.mxu0 %v1948
    %2444 = vmatprep.subr.bf16.mxu0 %v1954
    %2445 = vmatpush1.bf16.msra.mxu0 %v1953
    %2446 = vmatprep.subr.bf16.mxu0 %v1959
    %2447 = vmatpush1.bf16.msra.mxu0 %v1958
    %2448 = vmatprep.subr.bf16.mxu0 %v1964
    %2449 = vmatpush1.bf16.msra.mxu0 %v1963
    %2450 = vmatprep.subr.bf16.mxu0 %v1969
    %2451 = vmatpush1.bf16.msra.mxu0 %v1968
    %2452 = vmatprep.subr.bf16.mxu0 %v1974
    %2453 = vmatpush1.bf16.msra.mxu0 %v1973
    %2454 = vmatprep.subr.bf16.mxu0 %v1979
    %2455 = vmatpush1.bf16.msra.mxu0 %v1978
    %2456 = vmatprep.mubr.bf16.mxu0 %v990
    %2457 = vmatmul.mubr.bf16.gmra.mrb[0].mxu0 %v989
    %v2458 = vpop.f32.mrb[0].mxu0
    %v2459 = vadd.f32 %v1247, %v2458
    %v2460 = vpop.f32.mrb[0].mxu0
    %v2461 = vadd.f32 %v1251, %v2460
    %v2462 = vpop.f32.mrb[0].mxu0
    %v2463 = vpop.f32.mrb[0].mxu0
    %2464 = vdwg.mxu0
    %2465 = vmatprep.subr.bf16.mxu0 %v1984
    %2466 = vmatpush1.bf16.msra.mxu0 %v1983
    %2467 = vmatprep.subr.bf16.mxu0 %v1989
    %2468 = vmatpush1.bf16.msra.mxu0 %v1988
    %2469 = vmatprep.subr.bf16.mxu0 %v1994
    %2470 = vmatpush1.bf16.msra.mxu0 %v1993
    %2471 = vmatprep.subr.bf16.mxu0 %v1999
    %2472 = vmatpush1.bf16.msra.mxu0 %v1998
    %2473 = vmatprep.subr.bf16.mxu0 %v2004
    %2474 = vmatpush1.bf16.msra.mxu0 %v2003
    %2475 = vmatprep.subr.bf16.mxu0 %v2009
    %2476 = vmatpush1.bf16.msra.mxu0 %v2008
    %2477 = vmatprep.subr.bf16.mxu0 %v2014
    %2478 = vmatpush1.bf16.msra.mxu0 %v2013
    %2479 = vmatprep.subr.bf16.mxu0 %v2019
    %2480 = vmatpush1.bf16.msra.mxu0 %v2018
    %2481 = vmatprep.subr.bf16.mxu0 %v2024
    %2482 = vmatpush1.bf16.msra.mxu0 %v2023
    %2483 = vmatprep.subr.bf16.mxu0 %v2029
    %2484 = vmatpush1.bf16.msra.mxu0 %v2028
    %2485 = vmatprep.subr.bf16.mxu0 %v2034
    %2486 = vmatpush1.bf16.msra.mxu0 %v2033
    %2487 = vmatprep.subr.bf16.mxu0 %v2039
    %2488 = vmatpush1.bf16.msra.mxu0 %v2038
    %2489 = vmatprep.subr.bf16.mxu0 %v2044
    %2490 = vmatpush1.bf16.msra.mxu0 %v2043
    %2491 = vmatprep.subr.bf16.mxu0 %v2049
    %2492 = vmatpush1.bf16.msra.mxu0 %v2048
    %2493 = vmatprep.subr.bf16.mxu0 %v2054
    %2494 = vmatpush1.bf16.msra.mxu0 %v2053
    %2495 = vmatprep.subr.bf16.mxu0 %v2059
    %2496 = vmatpush1.bf16.msra.mxu0 %v2058
    %2497 = vmatprep.mubr.bf16.mxu0 %v992
    %2498 = vmatmul.mubr.bf16.gmra.mrb[0].mxu0 %v991
    %v2499 = vpop.f32.mrb[0].mxu0
    %v2500 = vadd.f32 %v2459, %v2499
    %v2501 = vpop.f32.mrb[0].mxu0
    %v2502 = vadd.f32 %v2461, %v2501
    %v2503 = vpop.f32.mrb[0].mxu0
    %v2504 = vpop.f32.mrb[0].mxu0
    %2505 = vdwg.mxu0
    %2506 = vmatprep.subr.bf16.mxu0 %v2064
    %2507 = vmatpush1.bf16.msra.mxu0 %v2063
    %2508 = vmatprep.subr.bf16.mxu0 %v2069
    %2509 = vmatpush1.bf16.msra.mxu0 %v2068
    %2510 = vmatprep.subr.bf16.mxu0 %v2074
    %2511 = vmatpush1.bf16.msra.mxu0 %v2073
    %2512 = vmatprep.subr.bf16.mxu0 %v2079
    %2513 = vmatpush1.bf16.msra.mxu0 %v2078
    %2514 = vmatprep.subr.bf16.mxu0 %v2084
    %2515 = vmatpush1.bf16.msra.mxu0 %v2083
    %2516 = vmatprep.subr.bf16.mxu0 %v2089
    %2517 = vmatpush1.bf16.msra.mxu0 %v2088
    %2518 = vmatprep.subr.bf16.mxu0 %v2094
    %2519 = vmatpush1.bf16.msra.mxu0 %v2093
    %2520 = vmatprep.subr.bf16.mxu0 %v2099
    %2521 = vmatpush1.bf16.msra.mxu0 %v2098
    %2522 = vmatprep.subr.bf16.mxu0 0
    %2523 = vmatpush1.bf16.msra.mxu0 0
    %2524 = vmatprep.subr.bf16.mxu0 0
    %2525 = vmatpush1.bf16.msra.mxu0 0
    %2526 = vmatprep.subr.bf16.mxu0 0
    %2527 = vmatpush1.bf16.msra.mxu0 0
    %2528 = vmatprep.subr.bf16.mxu0 0
    %2529 = vmatpush1.bf16.msra.mxu0 0
    %2530 = vmatprep.subr.bf16.mxu0 0
    %2531 = vmatpush1.bf16.msra.mxu0 0
    %2532 = vmatprep.subr.bf16.mxu0 0
    %2533 = vmatpush1.bf16.msra.mxu0 0
    %2534 = vmatprep.subr.bf16.mxu0 0
    %2535 = vmatpush1.bf16.msra.mxu0 0
    %2536 = vmatprep.subr.bf16.mxu0 0
    %2537 = vmatpush1.bf16.msra.mxu0 0
    %2538 = vmatprep.mubr.bf16.mxu0 0
    %2539 = vmatmul.mubr.bf16.gmra.mrb[0].mxu0 %v993
    %v2540 = vpop.f32.mrb[0].mxu0
    %v2541 = vadd.f32 %v2500, %v2540
    %v2542 = vpop.f32.mrb[0].mxu0
    %v2543 = vadd.f32 %v2502, %v2542
    %v2544 = vpop.f32.mrb[0].mxu0
    %v2545 = vpop.f32.mrb[0].mxu0
    %2546 = vdwg.mxu0
    %2547 = vmatprep.subr.bf16.mxu0 0
    %2548 = vmatpush1.bf16.msra.mxu0 %v1905
    %2549 = vmatprep.subr.bf16.mxu0 0
    %2550 = vmatpush1.bf16.msra.mxu0 %v1910
    %2551 = vmatprep.subr.bf16.mxu0 0
    %2552 = vmatpush1.bf16.msra.mxu0 %v1915
    %2553 = vmatprep.subr.bf16.mxu0 0
    %2554 = vmatpush1.bf16.msra.mxu0 %v1920
    %2555 = vmatprep.subr.bf16.mxu0 0
    %2556 = vmatpush1.bf16.msra.mxu0 %v1925
    %2557 = vmatprep.subr.bf16.mxu0 0
    %2558 = vmatpush1.bf16.msra.mxu0 %v1930
    %2559 = vmatprep.subr.bf16.mxu0 0
    %2560 = vmatpush1.bf16.msra.mxu0 %v1935
    %2561 = vmatprep.subr.bf16.mxu0 0
    %2562 = vmatpush1.bf16.msra.mxu0 %v1940
    %2563 = vmatprep.subr.bf16.mxu0 0
    %2564 = vmatpush1.bf16.msra.mxu0 %v1945
    %2565 = vmatprep.subr.bf16.mxu0 0
    %2566 = vmatpush1.bf16.msra.mxu0 %v1950
    %2567 = vmatprep.subr.bf16.mxu0 0
    %2568 = vmatpush1.bf16.msra.mxu0 %v1955
    %2569 = vmatprep.subr.bf16.mxu0 0
    %2570 = vmatpush1.bf16.msra.mxu0 %v1960
    %2571 = vmatprep.subr.bf16.mxu0 0
    %2572 = vmatpush1.bf16.msra.mxu0 %v1965
    %2573 = vmatprep.subr.bf16.mxu0 0
    %2574 = vmatpush1.bf16.msra.mxu0 %v1970
    %2575 = vmatprep.subr.bf16.mxu0 0
    %2576 = vmatpush1.bf16.msra.mxu0 %v1975
    %2577 = vmatprep.subr.bf16.mxu0 0
    %2578 = vmatpush1.bf16.msra.mxu0 %v1980
    %2579 = vmatprep.mubr.bf16.mxu0 %v990
    %2580 = vmatmul.mubr.bf16.gmra.mrb[0].mxu0 %v989
    %v2581 = vpop.f32.mrb[0].mxu0
    %v2582 = vadd.f32 %v1255, %v2581
    %v2583 = vpop.f32.mrb[0].mxu0
    %v2584 = vpop.f32.mrb[0].mxu0
    %v2585 = vpop.f32.mrb[0].mxu0
    %2586 = vdwg.mxu0
    %2587 = vmatprep.subr.bf16.mxu0 0
    %2588 = vmatpush1.bf16.msra.mxu0 %v1985
    %2589 = vmatprep.subr.bf16.mxu0 0
    %2590 = vmatpush1.bf16.msra.mxu0 %v1990
    %2591 = vmatprep.subr.bf16.mxu0 0
    %2592 = vmatpush1.bf16.msra.mxu0 %v1995
    %2593 = vmatprep.subr.bf16.mxu0 0
    %2594 = vmatpush1.bf16.msra.mxu0 %v2000
    %2595 = vmatprep.subr.bf16.mxu0 0
    %2596 = vmatpush1.bf16.msra.mxu0 %v2005
    %2597 = vmatprep.subr.bf16.mxu0 0
    %2598 = vmatpush1.bf16.msra.mxu0 %v2010
    %2599 = vmatprep.subr.bf16.mxu0 0
    %2600 = vmatpush1.bf16.msra.mxu0 %v2015
    %2601 = vmatprep.subr.bf16.mxu0 0
    %2602 = vmatpush1.bf16.msra.mxu0 %v2020
    %2603 = vmatprep.subr.bf16.mxu0 0
    %2604 = vmatpush1.bf16.msra.mxu0 %v2025
    %2605 = vmatprep.subr.bf16.mxu0 0
    %2606 = vmatpush1.bf16.msra.mxu0 %v2030
    %2607 = vmatprep.subr.bf16.mxu0 0
    %2608 = vmatpush1.bf16.msra.mxu0 %v2035
    %2609 = vmatprep.subr.bf16.mxu0 0
    %2610 = vmatpush1.bf16.msra.mxu0 %v2040
    %2611 = vmatprep.subr.bf16.mxu0 0
    %2612 = vmatpush1.bf16.msra.mxu0 %v2045
    %2613 = vmatprep.subr.bf16.mxu0 0
    %2614 = vmatpush1.bf16.msra.mxu0 %v2050
    %2615 = vmatprep.subr.bf16.mxu0 0
    %2616 = vmatpush1.bf16.msra.mxu0 %v2055
    %2617 = vmatprep.subr.bf16.mxu0 0
    %2618 = vmatpush1.bf16.msra.mxu0 %v2060
    %2619 = vmatprep.mubr.bf16.mxu0 %v992
    %2620 = vmatmul.mubr.bf16.gmra.mrb[0].mxu0 %v991
    %v2621 = vpop.f32.mrb[0].mxu0
    %v2622 = vadd.f32 %v2582, %v2621
    %v2623 = vpop.f32.mrb[0].mxu0
    %v2624 = vpop.f32.mrb[0].mxu0
    %v2625 = vpop.f32.mrb[0].mxu0
    %2626 = vdwg.mxu0
    %2627 = vmatprep.subr.bf16.mxu0 0
    %2628 = vmatpush1.bf16.msra.mxu0 %v2065
    %2629 = vmatprep.subr.bf16.mxu0 0
    %2630 = vmatpush1.bf16.msra.mxu0 %v2070
    %2631 = vmatprep.subr.bf16.mxu0 0
    %2632 = vmatpush1.bf16.msra.mxu0 %v2075
    %2633 = vmatprep.subr.bf16.mxu0 0
    %2634 = vmatpush1.bf16.msra.mxu0 %v2080
    %2635 = vmatprep.subr.bf16.mxu0 0
    %2636 = vmatpush1.bf16.msra.mxu0 %v2085
    %2637 = vmatprep.subr.bf16.mxu0 0
    %2638 = vmatpush1.bf16.msra.mxu0 %v2090
    %2639 = vmatprep.subr.bf16.mxu0 0
    %2640 = vmatpush1.bf16.msra.mxu0 %v2095
    %2641 = vmatprep.subr.bf16.mxu0 0
    %2642 = vmatpush1.bf16.msra.mxu0 %v2100
    %2643 = vmatprep.subr.bf16.mxu0 0
    %2644 = vmatpush1.bf16.msra.mxu0 0
    %2645 = vmatprep.subr.bf16.mxu0 0
    %2646 = vmatpush1.bf16.msra.mxu0 0
    %2647 = vmatprep.subr.bf16.mxu0 0
    %2648 = vmatpush1.bf16.msra.mxu0 0
    %2649 = vmatprep.subr.bf16.mxu0 0
    %2650 = vmatpush1.bf16.msra.mxu0 0
    %2651 = vmatprep.subr.bf16.mxu0 0
    %2652 = vmatpush1.bf16.msra.mxu0 0
    %2653 = vmatprep.subr.bf16.mxu0 0
    %2654 = vmatpush1.bf16.msra.mxu0 0
    %2655 = vmatprep.subr.bf16.mxu0 0
    %2656 = vmatpush1.bf16.msra.mxu0 0
    %2657 = vmatprep.subr.bf16.mxu0 0
    %2658 = vmatpush1.bf16.msra.mxu0 0
    %2659 = vmatprep.mubr.bf16.mxu0 0
    %2660 = vmatmul.mubr.bf16.gmra.mrb[0].mxu0 %v993
    %v2661 = vpop.f32.mrb[0].mxu0
    %v2662 = vadd.f32 %v2622, %v2661
    %v2663 = vpop.f32.mrb[0].mxu0
    %v2664 = vpop.f32.mrb[0].mxu0
    %v2665 = vpop.f32.mrb[0].mxu0
    %2666 = vdwg.mxu0
    %v2667 = vxor.u32 %v2418, 2147483648
    %v2668 = vxor.u32 %v2420, 2147483648
    %v2669 = vxor.u32 %v2541, 2147483648
    %v2670 = vxor.u32 %v2543, 2147483648
    %v2671 = vxor.u32 %v2662, 2147483648
    %v2672 = vmul.f32 %v2667, 1.442695
    %v2673 = vpow.pop %v2672
    %v2674 = vmul.f32 %v2668, 1.442695
    %v2675 = vpow.pop %v2674
    %v2676 = vmul.f32 %v2669, 1.442695
    %v2677 = vpow.pop %v2676
    %v2678 = vmul.f32 %v2670, 1.442695
    %v2679 = vpow.pop %v2678
    %v2680 = vmul.f32 %v2671, 1.442695
    %v2681 = vpow.pop %v2680
    %v2682 = vadd.f32 %v2673, 1.0
    %v2683 = vadd.f32 %v2675, 1.0
    %v2684 = vadd.f32 %v2677, 1.0
    %v2685 = vadd.f32 %v2679, 1.0
    %v2686 = vadd.f32 %v2681, 1.0
    %v2687 = vrcp.pop %v2682
    %v2688 = vmul.f32 1.0, %v2687
    %v2689 = vrcp.pop %v2683
    %v2690 = vmul.f32 1.0, %v2689
    %v2691 = vrcp.pop %v2684
    %v2692 = vmul.f32 1.0, %v2691
    %v2693 = vrcp.pop %v2685
    %v2694 = vmul.f32 1.0, %v2693
    %v2695 = vrcp.pop %v2686
    %v2696 = vmul.f32 1.0, %v2695
    %v2697 = vmul.f32 %v2418, %v2688
    %v2698 = vmul.f32 %v2420, %v2690
    %v2699 = vmul.f32 %v2541, %v2692
    %v2700 = vmul.f32 %v2543, %v2694
    %v2701 = vmul.f32 %v2662, %v2696
    %v2702 = vpack.c.bf16 %v2697, %v2697
    %v2703 = vpack.c.bf16 %v2698, %v2698
    %v2704 = vpack.c.bf16 %v2699, %v2699
    %v2705 = vpack.c.bf16 %v2700, %v2700
    %v2706 = vpack.c.bf16 %v2701, %v2701
    %v2707 = vld [vmem:[#allocation7] sm:$0xff]
    %v2708 = vld [vmem:[#allocation7 + $0x8] sm:$0xff]
    %v2709 = vld [vmem:[#allocation7 + $0x10] sm:$0xff]
    %v2710 = vld [vmem:[#allocation7 + $0x18] sm:$0xff]
    %v2711 = vld [vmem:[#allocation7 + $0x20] sm:$0xff]
    %v2712 = vld [vmem:[#allocation7 + $0x28] sm:$0xff]
    %v2713 = vld [vmem:[#allocation7 + $0x30] sm:$0xff]
    %v2714 = vld [vmem:[#allocation7 + $0x38] sm:$0xff]
    %v2715 = vld [vmem:[#allocation7 + $0x40] sm:$0xff]
    %v2716 = vld [vmem:[#allocation7 + $0x48] sm:$0xff]
    %v2717 = vld [vmem:[#allocation7 + $0x50] sm:$0xff]
    %v2718 = vld [vmem:[#allocation7 + $0x58] sm:$0xff]
    %v2719 = vld [vmem:[#allocation7 + $0x60] sm:$0xff]
    %v2720 = vld [vmem:[#allocation7 + $0x68] sm:$0xff]
    %v2721 = vld [vmem:[#allocation7 + $0x70] sm:$0xff]
    %v2722 = vld [vmem:[#allocation7 + $0x78] sm:$0xff]
    %v2723 = vld [vmem:[#allocation7 + $0x80] sm:$0xff]
    %v2724 = vld [vmem:[#allocation7 + $0x88] sm:$0xff]
    %v2725 = vld [vmem:[#allocation7 + $0x90] sm:$0xff]
    %v2726 = vld [vmem:[#allocation7 + $0x98] sm:$0xff]
    %v2727 = vld [vmem:[#allocation7 + $0xa0] sm:$0xff]
    %v2728 = vld [vmem:[#allocation7 + $0xa8] sm:$0xff]
    %v2729 = vld [vmem:[#allocation7 + $0xb0] sm:$0xff]
    %v2730 = vld [vmem:[#allocation7 + $0xb8] sm:$0xff]
    %v2731 = vld [vmem:[#allocation7 + $0xc0] sm:$0xff]
    %v2732 = vld [vmem:[#allocation7 + $0xc8] sm:$0xff]
    %v2733 = vld [vmem:[#allocation7 + $0xd0] sm:$0xff]
    %v2734 = vld [vmem:[#allocation7 + $0xd8] sm:$0xff]
    %v2735 = vld [vmem:[#allocation7 + $0xe0] sm:$0xff]
    %v2736 = vld [vmem:[#allocation7 + $0xe8] sm:$0xff]
    %v2737 = vld [vmem:[#allocation7 + $0xf0] sm:$0xff]
    %v2738 = vld [vmem:[#allocation7 + $0xf8] sm:$0xff]
    %v2739 = vld [vmem:[#allocation7 + $0x100] sm:$0xff]
    %v2740 = vld [vmem:[#allocation7 + $0x108] sm:$0xff]
    %v2741 = vld [vmem:[#allocation7 + $0x110] sm:$0xff]
    %v2742 = vld [vmem:[#allocation7 + $0x118] sm:$0xff]
    %v2743 = vld [vmem:[#allocation7 + $0x120] sm:$0xff]
    %v2744 = vld [vmem:[#allocation7 + $0x128] sm:$0xff]
    %v2745 = vld [vmem:[#allocation7 + $0x130] sm:$0xff]
    %v2746 = vld [vmem:[#allocation7 + $0x138] sm:$0xff]
    %v2747 = vld [vmem:[#allocation7 + $0x140] sm:$0xff]
    %v2748 = vld [vmem:[#allocation7 + $0x148] sm:$0xff]
    %v2749 = vld [vmem:[#allocation7 + $0x150] sm:$0xff]
    %v2750 = vld [vmem:[#allocation7 + $0x158] sm:$0xff]
    %v2751 = vld [vmem:[#allocation7 + $0x160] sm:$0xff]
    %v2752 = vld [vmem:[#allocation7 + $0x168] sm:$0xff]
    %v2753 = vld [vmem:[#allocation7 + $0x170] sm:$0xff]
    %v2754 = vld [vmem:[#allocation7 + $0x178] sm:$0xff]
    %v2755 = vld [vmem:[#allocation7 + $0x180] sm:$0xff]
    %v2756 = vld [vmem:[#allocation7 + $0x188] sm:$0xff]
    %v2757 = vld [vmem:[#allocation7 + $0x190] sm:$0xff]
    %v2758 = vld [vmem:[#allocation7 + $0x198] sm:$0xff]
    %v2759 = vld [vmem:[#allocation7 + $0x1a0] sm:$0xff]
    %v2760 = vld [vmem:[#allocation7 + $0x1a8] sm:$0xff]
    %v2761 = vld [vmem:[#allocation7 + $0x1b0] sm:$0xff]
    %v2762 = vld [vmem:[#allocation7 + $0x1b8] sm:$0xff]
    %v2763 = vld [vmem:[#allocation7 + $0x1c0] sm:$0xff]
    %v2764 = vld [vmem:[#allocation7 + $0x1c8] sm:$0xff]
    %v2765 = vld [vmem:[#allocation7 + $0x1d0] sm:$0xff]
    %v2766 = vld [vmem:[#allocation7 + $0x1d8] sm:$0xff]
    %v2767 = vld [vmem:[#allocation7 + $0x1e0] sm:$0xff]
    %v2768 = vld [vmem:[#allocation7 + $0x1e8] sm:$0xff]
    %v2769 = vld [vmem:[#allocation7 + $0x1f0] sm:$0xff]
    %v2770 = vld [vmem:[#allocation7 + $0x1f8] sm:$0xff]
    %v2771 = vld [vmem:[#allocation7 + $0x200] sm:$0xff]
    %v2772 = vld [vmem:[#allocation7 + $0x208] sm:$0xff]
    %v2773 = vld [vmem:[#allocation7 + $0x210] sm:$0xff]
    %v2774 = vld [vmem:[#allocation7 + $0x218] sm:$0xff]
    %v2775 = vld [vmem:[#allocation7 + $0x220] sm:$0xff]
    %v2776 = vld [vmem:[#allocation7 + $0x228] sm:$0xff]
    %v2777 = vld [vmem:[#allocation7 + $0x230] sm:$0xff]
    %v2778 = vld [vmem:[#allocation7 + $0x238] sm:$0xff]
    %v2779 = vld [vmem:[#allocation7 + $0x240] sm:$0xff]
    %v2780 = vld [vmem:[#allocation7 + $0x248] sm:$0xff]
    %v2781 = vld [vmem:[#allocation7 + $0x250] sm:$0xff]
    %v2782 = vld [vmem:[#allocation7 + $0x258] sm:$0xff]
    %v2783 = vld [vmem:[#allocation7 + $0x260] sm:$0xff]
    %v2784 = vld [vmem:[#allocation7 + $0x268] sm:$0xff]
    %v2785 = vld [vmem:[#allocation7 + $0x270] sm:$0xff]
    %v2786 = vld [vmem:[#allocation7 + $0x278] sm:$0xff]
    %v2787 = vld [vmem:[%s10] sm:$0x3]
    %v2789 = vlaneseq
    %v2790 = vshrl.u32 %v2789, 7
    %v2791 = vsub.s32 0, %v2790
    %v2792 = vrot.slane %v2787, %v2791
    %v2793 = vlaneseq
    %v2794 = vshrl.u32 %v2793, 7
    %v2795 = vsub.s32 1, %v2794
    %v2796 = vrot.slane %v2787, %v2795
    %v2879 = vunpack.c.l.b16 %v2707
    %v2880 = vunpack.c.h.b16 %v2707
    %v2881 = vunpack.c.l.b16 %v2708
    %v2882 = vunpack.c.h.b16 %v2708
    %v2883 = vunpack.c.l.b16 %v2709
    %v2884 = vunpack.c.h.b16 %v2709
    %v2885 = vunpack.c.l.b16 %v2710
    %v2886 = vunpack.c.h.b16 %v2710
    %v2887 = vunpack.c.l.b16 %v2711
    %v2888 = vunpack.c.h.b16 %v2711
    %v2889 = vunpack.c.l.b16 %v2712
    %v2890 = vunpack.c.h.b16 %v2712
    %v2891 = vunpack.c.l.b16 %v2713
    %v2892 = vunpack.c.h.b16 %v2713
    %v2893 = vunpack.c.l.b16 %v2714
    %v2894 = vunpack.c.h.b16 %v2714
    %v2895 = vunpack.c.l.b16 %v2715
    %v2896 = vunpack.c.h.b16 %v2715
    %v2897 = vunpack.c.l.b16 %v2716
    %v2898 = vunpack.c.h.b16 %v2716
    %v2899 = vunpack.c.l.b16 %v2717
    %v2900 = vunpack.c.h.b16 %v2717
    %v2901 = vunpack.c.l.b16 %v2718
    %v2902 = vunpack.c.h.b16 %v2718
    %v2903 = vunpack.c.l.b16 %v2719
    %v2904 = vunpack.c.h.b16 %v2719
    %v2905 = vunpack.c.l.b16 %v2720
    %v2906 = vunpack.c.h.b16 %v2720
    %v2907 = vunpack.c.l.b16 %v2721
    %v2908 = vunpack.c.h.b16 %v2721
    %v2909 = vunpack.c.l.b16 %v2722
    %v2910 = vunpack.c.h.b16 %v2722
    %v2911 = vunpack.c.l.b16 %v2723
    %v2912 = vunpack.c.h.b16 %v2723
    %v2913 = vunpack.c.l.b16 %v2724
    %v2914 = vunpack.c.h.b16 %v2724
    %v2915 = vunpack.c.l.b16 %v2725
    %v2916 = vunpack.c.h.b16 %v2725
    %v2917 = vunpack.c.l.b16 %v2726
    %v2918 = vunpack.c.h.b16 %v2726
    %v2919 = vunpack.c.l.b16 %v2727
    %v2920 = vunpack.c.h.b16 %v2727
    %v2921 = vunpack.c.l.b16 %v2728
    %v2922 = vunpack.c.h.b16 %v2728
    %v2923 = vunpack.c.l.b16 %v2729
    %v2924 = vunpack.c.h.b16 %v2729
    %v2925 = vunpack.c.l.b16 %v2730
    %v2926 = vunpack.c.h.b16 %v2730
    %v2927 = vunpack.c.l.b16 %v2731
    %v2928 = vunpack.c.h.b16 %v2731
    %v2929 = vunpack.c.l.b16 %v2732
    %v2930 = vunpack.c.h.b16 %v2732
    %v2931 = vunpack.c.l.b16 %v2733
    %v2932 = vunpack.c.h.b16 %v2733
    %v2933 = vunpack.c.l.b16 %v2734
    %v2934 = vunpack.c.h.b16 %v2734
    %v2935 = vunpack.c.l.b16 %v2735
    %v2936 = vunpack.c.h.b16 %v2735
    %v2937 = vunpack.c.l.b16 %v2736
    %v2938 = vunpack.c.h.b16 %v2736
    %v2939 = vunpack.c.l.b16 %v2737
    %v2940 = vunpack.c.h.b16 %v2737
    %v2941 = vunpack.c.l.b16 %v2738
    %v2942 = vunpack.c.h.b16 %v2738
    %v2943 = vunpack.c.l.b16 %v2739
    %v2944 = vunpack.c.h.b16 %v2739
    %v2945 = vunpack.c.l.b16 %v2740
    %v2946 = vunpack.c.h.b16 %v2740
    %v2947 = vunpack.c.l.b16 %v2741
    %v2948 = vunpack.c.h.b16 %v2741
    %v2949 = vunpack.c.l.b16 %v2742
    %v2950 = vunpack.c.h.b16 %v2742
    %v2951 = vunpack.c.l.b16 %v2743
    %v2952 = vunpack.c.h.b16 %v2743
    %v2953 = vunpack.c.l.b16 %v2744
    %v2954 = vunpack.c.h.b16 %v2744
    %v2955 = vunpack.c.l.b16 %v2745
    %v2956 = vunpack.c.h.b16 %v2745
    %v2957 = vunpack.c.l.b16 %v2746
    %v2958 = vunpack.c.h.b16 %v2746
    %v2959 = vunpack.c.l.b16 %v2747
    %v2960 = vunpack.c.h.b16 %v2747
    %v2961 = vunpack.c.l.b16 %v2748
    %v2962 = vunpack.c.h.b16 %v2748
    %v2963 = vunpack.c.l.b16 %v2749
    %v2964 = vunpack.c.h.b16 %v2749
    %v2965 = vunpack.c.l.b16 %v2750
    %v2966 = vunpack.c.h.b16 %v2750
    %v2967 = vunpack.c.l.b16 %v2751
    %v2968 = vunpack.c.h.b16 %v2751
    %v2969 = vunpack.c.l.b16 %v2752
    %v2970 = vunpack.c.h.b16 %v2752
    %v2971 = vunpack.c.l.b16 %v2753
    %v2972 = vunpack.c.h.b16 %v2753
    %v2973 = vunpack.c.l.b16 %v2754
    %v2974 = vunpack.c.h.b16 %v2754
    %v2975 = vunpack.c.l.b16 %v2755
    %v2976 = vunpack.c.h.b16 %v2755
    %v2977 = vunpack.c.l.b16 %v2756
    %v2978 = vunpack.c.h.b16 %v2756
    %v2979 = vunpack.c.l.b16 %v2757
    %v2980 = vunpack.c.h.b16 %v2757
    %v2981 = vunpack.c.l.b16 %v2758
    %v2982 = vunpack.c.h.b16 %v2758
    %v2983 = vunpack.c.l.b16 %v2759
    %v2984 = vunpack.c.h.b16 %v2759
    %v2985 = vunpack.c.l.b16 %v2760
    %v2986 = vunpack.c.h.b16 %v2760
    %v2987 = vunpack.c.l.b16 %v2761
    %v2988 = vunpack.c.h.b16 %v2761
    %v2989 = vunpack.c.l.b16 %v2762
    %v2990 = vunpack.c.h.b16 %v2762
    %v2991 = vunpack.c.l.b16 %v2763
    %v2992 = vunpack.c.h.b16 %v2763
    %v2993 = vunpack.c.l.b16 %v2764
    %v2994 = vunpack.c.h.b16 %v2764
    %v2995 = vunpack.c.l.b16 %v2765
    %v2996 = vunpack.c.h.b16 %v2765
    %v2997 = vunpack.c.l.b16 %v2766
    %v2998 = vunpack.c.h.b16 %v2766
    %v2999 = vunpack.c.l.b16 %v2767
    %v3000 = vunpack.c.h.b16 %v2767
    %v3001 = vunpack.c.l.b16 %v2768
    %v3002 = vunpack.c.h.b16 %v2768
    %v3003 = vunpack.c.l.b16 %v2769
    %v3004 = vunpack.c.h.b16 %v2769
    %v3005 = vunpack.c.l.b16 %v2770
    %v3006 = vunpack.c.h.b16 %v2770
    %v3007 = vunpack.c.l.b16 %v2771
    %v3008 = vunpack.c.h.b16 %v2771
    %v3009 = vunpack.c.l.b16 %v2772
    %v3010 = vunpack.c.h.b16 %v2772
    %v3011 = vunpack.c.l.b16 %v2773
    %v3012 = vunpack.c.h.b16 %v2773
    %v3013 = vunpack.c.l.b16 %v2774
    %v3014 = vunpack.c.h.b16 %v2774
    %v3015 = vunpack.c.l.b16 %v2775
    %v3016 = vunpack.c.h.b16 %v2775
    %v3017 = vunpack.c.l.b16 %v2776
    %v3018 = vunpack.c.h.b16 %v2776
    %v3019 = vunpack.c.l.b16 %v2777
    %v3020 = vunpack.c.h.b16 %v2777
    %v3021 = vunpack.c.l.b16 %v2778
    %v3022 = vunpack.c.h.b16 %v2778
    %v3023 = vunpack.c.l.b16 %v2779
    %v3024 = vunpack.c.h.b16 %v2779
    %v3025 = vunpack.c.l.b16 %v2780
    %v3026 = vunpack.c.h.b16 %v2780
    %v3027 = vunpack.c.l.b16 %v2781
    %v3028 = vunpack.c.h.b16 %v2781
    %v3029 = vunpack.c.l.b16 %v2782
    %v3030 = vunpack.c.h.b16 %v2782
    %v3031 = vunpack.c.l.b16 %v2783
    %v3032 = vunpack.c.h.b16 %v2783
    %v3033 = vunpack.c.l.b16 %v2784
    %v3034 = vunpack.c.h.b16 %v2784
    %v3035 = vunpack.c.l.b16 %v2785
    %v3036 = vunpack.c.h.b16 %v2785
    %v3037 = vunpack.c.l.b16 %v2786
    %v3038 = vunpack.c.h.b16 %v2786
    %v3039 = vpack.c.b16 %v2881, %v2879
    %v3040 = vpack.c.b16 %v2882, %v2880
    %v3041 = vpack.c.b16 %v2885, %v2883
    %v3042 = vpack.c.b16 %v2886, %v2884
    %v3043 = vpack.c.b16 %v2889, %v2887
    %v3044 = vpack.c.b16 %v2890, %v2888
    %v3045 = vpack.c.b16 %v2893, %v2891
    %v3046 = vpack.c.b16 %v2894, %v2892
    %v3047 = vpack.c.b16 %v2897, %v2895
    %v3048 = vpack.c.b16 %v2898, %v2896
    %v3049 = vpack.c.b16 %v2901, %v2899
    %v3050 = vpack.c.b16 %v2902, %v2900
    %v3051 = vpack.c.b16 %v2905, %v2903
    %v3052 = vpack.c.b16 %v2906, %v2904
    %v3053 = vpack.c.b16 %v2909, %v2907
    %v3054 = vpack.c.b16 %v2910, %v2908
    %v3055 = vpack.c.b16 %v2913, %v2911
    %v3056 = vpack.c.b16 %v2914, %v2912
    %v3057 = vpack.c.b16 %v2917, %v2915
    %v3058 = vpack.c.b16 %v2918, %v2916
    %v3059 = vpack.c.b16 %v2921, %v2919
    %v3060 = vpack.c.b16 %v2922, %v2920
    %v3061 = vpack.c.b16 %v2925, %v2923
    %v3062 = vpack.c.b16 %v2926, %v2924
    %v3063 = vpack.c.b16 %v2929, %v2927
    %v3064 = vpack.c.b16 %v2930, %v2928
    %v3065 = vpack.c.b16 %v2933, %v2931
    %v3066 = vpack.c.b16 %v2934, %v2932
    %v3067 = vpack.c.b16 %v2937, %v2935
    %v3068 = vpack.c.b16 %v2938, %v2936
    %v3069 = vpack.c.b16 %v2941, %v2939
    %v3070 = vpack.c.b16 %v2942, %v2940
    %v3071 = vpack.c.b16 %v2945, %v2943
    %v3072 = vpack.c.b16 %v2946, %v2944
    %v3073 = vpack.c.b16 %v2949, %v2947
    %v3074 = vpack.c.b16 %v2950, %v2948
    %v3075 = vpack.c.b16 %v2953, %v2951
    %v3076 = vpack.c.b16 %v2954, %v2952
    %v3077 = vpack.c.b16 %v2957, %v2955
    %v3078 = vpack.c.b16 %v2958, %v2956
    %v3079 = vpack.c.b16 %v2961, %v2959
    %v3080 = vpack.c.b16 %v2962, %v2960
    %v3081 = vpack.c.b16 %v2965, %v2963
    %v3082 = vpack.c.b16 %v2966, %v2964
    %v3083 = vpack.c.b16 %v2969, %v2967
    %v3084 = vpack.c.b16 %v2970, %v2968
    %v3085 = vpack.c.b16 %v2973, %v2971
    %v3086 = vpack.c.b16 %v2974, %v2972
    %v3087 = vpack.c.b16 %v2977, %v2975
    %v3088 = vpack.c.b16 %v2978, %v2976
    %v3089 = vpack.c.b16 %v2981, %v2979
    %v3090 = vpack.c.b16 %v2982, %v2980
    %v3091 = vpack.c.b16 %v2985, %v2983
    %v3092 = vpack.c.b16 %v2986, %v2984
    %v3093 = vpack.c.b16 %v2989, %v2987
    %v3094 = vpack.c.b16 %v2990, %v2988
    %v3095 = vpack.c.b16 %v2993, %v2991
    %v3096 = vpack.c.b16 %v2994, %v2992
    %v3097 = vpack.c.b16 %v2997, %v2995
    %v3098 = vpack.c.b16 %v2998, %v2996
    %v3099 = vpack.c.b16 %v3001, %v2999
    %v3100 = vpack.c.b16 %v3002, %v3000
    %v3101 = vpack.c.b16 %v3005, %v3003
    %v3102 = vpack.c.b16 %v3006, %v3004
    %v3103 = vpack.c.b16 %v3009, %v3007
    %v3104 = vpack.c.b16 %v3010, %v3008
    %v3105 = vpack.c.b16 %v3013, %v3011
    %v3106 = vpack.c.b16 %v3014, %v3012
    %v3107 = vpack.c.b16 %v3017, %v3015
    %v3108 = vpack.c.b16 %v3018, %v3016
    %v3109 = vpack.c.b16 %v3021, %v3019
    %v3110 = vpack.c.b16 %v3022, %v3020
    %v3111 = vpack.c.b16 %v3025, %v3023
    %v3112 = vpack.c.b16 %v3026, %v3024
    %v3113 = vpack.c.b16 %v3029, %v3027
    %v3114 = vpack.c.b16 %v3030, %v3028
    %v3115 = vpack.c.b16 %v3033, %v3031
    %v3116 = vpack.c.b16 %v3034, %v3032
    %v3117 = vpack.c.b16 %v3037, %v3035
    %v3118 = vpack.c.b16 %v3038, %v3036
    %3199 = vmatprep.subr.bf16.mxu0 %v3040
    %3200 = vmatpush1.bf16.msra.mxu0 %v3039
    %3201 = vmatprep.subr.bf16.mxu0 %v3042
    %3202 = vmatpush1.bf16.msra.mxu0 %v3041
    %3203 = vmatprep.subr.bf16.mxu0 %v3044
    %3204 = vmatpush1.bf16.msra.mxu0 %v3043
    %3205 = vmatprep.subr.bf16.mxu0 %v3046
    %3206 = vmatpush1.bf16.msra.mxu0 %v3045
    %3207 = vmatprep.subr.bf16.mxu0 %v3048
    %3208 = vmatpush1.bf16.msra.mxu0 %v3047
    %3209 = vmatprep.subr.bf16.mxu0 %v3050
    %3210 = vmatpush1.bf16.msra.mxu0 %v3049
    %3211 = vmatprep.subr.bf16.mxu0 %v3052
    %3212 = vmatpush1.bf16.msra.mxu0 %v3051
    %3213 = vmatprep.subr.bf16.mxu0 %v3054
    %3214 = vmatpush1.bf16.msra.mxu0 %v3053
    %3215 = vmatprep.subr.bf16.mxu0 %v3056
    %3216 = vmatpush1.bf16.msra.mxu0 %v3055
    %3217 = vmatprep.subr.bf16.mxu0 %v3058
    %3218 = vmatpush1.bf16.msra.mxu0 %v3057
    %3219 = vmatprep.subr.bf16.mxu0 %v3060
    %3220 = vmatpush1.bf16.msra.mxu0 %v3059
    %3221 = vmatprep.subr.bf16.mxu0 %v3062
    %3222 = vmatpush1.bf16.msra.mxu0 %v3061
    %3223 = vmatprep.subr.bf16.mxu0 %v3064
    %3224 = vmatpush1.bf16.msra.mxu0 %v3063
    %3225 = vmatprep.subr.bf16.mxu0 %v3066
    %3226 = vmatpush1.bf16.msra.mxu0 %v3065
    %3227 = vmatprep.subr.bf16.mxu0 %v3068
    %3228 = vmatpush1.bf16.msra.mxu0 %v3067
    %3229 = vmatprep.subr.bf16.mxu0 %v3070
    %3230 = vmatpush1.bf16.msra.mxu0 %v3069
    %3231 = vmatprep.mubr.bf16.mxu0 %v2703
    %3232 = vmatmul.mubr.bf16.gmra.mrb[0].mxu0 %v2702
    %v3233 = vpop.f32.mrb[0].mxu0
    %v3234 = vadd.f32 %v2792, %v3233
    %v3235 = vpop.f32.mrb[0].mxu0
    %v3236 = vadd.f32 %v2796, %v3235
    %v3237 = vpop.f32.mrb[0].mxu0
    %v3238 = vpop.f32.mrb[0].mxu0
    %3239 = vdwg.mxu0
    %3240 = vmatprep.subr.bf16.mxu0 %v3072
    %3241 = vmatpush1.bf16.msra.mxu0 %v3071
    %3242 = vmatprep.subr.bf16.mxu0 %v3074
    %3243 = vmatpush1.bf16.msra.mxu0 %v3073
    %3244 = vmatprep.subr.bf16.mxu0 %v3076
    %3245 = vmatpush1.bf16.msra.mxu0 %v3075
    %3246 = vmatprep.subr.bf16.mxu0 %v3078
    %3247 = vmatpush1.bf16.msra.mxu0 %v3077
    %3248 = vmatprep.subr.bf16.mxu0 %v3080
    %3249 = vmatpush1.bf16.msra.mxu0 %v3079
    %3250 = vmatprep.subr.bf16.mxu0 %v3082
    %3251 = vmatpush1.bf16.msra.mxu0 %v3081
    %3252 = vmatprep.subr.bf16.mxu0 %v3084
    %3253 = vmatpush1.bf16.msra.mxu0 %v3083
    %3254 = vmatprep.subr.bf16.mxu0 %v3086
    %3255 = vmatpush1.bf16.msra.mxu0 %v3085
    %3256 = vmatprep.subr.bf16.mxu0 %v3088
    %3257 = vmatpush1.bf16.msra.mxu0 %v3087
    %3258 = vmatprep.subr.bf16.mxu0 %v3090
    %3259 = vmatpush1.bf16.msra.mxu0 %v3089
    %3260 = vmatprep.subr.bf16.mxu0 %v3092
    %3261 = vmatpush1.bf16.msra.mxu0 %v3091
    %3262 = vmatprep.subr.bf16.mxu0 %v3094
    %3263 = vmatpush1.bf16.msra.mxu0 %v3093
    %3264 = vmatprep.subr.bf16.mxu0 %v3096
    %3265 = vmatpush1.bf16.msra.mxu0 %v3095
    %3266 = vmatprep.subr.bf16.mxu0 %v3098
    %3267 = vmatpush1.bf16.msra.mxu0 %v3097
    %3268 = vmatprep.subr.bf16.mxu0 %v3100
    %3269 = vmatpush1.bf16.msra.mxu0 %v3099
    %3270 = vmatprep.subr.bf16.mxu0 %v3102
    %3271 = vmatpush1.bf16.msra.mxu0 %v3101
    %3272 = vmatprep.mubr.bf16.mxu0 %v2705
    %3273 = vmatmul.mubr.bf16.gmra.mrb[0].mxu0 %v2704
    %v3274 = vpop.f32.mrb[0].mxu0
    %v3275 = vadd.f32 %v3234, %v3274
    %v3276 = vpop.f32.mrb[0].mxu0
    %v3277 = vadd.f32 %v3236, %v3276
    %v3278 = vpop.f32.mrb[0].mxu0
    %v3279 = vpop.f32.mrb[0].mxu0
    %3280 = vdwg.mxu0
    %3281 = vmatprep.subr.bf16.mxu0 %v3104
    %3282 = vmatpush1.bf16.msra.mxu0 %v3103
    %3283 = vmatprep.subr.bf16.mxu0 %v3106
    %3284 = vmatpush1.bf16.msra.mxu0 %v3105
    %3285 = vmatprep.subr.bf16.mxu0 %v3108
    %3286 = vmatpush1.bf16.msra.mxu0 %v3107
    %3287 = vmatprep.subr.bf16.mxu0 %v3110
    %3288 = vmatpush1.bf16.msra.mxu0 %v3109
    %3289 = vmatprep.subr.bf16.mxu0 %v3112
    %3290 = vmatpush1.bf16.msra.mxu0 %v3111
    %3291 = vmatprep.subr.bf16.mxu0 %v3114
    %3292 = vmatpush1.bf16.msra.mxu0 %v3113
    %3293 = vmatprep.subr.bf16.mxu0 %v3116
    %3294 = vmatpush1.bf16.msra.mxu0 %v3115
    %3295 = vmatprep.subr.bf16.mxu0 %v3118
    %3296 = vmatpush1.bf16.msra.mxu0 %v3117
    %3297 = vmatprep.subr.bf16.mxu0 0
    %3298 = vmatpush1.bf16.msra.mxu0 0
    %3299 = vmatprep.subr.bf16.mxu0 0
    %3300 = vmatpush1.bf16.msra.mxu0 0
    %3301 = vmatprep.subr.bf16.mxu0 0
    %3302 = vmatpush1.bf16.msra.mxu0 0
    %3303 = vmatprep.subr.bf16.mxu0 0
    %3304 = vmatpush1.bf16.msra.mxu0 0
    %3305 = vmatprep.subr.bf16.mxu0 0
    %3306 = vmatpush1.bf16.msra.mxu0 0
    %3307 = vmatprep.subr.bf16.mxu0 0
    %3308 = vmatpush1.bf16.msra.mxu0 0
    %3309 = vmatprep.subr.bf16.mxu0 0
    %3310 = vmatpush1.bf16.msra.mxu0 0
    %3311 = vmatprep.subr.bf16.mxu0 0
    %3312 = vmatpush1.bf16.msra.mxu0 0
    %3313 = vmatprep.mubr.bf16.mxu0 0
    %3314 = vmatmul.mubr.bf16.gmra.mrb[0].mxu0 %v2706
    %v3315 = vpop.f32.mrb[0].mxu0
    %v3316 = vadd.f32 %v3275, %v3315
    %v3317 = vpop.f32.mrb[0].mxu0
    %v3318 = vadd.f32 %v3277, %v3317
    %v3319 = vpop.f32.mrb[0].mxu0
    %v3320 = vpop.f32.mrb[0].mxu0
    %3321 = vdwg.mxu0
    %v3322 = vxor.u32 %v3316, 2147483648
    %v3323 = vxor.u32 %v3318, 2147483648
    %v3324 = vmul.f32 %v3322, 1.442695
    %v3325 = vpow.pop %v3324
    %v3326 = vmul.f32 %v3323, 1.442695
    %v3327 = vpow.pop %v3326
    %v3328 = vadd.f32 %v3325, 1.0
    %v3329 = vadd.f32 %v3327, 1.0
    %v3330 = vrcp.pop %v3328
    %v3331 = vmul.f32 1.0, %v3330
    %v3332 = vrcp.pop %v3329
    %v3333 = vmul.f32 1.0, %v3332
    %v3334 = vmul.f32 %v3316, %v3331
    %v3335 = vmul.f32 %v3318, %v3333
    %v3336 = vpack.c.bf16 %v3334, %v3334
    %v3337 = vpack.c.bf16 %v3335, %v3335
    %v3338 = vld [vmem:[#allocation9] sm:$0xf]
    %v3339 = vld [vmem:[#allocation9 + $0x4] sm:$0xf]
    %v3340 = vld [vmem:[#allocation9 + $0x8] sm:$0xf]
    %v3341 = vld [vmem:[#allocation9 + $0xc] sm:$0xf]
    %v3342 = vld [vmem:[#allocation9 + $0x10] sm:$0xf]
    %v3343 = vld [vmem:[#allocation9 + $0x14] sm:$0xf]
    %v3344 = vld [vmem:[#allocation9 + $0x18] sm:$0xf]
    %v3345 = vld [vmem:[#allocation9 + $0x1c] sm:$0xf]
    %v3346 = vld [vmem:[#allocation9 + $0x20] sm:$0xf]
    %v3347 = vld [vmem:[#allocation9 + $0x24] sm:$0xf]
    %v3348 = vld [vmem:[#allocation9 + $0x28] sm:$0xf]
    %v3349 = vld [vmem:[#allocation9 + $0x2c] sm:$0xf]
    %v3350 = vld [vmem:[#allocation9 + $0x30] sm:$0xf]
    %v3351 = vld [vmem:[#allocation9 + $0x34] sm:$0xf]
    %v3352 = vld [vmem:[#allocation9 + $0x38] sm:$0xf]
    %v3353 = vld [vmem:[#allocation9 + $0x3c] sm:$0xf]
    %v3354 = vld [vmem:[#allocation9 + $0x40] sm:$0xf]
    %v3355 = vld [vmem:[#allocation9 + $0x44] sm:$0xf]
    %v3356 = vld [vmem:[#allocation9 + $0x48] sm:$0xf]
    %v3357 = vld [vmem:[#allocation9 + $0x4c] sm:$0xf]
    %v3358 = vld [vmem:[#allocation9 + $0x50] sm:$0xf]
    %v3359 = vld [vmem:[#allocation9 + $0x54] sm:$0xf]
    %v3360 = vld [vmem:[#allocation9 + $0x58] sm:$0xf]
    %v3361 = vld [vmem:[#allocation9 + $0x5c] sm:$0xf]
    %v3362 = vld [vmem:[#allocation9 + $0x60] sm:$0xf]
    %v3363 = vld [vmem:[#allocation9 + $0x64] sm:$0xf]
    %v3364 = vld [vmem:[#allocation9 + $0x68] sm:$0xf]
    %v3365 = vld [vmem:[#allocation9 + $0x6c] sm:$0xf]
    %v3366 = vld [vmem:[#allocation9 + $0x70] sm:$0xf]
    %v3367 = vld [vmem:[#allocation9 + $0x74] sm:$0xf]
    %v3368 = vld [vmem:[#allocation9 + $0x78] sm:$0xf]
    %v3369 = vld [vmem:[#allocation9 + $0x7c] sm:$0xf]
    %v3370 = vld [vmem:[%s11] sm:$0x1]
    %v3372 = vlaneseq
    %v3373 = vshrl.u32 %v3372, 7
    %v3374 = vsub.s32 0, %v3373
    %v3375 = vrot.slane %v3370, %v3374
    %v3409 = vunpack.c.l.b16 %v3338
    %v3410 = vunpack.c.l.b16 %v3339
    %v3411 = vunpack.c.l.b16 %v3340
    %v3412 = vunpack.c.l.b16 %v3341
    %v3413 = vunpack.c.l.b16 %v3342
    %v3414 = vunpack.c.l.b16 %v3343
    %v3415 = vunpack.c.l.b16 %v3344
    %v3416 = vunpack.c.l.b16 %v3345
    %v3417 = vunpack.c.l.b16 %v3346
    %v3418 = vunpack.c.l.b16 %v3347
    %v3419 = vunpack.c.l.b16 %v3348
    %v3420 = vunpack.c.l.b16 %v3349
    %v3421 = vunpack.c.l.b16 %v3350
    %v3422 = vunpack.c.l.b16 %v3351
    %v3423 = vunpack.c.l.b16 %v3352
    %v3424 = vunpack.c.l.b16 %v3353
    %v3425 = vunpack.c.l.b16 %v3354
    %v3426 = vunpack.c.l.b16 %v3355
    %v3427 = vunpack.c.l.b16 %v3356
    %v3428 = vunpack.c.l.b16 %v3357
    %v3429 = vunpack.c.l.b16 %v3358
    %v3430 = vunpack.c.l.b16 %v3359
    %v3431 = vunpack.c.l.b16 %v3360
    %v3432 = vunpack.c.l.b16 %v3361
    %v3433 = vunpack.c.l.b16 %v3362
    %v3434 = vunpack.c.l.b16 %v3363
    %v3435 = vunpack.c.l.b16 %v3364
    %v3436 = vunpack.c.l.b16 %v3365
    %v3437 = vunpack.c.l.b16 %v3366
    %v3438 = vunpack.c.l.b16 %v3367
    %v3439 = vunpack.c.l.b16 %v3368
    %v3440 = vunpack.c.l.b16 %v3369
    %v3441 = vpack.c.b16 %v3410, %v3409
    %v3442 = vpack.c.b16 %v3412, %v3411
    %v3443 = vpack.c.b16 %v3414, %v3413
    %v3444 = vpack.c.b16 %v3416, %v3415
    %v3445 = vpack.c.b16 %v3418, %v3417
    %v3446 = vpack.c.b16 %v3420, %v3419
    %v3447 = vpack.c.b16 %v3422, %v3421
    %v3448 = vpack.c.b16 %v3424, %v3423
    %v3449 = vpack.c.b16 %v3426, %v3425
    %v3450 = vpack.c.b16 %v3428, %v3427
    %v3451 = vpack.c.b16 %v3430, %v3429
    %v3452 = vpack.c.b16 %v3432, %v3431
    %v3453 = vpack.c.b16 %v3434, %v3433
    %v3454 = vpack.c.b16 %v3436, %v3435
    %v3455 = vpack.c.b16 %v3438, %v3437
    %v3456 = vpack.c.b16 %v3440, %v3439
    %3473 = vmatprep.subr.bf16.mxu0 0
    %3474 = vmatpush1.bf16.msra.mxu0 %v3441
    %3475 = vmatprep.subr.bf16.mxu0 0
    %3476 = vmatpush1.bf16.msra.mxu0 %v3442
    %3477 = vmatprep.subr.bf16.mxu0 0
    %3478 = vmatpush1.bf16.msra.mxu0 %v3443
    %3479 = vmatprep.subr.bf16.mxu0 0
    %3480 = vmatpush1.bf16.msra.mxu0 %v3444
    %3481 = vmatprep.subr.bf16.mxu0 0
    %3482 = vmatpush1.bf16.msra.mxu0 %v3445
    %3483 = vmatprep.subr.bf16.mxu0 0
    %3484 = vmatpush1.bf16.msra.mxu0 %v3446
    %3485 = vmatprep.subr.bf16.mxu0 0
    %3486 = vmatpush1.bf16.msra.mxu0 %v3447
    %3487 = vmatprep.subr.bf16.mxu0 0
    %3488 = vmatpush1.bf16.msra.mxu0 %v3448
    %3489 = vmatprep.subr.bf16.mxu0 0
    %3490 = vmatpush1.bf16.msra.mxu0 %v3449
    %3491 = vmatprep.subr.bf16.mxu0 0
    %3492 = vmatpush1.bf16.msra.mxu0 %v3450
    %3493 = vmatprep.subr.bf16.mxu0 0
    %3494 = vmatpush1.bf16.msra.mxu0 %v3451
    %3495 = vmatprep.subr.bf16.mxu0 0
    %3496 = vmatpush1.bf16.msra.mxu0 %v3452
    %3497 = vmatprep.subr.bf16.mxu0 0
    %3498 = vmatpush1.bf16.msra.mxu0 %v3453
    %3499 = vmatprep.subr.bf16.mxu0 0
    %3500 = vmatpush1.bf16.msra.mxu0 %v3454
    %3501 = vmatprep.subr.bf16.mxu0 0
    %3502 = vmatpush1.bf16.msra.mxu0 %v3455
    %3503 = vmatprep.subr.bf16.mxu0 0
    %3504 = vmatpush1.bf16.msra.mxu0 %v3456
    %3505 = vmatprep.mubr.bf16.mxu0 %v3337
    %3506 = vmatmul.mubr.bf16.gmra.mrb[0].mxu0 %v3336
    %v3507 = vpop.f32.mrb[0].mxu0
    %v3508 = vadd.f32 %v3375, %v3507
    %v3509 = vpop.f32.mrb[0].mxu0
    %v3510 = vpop.f32.mrb[0].mxu0
    %v3511 = vpop.f32.mrb[0].mxu0
    %3512 = vdwg.mxu0
    %v3513 = vxor.u32 %v3508, 2147483648
    %v3514 = vmul.f32 %v3513, 1.442695
    %v3515 = vpow.pop %v3514
    %v3516 = vadd.f32 %v3515, 1.0
    %v3517 = vrcp.pop %v3516
    %v3518 = vmul.f32 1.0, %v3517
    %v3519 = vmul.f32 %v3508, %v3518
    %v3520 = vpack.c.bf16 %v3519, %v3519
    %v3521 = vld [vmem:[#allocation10] sm:$0xf]
    %v3522 = vld [vmem:[#allocation10 + $0x4] sm:$0xf]
    %v3523 = vld [vmem:[#allocation10 + $0x8] sm:$0xf]
    %v3524 = vld [vmem:[#allocation10 + $0xc] sm:$0xf]
    %v3525 = vld [vmem:[#allocation10 + $0x10] sm:$0xf]
    %v3526 = vld [vmem:[#allocation10 + $0x14] sm:$0xf]
    %v3527 = vld [vmem:[#allocation10 + $0x18] sm:$0xf]
    %v3528 = vld [vmem:[#allocation10 + $0x1c] sm:$0xf]
    %v3529 = vld [vmem:[#allocation10 + $0x20] sm:$0xf]
    %v3530 = vld [vmem:[#allocation10 + $0x24] sm:$0xf]
    %v3531 = vld [vmem:[#allocation10 + $0x28] sm:$0xf]
    %v3532 = vld [vmem:[#allocation10 + $0x2c] sm:$0xf]
    %v3533 = vld [vmem:[#allocation10 + $0x30] sm:$0xf]
    %v3534 = vld [vmem:[#allocation10 + $0x34] sm:$0xf]
    %v3535 = vld [vmem:[#allocation10 + $0x38] sm:$0xf]
    %v3536 = vld [vmem:[#allocation10 + $0x3c] sm:$0xf]
    %v3537 = vld [vmem:[%s12] sm:$0x1]
    %v3539 = vlaneseq
    %v3540 = vshrl.u32 %v3539, 7
    %v3541 = vsub.s32 0, %v3540
    %v3542 = vrot.slane %v3537, %v3541
    %v3560 = vunpack.c.l.b16 %v3521
    %v3561 = vunpack.c.l.b16 %v3522
    %v3562 = vunpack.c.l.b16 %v3523
    %v3563 = vunpack.c.l.b16 %v3524
    %v3564 = vunpack.c.l.b16 %v3525
    %v3565 = vunpack.c.l.b16 %v3526
    %v3566 = vunpack.c.l.b16 %v3527
    %v3567 = vunpack.c.l.b16 %v3528
    %v3568 = vunpack.c.l.b16 %v3529
    %v3569 = vunpack.c.l.b16 %v3530
    %v3570 = vunpack.c.l.b16 %v3531
    %v3571 = vunpack.c.l.b16 %v3532
    %v3572 = vunpack.c.l.b16 %v3533
    %v3573 = vunpack.c.l.b16 %v3534
    %v3574 = vunpack.c.l.b16 %v3535
    %v3575 = vunpack.c.l.b16 %v3536
    %v3576 = vpack.c.b16 %v3561, %v3560
    %v3577 = vpack.c.b16 %v3563, %v3562
    %v3578 = vpack.c.b16 %v3565, %v3564
    %v3579 = vpack.c.b16 %v3567, %v3566
    %v3580 = vpack.c.b16 %v3569, %v3568
    %v3581 = vpack.c.b16 %v3571, %v3570
    %v3582 = vpack.c.b16 %v3573, %v3572
    %v3583 = vpack.c.b16 %v3575, %v3574
    %3592 = vmatprep.subr.bf16.mxu0 0
    %3593 = vmatpush1.bf16.msra.mxu0 %v3576
    %3594 = vmatprep.subr.bf16.mxu0 0
    %3595 = vmatpush1.bf16.msra.mxu0 %v3577
    %3596 = vmatprep.subr.bf16.mxu0 0
    %3597 = vmatpush1.bf16.msra.mxu0 %v3578
    %3598 = vmatprep.subr.bf16.mxu0 0
    %3599 = vmatpush1.bf16.msra.mxu0 %v3579
    %3600 = vmatprep.subr.bf16.mxu0 0
    %3601 = vmatpush1.bf16.msra.mxu0 %v3580
    %3602 = vmatprep.subr.bf16.mxu0 0
    %3603 = vmatpush1.bf16.msra.mxu0 %v3581
    %3604 = vmatprep.subr.bf16.mxu0 0
    %3605 = vmatpush1.bf16.msra.mxu0 %v3582
    %3606 = vmatprep.subr.bf16.mxu0 0
    %3607 = vmatpush1.bf16.msra.mxu0 %v3583
    %3608 = vmatprep.subr.bf16.mxu0 0
    %3609 = vmatpush1.bf16.msra.mxu0 0
    %3610 = vmatprep.subr.bf16.mxu0 0
    %3611 = vmatpush1.bf16.msra.mxu0 0
    %3612 = vmatprep.subr.bf16.mxu0 0
    %3613 = vmatpush1.bf16.msra.mxu0 0
    %3614 = vmatprep.subr.bf16.mxu0 0
    %3615 = vmatpush1.bf16.msra.mxu0 0
    %3616 = vmatprep.subr.bf16.mxu0 0
    %3617 = vmatpush1.bf16.msra.mxu0 0
    %3618 = vmatprep.subr.bf16.mxu0 0
    %3619 = vmatpush1.bf16.msra.mxu0 0
    %3620 = vmatprep.subr.bf16.mxu0 0
    %3621 = vmatpush1.bf16.msra.mxu0 0
    %3622 = vmatprep.subr.bf16.mxu0 0
    %3623 = vmatpush1.bf16.msra.mxu0 0
    %3624 = vmatprep.mubr.bf16.mxu0 0
    %3625 = vmatmul.mubr.bf16.gmra.mrb[0].mxu0 %v3520
    %v3626 = vpop.f32.mrb[0].mxu0
    %v3627 = vadd.f32 %v3542, %v3626
    %v3628 = vpop.f32.mrb[0].mxu0
    %v3629 = vpop.f32.mrb[0].mxu0
    %v3630 = vpop.f32.mrb[0].mxu0
    %3631 = vdwg.mxu0
    %3632 = vst [vmem:[%s13] sm:$0xff] %v3627
    // Predicated region
    $region78: #{multiclass_dnn_forward.1} parent=1 // pred_check
      _
    $region79: #{multiclass_dnn_forward.1} parent=1 // pred_check_branch
      %3634 = sbr.rel (0) target = $region81
    $region80: #{multiclass_dnn_forward.1} parent=1 // pred_region
      _
    $region81: #{multiclass_dnn_forward.1} parent=1 // pred_fallthru
      _
    // Predicated region
    $region82: #{multiclass_dnn_forward.1} parent=1 // pred_check
      _
    $region83: #{multiclass_dnn_forward.1} parent=1 // pred_check_branch
      %3636 = sbr.rel (0) target = $region85
    $region84: #{multiclass_dnn_forward.1} parent=1 // pred_region
      _
    $region85: #{multiclass_dnn_forward.1} parent=1 // pred_fallthru
      _
    %3637 = vsyncpa [#allocation3], 1
    %3638 = vsyncpa [#allocation5], 1
    %3639 = vsyncpa [#allocation8], 1
    %3640 = vsyncpa [#allocation11], 1

</llo_original>
